<compile_context>
chip_gen: v7x
topology: tpu7x:2x2x1
jax: 0.10.0
libtpu: 0.0.40
codegen_flags: <defaults>
</compile_context>

<pallas_src>
import math

import jax
import jax.numpy as jnp
from jax import lax
from jax.experimental import pallas as pl
from jax.experimental.pallas import tpu as pltpu


# Contract x[-1] with W[-1] where W is (out, in)  ->  x @ W.T without a transpose.
_DN_RHS_LAST = (((1,), (1,)), ((), ()))


# ----------------------------------------------------------------------------
# In-kernel math helpers
# ----------------------------------------------------------------------------
def _erf_f32(x):
    # XLA's f32 erf rational polynomial (matches jnp/torch erf in f32).
    k_alpha = (-2.72614225801306e-10, 2.77068142495902e-08, -2.10102402082508e-06,
               -5.69250639462346e-05, -7.34990630326855e-04, -2.95459980854025e-03,
               -1.60960333262415e-02)
    k_beta = (-1.45660718464996e-05, -2.13374055278905e-04, -1.68282697438203e-03,
              -7.37332916720468e-03, -1.42647390514189e-02)
    x = jnp.clip(x, -4.0, 4.0)
    x2 = x * x
    alpha = jnp.float32(k_alpha[0])
    for c in k_alpha[1:]:
        alpha = alpha * x2 + jnp.float32(c)
    beta = jnp.float32(k_beta[0])
    for c in k_beta[1:]:
        beta = beta * x2 + jnp.float32(c)
    # divide -> EUP approximate reciprocal (frees VALU slots on the (S, chunk) tensor)
    return x * alpha * pl.reciprocal(beta, approx=True)


def _gelu_exact(x):
    # exact (erf-based) gelu, as used by the fused torch encoder layer with use_gelu=True
    return 0.5 * x * (1.0 + _erf_f32(x * jnp.float32(1.0 / math.sqrt(2.0))))


def _layer_norm(x, w, b, eps):
    mean = jnp.mean(x, axis=-1, keepdims=True)
    xc = x - mean
    var = jnp.mean(xc * xc, axis=-1, keepdims=True)
    return xc * lax.rsqrt(var + jnp.float32(eps)) * w + b


# ----------------------------------------------------------------------------
# Pallas kernel: one full encoder layer for one batch element per grid step.
# ----------------------------------------------------------------------------
def _make_kernel(num_heads, head_dim, eps1, eps2, ffn_chunk):
    embed_dim = num_heads * head_dim
    scale = 1.0 / math.sqrt(head_dim)

    def kernel(x_ref,
               in_w_ref, in_b_ref,
               out_w_ref, out_b_ref,
               n1w_ref, n1b_ref, n2w_ref, n2b_ref,
               l1w_ref, l1b_ref, l2w_ref, l2b_ref,
               o_ref,
               ctx_scratch):
        x = x_ref[0].astype(jnp.float32)                      # (S, E)
        x_bf = x.astype(jnp.bfloat16)

        # ---- fused QKV projection (MXU, bf16 in / f32 acc, no weight transpose) ----
        qkv = lax.dot_general(x_bf, in_w_ref[...], dimension_numbers=_DN_RHS_LAST,
                              preferred_element_type=jnp.float32) + in_b_ref[...]   # (S, 3E) f32
        # Fold the 1/sqrt(head_dim) scale into q once; cast q/k/v to bf16 once
        # (per review: no per-head casts inside the unrolled head loop).
        q_bf = (qkv[:, 0:embed_dim] * jnp.float32(scale)).astype(jnp.bfloat16)
        k_bf = qkv[:, embed_dim:2 * embed_dim].astype(jnp.bfloat16)
        v_bf = qkv[:, 2 * embed_dim:3 * embed_dim].astype(jnp.bfloat16)

        # ---- per-head scaled-dot-product attention ----
        # Matmuls in bf16, softmax stats in f32, normalization divide on the EUP.
        # Per-head contexts go straight into a bf16 VMEM scratch slab (no concat
        # of H live tensors, no full-slab cast afterwards).  ctx_scratch is fully
        # overwritten every grid step, so persistence across iterations is safe.
        for h in range(num_heads):
            sl = slice(h * head_dim, (h + 1) * head_dim)
            qh = q_bf[:, sl]
            kh = k_bf[:, sl]
            vh = v_bf[:, sl]
            # q_h @ k_h^T via last-dim contraction (no transpose materialized)
            scores = lax.dot_general(qh, kh, dimension_numbers=_DN_RHS_LAST,
                                     preferred_element_type=jnp.float32)            # (S, S)
            scores = scores - jnp.max(scores, axis=-1, keepdims=True)
            p = jnp.exp(scores)
            denom = jnp.sum(p, axis=-1, keepdims=True)
            p = p * pl.reciprocal(denom, approx=True)
            ctx_scratch[:, sl] = jnp.dot(p.astype(jnp.bfloat16), vh,
                                         preferred_element_type=jnp.float32
                                         ).astype(jnp.bfloat16)

        ctx = ctx_scratch[...]                                 # (S, E) bf16

        attn_out = lax.dot_general(ctx, out_w_ref[...], dimension_numbers=_DN_RHS_LAST,
                                   preferred_element_type=jnp.float32) + out_b_ref[...]

        # ---- residual + layer norm 1 (post-norm), f32 ----
        x1 = _layer_norm(x + attn_out, n1w_ref[...], n1b_ref[...], eps1)
        x1_bf = x1.astype(jnp.bfloat16)

        # ---- feed-forward, tiled over ffn_dim (bounded peak activation VMEM) ----
        ffn_dim = l1w_ref.shape[0]
        ff = jnp.zeros_like(x1)                                # (S, E) f32 accumulator
        for c0 in range(0, ffn_dim, ffn_chunk):
            c1 = min(c0 + ffn_chunk, ffn_dim)
            h1 = lax.dot_general(x1_bf, l1w_ref[c0:c1, :],
                                 dimension_numbers=_DN_RHS_LAST,
                                 preferred_element_type=jnp.float32) + l1b_ref[:, c0:c1]
            h1 = _gelu_exact(h1)                               # (S, chunk) f32
            ff = ff + lax.dot_general(h1.astype(jnp.bfloat16), l2w_ref[:, c0:c1],
                                      dimension_numbers=_DN_RHS_LAST,
                                      preferred_element_type=jnp.float32)
        h2 = ff + l2b_ref[...]

        # ---- residual + layer norm 2 ----
        o_ref[0] = _layer_norm(x1 + h2, n2w_ref[...], n2b_ref[...], eps2).astype(o_ref.dtype)

    return kernel


# ----------------------------------------------------------------------------
# Helpers for per-generation / per-shape tuning
# ----------------------------------------------------------------------------
def _pick_vmem_limit():
    """~80% of physical per-core VMEM; conservative fallback if the query fails."""
    try:
        cap = int(pltpu.get_tpu_info().vmem_capacity_bytes)
        return max(32 * 1024 * 1024, min(int(cap * 0.8), 112 * 1024 * 1024))
    except Exception:
        # 48 MiB fits every generation (v7x has only 64 MiB physical per TC).
        return 48 * 1024 * 1024


def _pick_ffn_chunk(ffn_dim):
    if ffn_dim <= 1024:
        return ffn_dim
    for cand in (1024, 896, 768, 640, 512, 384, 256, 128):
        if ffn_dim % cand == 0:
            return cand
    return 1024  # last chunk may be ragged; still correct


def _const_spec(shape, single_buffer):
    """BlockSpec for a grid-invariant operand; single-buffered when supported."""
    idx = lambda b, _n=len(shape): (0,) * _n
    if single_buffer:
        try:
            return pl.BlockSpec(shape, idx, pipeline_mode=pl.Buffered(1))
        except Exception:
            pass
    return pl.BlockSpec(shape, idx)


# ----------------------------------------------------------------------------
# Wrapper mirroring DistilBertLayerBetterTransformer.forward (eval path)
# ----------------------------------------------------------------------------
def distilbert_layer_bt(hidden_states, attn_mask, output_attentions, params,
                        num_heads, norm1_eps=1e-12, norm2_eps=1e-12, head_mask=None):
    if output_attentions:
        raise ValueError("output_attentions=True can not be supported with BetterTransformer.")
    if attn_mask is not None:
        # TODO(synk): torch._nested_tensor_from_mask (nested/ragged tensors) has no Pallas
        # equivalent; only the attn_mask=None (all-dense) path is implemented.
        raise NotImplementedError("attn_mask is not supported in this Pallas port.")
    del head_mask  # unused by the fused eval path, as in the original module

    B, S, E = hidden_states.shape
    assert E % num_heads == 0
    head_dim = E // num_heads
    ffn_dim = params["linear1_weight"].shape[0]
    ffn_chunk = _pick_ffn_chunk(ffn_dim)

    kernel = _make_kernel(num_heads, head_dim, norm1_eps, norm2_eps, ffn_chunk)

    bf16 = jnp.bfloat16
    f32 = jnp.float32
    args = (
        hidden_states,
        params["in_proj_weight"].astype(bf16), params["in_proj_bias"].reshape(1, -1).astype(f32),
        params["out_proj_weight"].astype(bf16), params["out_proj_bias"].reshape(1, -1).astype(f32),
        params["norm1_weight"].reshape(1, -1).astype(f32), params["norm1_bias"].reshape(1, -1).astype(f32),
        params["norm2_weight"].reshape(1, -1).astype(f32), params["norm2_bias"].reshape(1, -1).astype(f32),
        params["linear1_weight"].astype(bf16), params["linear1_bias"].reshape(1, -1).astype(f32),
        params["linear2_weight"].astype(bf16), params["linear2_bias"].reshape(1, -1).astype(f32),
    )

    def _run(single_buffer):
        in_specs = [
            pl.BlockSpec((1, S, E), lambda b: (b, 0, 0)),                  # hidden_states
            _const_spec((3 * E, E), single_buffer), _const_spec((1, 3 * E), single_buffer),
            _const_spec((E, E), single_buffer), _const_spec((1, E), single_buffer),
            _const_spec((1, E), single_buffer), _const_spec((1, E), single_buffer),
            _const_spec((1, E), single_buffer), _const_spec((1, E), single_buffer),
            _const_spec((ffn_dim, E), single_buffer), _const_spec((1, ffn_dim), single_buffer),
            _const_spec((E, ffn_dim), single_buffer), _const_spec((1, E), single_buffer),
        ]
        return pl.pallas_call(
            kernel,
            out_shape=jax.ShapeDtypeStruct((B, S, E), hidden_states.dtype),
            grid=(B,),
            in_specs=in_specs,
            out_specs=pl.BlockSpec((1, S, E), lambda b: (b, 0, 0)),
            scratch_shapes=[pltpu.VMEM((S, E), jnp.bfloat16)],   # per-batch attention context slab
            compiler_params=pltpu.CompilerParams(
                dimension_semantics=("parallel",),
                vmem_limit_bytes=_pick_vmem_limit(),
            ),
        )(*args)

    try:
        out = jax.block_until_ready(_run(True))
    except Exception:
        # Installed JAX rejected single-buffered (pipeline_mode) weight specs;
        # fall back to default double-buffering.
        out = _run(False)
    return (out,)


# ----------------------------------------------------------------------------
# Pure-JAX f32 reference for a numerical sanity check
# ----------------------------------------------------------------------------
def _reference(x, p, num_heads, eps):
    B, S, E = x.shape
    D = E // num_heads
    qkv = x @ p["in_proj_weight"].T + p["in_proj_bias"]
    q, k, v = jnp.split(qkv, 3, axis=-1)

    def heads(t):
        return t.reshape(B, S, num_heads, D).transpose(0, 2, 1, 3)

    q, k, v = heads(q), heads(k), heads(v)
    s = jnp.einsum("bhqd,bhkd->bhqk", q, k) / math.sqrt(D)
    a = jax.nn.softmax(s, axis=-1)
    ctx = jnp.einsum("bhqk,bhkd->bhqd", a, v).transpose(0, 2, 1, 3).reshape(B, S, E)
    attn_out = ctx @ p["out_proj_weight"].T + p["out_proj_bias"]

    def ln(t, w, b):
        m = t.mean(-1, keepdims=True)
        var = ((t - m) ** 2).mean(-1, keepdims=True)
        return (t - m) / jnp.sqrt(var + eps) * w + b

    x1 = ln(x + attn_out, p["norm1_weight"], p["norm1_bias"])
    h = jax.nn.gelu(x1 @ p["linear1_weight"].T + p["linear1_bias"], approximate=False)
    h2 = h @ p["linear2_weight"].T + p["linear2_bias"]
    return ln(x1 + h2, p["norm2_weight"], p["norm2_bias"])


def _make_params(key, E, FFN):
    ks = jax.random.split(key, 12)

    def w(k, shape, scale=0.05):
        return (scale * jax.random.normal(k, shape)).astype(jnp.float32)

    return {
        "in_proj_weight": w(ks[0], (3 * E, E)),
        "in_proj_bias": w(ks[1], (3 * E,)),
        "out_proj_weight": w(ks[2], (E, E)),
        "out_proj_bias": w(ks[3], (E,)),
        "linear1_weight": w(ks[4], (FFN, E)),
        "linear1_bias": w(ks[5], (FFN,)),
        "linear2_weight": w(ks[6], (E, FFN)),
        "linear2_bias": w(ks[7], (E,)),
        "norm1_weight": (1.0 + 0.1 * jax.random.normal(ks[8], (E,))).astype(jnp.float32),
        "norm1_bias": w(ks[9], (E,)),
        "norm2_weight": (1.0 + 0.1 * jax.random.normal(ks[10], (E,))).astype(jnp.float32),
        "norm2_bias": w(ks[11], (E,)),
    }


if __name__ == "__main__":
    # --- test 1: small DistilBert-like config (hidden=32, heads=4, ffn=64, seq=8, batch=2) ---
    B, S, E, H, FFN = 2, 8, 32, 4, 64
    params = _make_params(jax.random.PRNGKey(0), E, FFN)
    hidden_states = jax.random.normal(jax.random.PRNGKey(1), (B, S, E), dtype=jnp.float32)

    (out,) = distilbert_layer_bt(
        hidden_states, attn_mask=None, output_attentions=False,
        params=params, num_heads=H, norm1_eps=1e-12, norm2_eps=1e-12)
    out = jax.block_until_ready(out)

    ref = _reference(hidden_states, params, H, 1e-12)
    assert out.shape == (B, S, E) and out.dtype == jnp.float32
    # bf16 matmuls + approximate reciprocals => compare against the f32 reference
    # with a tolerance that covers bf16 rounding.
    max_err = float(jnp.max(jnp.abs(out - ref)))
    assert max_err < 2e-2, max_err

    # --- test 2: lane-dense heads (head_dim=64) + multi-chunk FFN (2048 -> 2 x 1024) ---
    B2, S2, E2, H2, FFN2 = 1, 16, 128, 2, 2048
    params2 = _make_params(jax.random.PRNGKey(2), E2, FFN2)
    hs2 = jax.random.normal(jax.random.PRNGKey(3), (B2, S2, E2), dtype=jnp.float32)

    (out2,) = distilbert_layer_bt(
        hs2, attn_mask=None, output_attentions=False,
        params=params2, num_heads=H2, norm1_eps=1e-12, norm2_eps=1e-12)
    out2 = jax.block_until_ready(out2)

    ref2 = _reference(hs2, params2, H2, 1e-12)
    assert out2.shape == (B2, S2, E2) and out2.dtype == jnp.float32
    max_err2 = float(jnp.max(jnp.abs(out2 - ref2)))
    assert max_err2 < 5e-2, max_err2

    print("KERNEL_OK")
</pallas_src>

<mosaic_0001>
module attributes {stable_mosaic.version = 11 : i64} {
  func.func @kernel(%arg0: i32, %arg1: memref<1x8x32xf32, #tpu.memory_space<vmem>>, %arg2: memref<96x32xbf16, #tpu.memory_space<vmem>>, %arg3: memref<1x96xf32, #tpu.memory_space<vmem>>, %arg4: memref<32x32xbf16, #tpu.memory_space<vmem>>, %arg5: memref<1x32xf32, #tpu.memory_space<vmem>>, %arg6: memref<1x32xf32, #tpu.memory_space<vmem>>, %arg7: memref<1x32xf32, #tpu.memory_space<vmem>>, %arg8: memref<1x32xf32, #tpu.memory_space<vmem>>, %arg9: memref<1x32xf32, #tpu.memory_space<vmem>>, %arg10: memref<64x32xbf16, #tpu.memory_space<vmem>>, %arg11: memref<1x64xf32, #tpu.memory_space<vmem>>, %arg12: memref<32x64xbf16, #tpu.memory_space<vmem>>, %arg13: memref<1x32xf32, #tpu.memory_space<vmem>>, %arg14: memref<1x8x32xf32, #tpu.memory_space<vmem>>, %arg15: memref<8x32xbf16, #tpu.memory_space<vmem>>) attributes {dimension_semantics = [#tpu.dimension_semantics<parallel>], iteration_bounds = array<i64: 2>, scalar_prefetch = 0 : i64, scratch_operands = 1 : i64, tpu.core_type = #tpu.core_type<tc>, window_params = [{transform_indices = @transform_0, window_bounds = array<i64: 1, 8, 32>}, {pipeline_mode = #tpu.pipeline_mode<synchronous>, transform_indices = @transform_1, window_bounds = array<i64: 96, 32>}, {pipeline_mode = #tpu.pipeline_mode<synchronous>, transform_indices = @transform_2, window_bounds = array<i64: 1, 96>}, {pipeline_mode = #tpu.pipeline_mode<synchronous>, transform_indices = @transform_3, window_bounds = array<i64: 32, 32>}, {pipeline_mode = #tpu.pipeline_mode<synchronous>, transform_indices = @transform_4, window_bounds = array<i64: 1, 32>}, {pipeline_mode = #tpu.pipeline_mode<synchronous>, transform_indices = @transform_5, window_bounds = array<i64: 1, 32>}, {pipeline_mode = #tpu.pipeline_mode<synchronous>, transform_indices = @transform_6, window_bounds = array<i64: 1, 32>}, {pipeline_mode = #tpu.pipeline_mode<synchronous>, transform_indices = @transform_7, window_bounds = array<i64: 1, 32>}, {pipeline_mode = #tpu.pipeline_mode<synchronous>, transform_indices = @transform_8, window_bounds = array<i64: 1, 32>}, {pipeline_mode = #tpu.pipeline_mode<synchronous>, transform_indices = @transform_9, window_bounds = array<i64: 64, 32>}, {pipeline_mode = #tpu.pipeline_mode<synchronous>, transform_indices = @transform_10, window_bounds = array<i64: 1, 64>}, {pipeline_mode = #tpu.pipeline_mode<synchronous>, transform_indices = @transform_11, window_bounds = array<i64: 32, 64>}, {pipeline_mode = #tpu.pipeline_mode<synchronous>, transform_indices = @transform_12, window_bounds = array<i64: 1, 32>}, {transform_indices = @transform_13, window_bounds = array<i64: 1, 8, 32>}]} {
    %c0 = arith.constant 0 : index
    %c0_0 = arith.constant 0 : index
    %c0_1 = arith.constant 0 : index
    %0 = vector.load %arg1[%c0, %c0_0, %c0_1] : memref<1x8x32xf32, #tpu.memory_space<vmem>>, vector<1x8x32xf32>
    %1 = vector.shape_cast %0 : vector<1x8x32xf32> to vector<8x32xf32>
    %2 = arith.truncf %1 : vector<8x32xf32> to vector<8x32xbf16>
    %c0_2 = arith.constant 0 : index
    %c0_3 = arith.constant 0 : index
    %3 = vector.load %arg2[%c0_2, %c0_3] : memref<96x32xbf16, #tpu.memory_space<vmem>>, vector<96x32xbf16>
    %cst = arith.constant dense<0.000000e+00> : vector<8x96xf32>
    %4 = tpu.matmul %2, %3, %cst {dimension_numbers = #tpu.dot_dimension_numbers<[1], [1], [0], [0], [0, 0, 1, 0], [], []>} : vector<8x32xbf16>, vector<96x32xbf16>, vector<8x96xf32> -> vector<8x96xf32>
    %c0_4 = arith.constant 0 : index
    %c0_5 = arith.constant 0 : index
    %5 = vector.load %arg3[%c0_4, %c0_5] : memref<1x96xf32, #tpu.memory_space<vmem>>, vector<1x96xf32>
    %6 = vector.broadcast %5 : vector<1x96xf32> to vector<8x96xf32>
    %7 = arith.addf %4, %6 : vector<8x96xf32>
    %8 = vector.extract_strided_slice %7 {offsets = [0, 0], sizes = [8, 32], strides = [1, 1]} : vector<8x96xf32> to vector<8x32xf32>
    %cst_6 = arith.constant 0.353553385 : f32
    %9 = vector.broadcast %cst_6 : f32 to vector<8x32xf32>
    %10 = arith.mulf %8, %9 : vector<8x32xf32>
    %11 = arith.truncf %10 : vector<8x32xf32> to vector<8x32xbf16>
    %12 = vector.extract_strided_slice %7 {offsets = [0, 32], sizes = [8, 32], strides = [1, 1]} : vector<8x96xf32> to vector<8x32xf32>
    %13 = arith.truncf %12 : vector<8x32xf32> to vector<8x32xbf16>
    %14 = vector.extract_strided_slice %7 {offsets = [0, 64], sizes = [8, 32], strides = [1, 1]} : vector<8x96xf32> to vector<8x32xf32>
    %15 = arith.truncf %14 : vector<8x32xf32> to vector<8x32xbf16>
    %16 = vector.extract_strided_slice %11 {offsets = [0, 0], sizes = [8, 8], strides = [1, 1]} : vector<8x32xbf16> to vector<8x8xbf16>
    %17 = vector.extract_strided_slice %13 {offsets = [0, 0], sizes = [8, 8], strides = [1, 1]} : vector<8x32xbf16> to vector<8x8xbf16>
    %18 = vector.extract_strided_slice %15 {offsets = [0, 0], sizes = [8, 8], strides = [1, 1]} : vector<8x32xbf16> to vector<8x8xbf16>
    %cst_7 = arith.constant dense<0.000000e+00> : vector<8x8xf32>
    %19 = tpu.matmul %16, %17, %cst_7 {dimension_numbers = #tpu.dot_dimension_numbers<[1], [1], [0], [0], [0, 0, 1, 0], [], []>} : vector<8x8xbf16>, vector<8x8xbf16>, vector<8x8xf32> -> vector<8x8xf32>
    %cst_8 = arith.constant dense<0xFF800000> : vector<8xf32>
    %20 = vector.multi_reduction <maximumf>, %19, %cst_8 [1] : vector<8x8xf32> to vector<8xf32>
    %21 = vector.shape_cast %20 : vector<8xf32> to vector<8x1xf32>
    %22 = vector.broadcast %21 : vector<8x1xf32> to vector<8x8xf32>
    %23 = arith.subf %19, %22 : vector<8x8xf32>
    %24 = math.exp %23 : vector<8x8xf32>
    %cst_9 = arith.constant dense<0.000000e+00> : vector<8xf32>
    %25 = vector.multi_reduction <add>, %24, %cst_9 [1] : vector<8x8xf32> to vector<8xf32>
    %26 = vector.shape_cast %25 : vector<8xf32> to vector<8x1xf32>
    %27 = tpu.reciprocal %26 {approx = true} : vector<8x1xf32> -> vector<8x1xf32>
    %28 = vector.broadcast %27 : vector<8x1xf32> to vector<8x8xf32>
    %29 = arith.mulf %24, %28 : vector<8x8xf32>
    %30 = arith.truncf %29 : vector<8x8xf32> to vector<8x8xbf16>
    %cst_10 = arith.constant dense<0.000000e+00> : vector<8x8xf32>
    %31 = tpu.matmul %30, %18, %cst_10 {dimension_numbers = #tpu.dot_dimension_numbers<[1], [0], [0], [1], [0, 0, 1, 1], [], []>} : vector<8x8xbf16>, vector<8x8xbf16>, vector<8x8xf32> -> vector<8x8xf32>
    %32 = arith.truncf %31 : vector<8x8xf32> to vector<8x8xbf16>
    %c0_11 = arith.constant 0 : index
    %c0_12 = arith.constant 0 : index
    %33 = vector.load %arg15[%c0_11, %c0_12] : memref<8x32xbf16, #tpu.memory_space<vmem>>, vector<8x8xbf16>
    tpu.vector_store %arg15[%c0_11, %c0_12], %32 {strides = array<i32>} : memref<8x32xbf16, #tpu.memory_space<vmem>>, vector<8x8xbf16>,
    %34 = vector.extract_strided_slice %11 {offsets = [0, 8], sizes = [8, 8], strides = [1, 1]} : vector<8x32xbf16> to vector<8x8xbf16>
    %35 = vector.extract_strided_slice %13 {offsets = [0, 8], sizes = [8, 8], strides = [1, 1]} : vector<8x32xbf16> to vector<8x8xbf16>
    %36 = vector.extract_strided_slice %15 {offsets = [0, 8], sizes = [8, 8], strides = [1, 1]} : vector<8x32xbf16> to vector<8x8xbf16>
    %cst_13 = arith.constant dense<0.000000e+00> : vector<8x8xf32>
    %37 = tpu.matmul %34, %35, %cst_13 {dimension_numbers = #tpu.dot_dimension_numbers<[1], [1], [0], [0], [0, 0, 1, 0], [], []>} : vector<8x8xbf16>, vector<8x8xbf16>, vector<8x8xf32> -> vector<8x8xf32>
    %cst_14 = arith.constant dense<0xFF800000> : vector<8xf32>
    %38 = vector.multi_reduction <maximumf>, %37, %cst_14 [1] : vector<8x8xf32> to vector<8xf32>
    %39 = vector.shape_cast %38 : vector<8xf32> to vector<8x1xf32>
    %40 = vector.broadcast %39 : vector<8x1xf32> to vector<8x8xf32>
    %41 = arith.subf %37, %40 : vector<8x8xf32>
    %42 = math.exp %41 : vector<8x8xf32>
    %cst_15 = arith.constant dense<0.000000e+00> : vector<8xf32>
    %43 = vector.multi_reduction <add>, %42, %cst_15 [1] : vector<8x8xf32> to vector<8xf32>
    %44 = vector.shape_cast %43 : vector<8xf32> to vector<8x1xf32>
    %45 = tpu.reciprocal %44 {approx = true} : vector<8x1xf32> -> vector<8x1xf32>
    %46 = vector.broadcast %45 : vector<8x1xf32> to vector<8x8xf32>
    %47 = arith.mulf %42, %46 : vector<8x8xf32>
    %48 = arith.truncf %47 : vector<8x8xf32> to vector<8x8xbf16>
    %cst_16 = arith.constant dense<0.000000e+00> : vector<8x8xf32>
    %49 = tpu.matmul %48, %36, %cst_16 {dimension_numbers = #tpu.dot_dimension_numbers<[1], [0], [0], [1], [0, 0, 1, 1], [], []>} : vector<8x8xbf16>, vector<8x8xbf16>, vector<8x8xf32> -> vector<8x8xf32>
    %50 = arith.truncf %49 : vector<8x8xf32> to vector<8x8xbf16>
    %c0_17 = arith.constant 0 : index
    %c8 = arith.constant 8 : index
    %51 = vector.load %arg15[%c0_17, %c8] : memref<8x32xbf16, #tpu.memory_space<vmem>>, vector<8x8xbf16>
    tpu.vector_store %arg15[%c0_17, %c8], %50 {strides = array<i32>} : memref<8x32xbf16, #tpu.memory_space<vmem>>, vector<8x8xbf16>,
    %52 = vector.extract_strided_slice %11 {offsets = [0, 16], sizes = [8, 8], strides = [1, 1]} : vector<8x32xbf16> to vector<8x8xbf16>
    %53 = vector.extract_strided_slice %13 {offsets = [0, 16], sizes = [8, 8], strides = [1, 1]} : vector<8x32xbf16> to vector<8x8xbf16>
    %54 = vector.extract_strided_slice %15 {offsets = [0, 16], sizes = [8, 8], strides = [1, 1]} : vector<8x32xbf16> to vector<8x8xbf16>
    %cst_18 = arith.constant dense<0.000000e+00> : vector<8x8xf32>
    %55 = tpu.matmul %52, %53, %cst_18 {dimension_numbers = #tpu.dot_dimension_numbers<[1], [1], [0], [0], [0, 0, 1, 0], [], []>} : vector<8x8xbf16>, vector<8x8xbf16>, vector<8x8xf32> -> vector<8x8xf32>
    %cst_19 = arith.constant dense<0xFF800000> : vector<8xf32>
    %56 = vector.multi_reduction <maximumf>, %55, %cst_19 [1] : vector<8x8xf32> to vector<8xf32>
    %57 = vector.shape_cast %56 : vector<8xf32> to vector<8x1xf32>
    %58 = vector.broadcast %57 : vector<8x1xf32> to vector<8x8xf32>
    %59 = arith.subf %55, %58 : vector<8x8xf32>
    %60 = math.exp %59 : vector<8x8xf32>
    %cst_20 = arith.constant dense<0.000000e+00> : vector<8xf32>
    %61 = vector.multi_reduction <add>, %60, %cst_20 [1] : vector<8x8xf32> to vector<8xf32>
    %62 = vector.shape_cast %61 : vector<8xf32> to vector<8x1xf32>
    %63 = tpu.reciprocal %62 {approx = true} : vector<8x1xf32> -> vector<8x1xf32>
    %64 = vector.broadcast %63 : vector<8x1xf32> to vector<8x8xf32>
    %65 = arith.mulf %60, %64 : vector<8x8xf32>
    %66 = arith.truncf %65 : vector<8x8xf32> to vector<8x8xbf16>
    %cst_21 = arith.constant dense<0.000000e+00> : vector<8x8xf32>
    %67 = tpu.matmul %66, %54, %cst_21 {dimension_numbers = #tpu.dot_dimension_numbers<[1], [0], [0], [1], [0, 0, 1, 1], [], []>} : vector<8x8xbf16>, vector<8x8xbf16>, vector<8x8xf32> -> vector<8x8xf32>
    %68 = arith.truncf %67 : vector<8x8xf32> to vector<8x8xbf16>
    %c0_22 = arith.constant 0 : index
    %c16 = arith.constant 16 : index
    %69 = vector.load %arg15[%c0_22, %c16] : memref<8x32xbf16, #tpu.memory_space<vmem>>, vector<8x8xbf16>
    tpu.vector_store %arg15[%c0_22, %c16], %68 {strides = array<i32>} : memref<8x32xbf16, #tpu.memory_space<vmem>>, vector<8x8xbf16>,
    %70 = vector.extract_strided_slice %11 {offsets = [0, 24], sizes = [8, 8], strides = [1, 1]} : vector<8x32xbf16> to vector<8x8xbf16>
    %71 = vector.extract_strided_slice %13 {offsets = [0, 24], sizes = [8, 8], strides = [1, 1]} : vector<8x32xbf16> to vector<8x8xbf16>
    %72 = vector.extract_strided_slice %15 {offsets = [0, 24], sizes = [8, 8], strides = [1, 1]} : vector<8x32xbf16> to vector<8x8xbf16>
    %cst_23 = arith.constant dense<0.000000e+00> : vector<8x8xf32>
    %73 = tpu.matmul %70, %71, %cst_23 {dimension_numbers = #tpu.dot_dimension_numbers<[1], [1], [0], [0], [0, 0, 1, 0], [], []>} : vector<8x8xbf16>, vector<8x8xbf16>, vector<8x8xf32> -> vector<8x8xf32>
    %cst_24 = arith.constant dense<0xFF800000> : vector<8xf32>
    %74 = vector.multi_reduction <maximumf>, %73, %cst_24 [1] : vector<8x8xf32> to vector<8xf32>
    %75 = vector.shape_cast %74 : vector<8xf32> to vector<8x1xf32>
    %76 = vector.broadcast %75 : vector<8x1xf32> to vector<8x8xf32>
    %77 = arith.subf %73, %76 : vector<8x8xf32>
    %78 = math.exp %77 : vector<8x8xf32>
    %cst_25 = arith.constant dense<0.000000e+00> : vector<8xf32>
    %79 = vector.multi_reduction <add>, %78, %cst_25 [1] : vector<8x8xf32> to vector<8xf32>
    %80 = vector.shape_cast %79 : vector<8xf32> to vector<8x1xf32>
    %81 = tpu.reciprocal %80 {approx = true} : vector<8x1xf32> -> vector<8x1xf32>
    %82 = vector.broadcast %81 : vector<8x1xf32> to vector<8x8xf32>
    %83 = arith.mulf %78, %82 : vector<8x8xf32>
    %84 = arith.truncf %83 : vector<8x8xf32> to vector<8x8xbf16>
    %cst_26 = arith.constant dense<0.000000e+00> : vector<8x8xf32>
    %85 = tpu.matmul %84, %72, %cst_26 {dimension_numbers = #tpu.dot_dimension_numbers<[1], [0], [0], [1], [0, 0, 1, 1], [], []>} : vector<8x8xbf16>, vector<8x8xbf16>, vector<8x8xf32> -> vector<8x8xf32>
    %86 = arith.truncf %85 : vector<8x8xf32> to vector<8x8xbf16>
    %c0_27 = arith.constant 0 : index
    %c24 = arith.constant 24 : index
    %87 = vector.load %arg15[%c0_27, %c24] : memref<8x32xbf16, #tpu.memory_space<vmem>>, vector<8x8xbf16>
    tpu.vector_store %arg15[%c0_27, %c24], %86 {strides = array<i32>} : memref<8x32xbf16, #tpu.memory_space<vmem>>, vector<8x8xbf16>,
    %c0_28 = arith.constant 0 : index
    %c0_29 = arith.constant 0 : index
    %88 = vector.load %arg15[%c0_28, %c0_29] : memref<8x32xbf16, #tpu.memory_space<vmem>>, vector<8x32xbf16>
    %c0_30 = arith.constant 0 : index
    %c0_31 = arith.constant 0 : index
    %89 = vector.load %arg4[%c0_30, %c0_31] : memref<32x32xbf16, #tpu.memory_space<vmem>>, vector<32x32xbf16>
    %cst_32 = arith.constant dense<0.000000e+00> : vector<8x32xf32>
    %90 = tpu.matmul %88, %89, %cst_32 {dimension_numbers = #tpu.dot_dimension_numbers<[1], [1], [0], [0], [0, 0, 1, 0], [], []>} : vector<8x32xbf16>, vector<32x32xbf16>, vector<8x32xf32> -> vector<8x32xf32>
    %c0_33 = arith.constant 0 : index
    %c0_34 = arith.constant 0 : index
    %91 = vector.load %arg5[%c0_33, %c0_34] : memref<1x32xf32, #tpu.memory_space<vmem>>, vector<1x32xf32>
    %92 = vector.broadcast %91 : vector<1x32xf32> to vector<8x32xf32>
    %93 = arith.addf %90, %92 : vector<8x32xf32>
    %94 = arith.addf %1, %93 : vector<8x32xf32>
    %c0_35 = arith.constant 0 : index
    %c0_36 = arith.constant 0 : index
    %95 = vector.load %arg6[%c0_35, %c0_36] : memref<1x32xf32, #tpu.memory_space<vmem>>, vector<1x32xf32>
    %c0_37 = arith.constant 0 : index
    %c0_38 = arith.constant 0 : index
    %96 = vector.load %arg7[%c0_37, %c0_38] : memref<1x32xf32, #tpu.memory_space<vmem>>, vector<1x32xf32>
    %cst_39 = arith.constant dense<0.000000e+00> : vector<8xf32>
    %97 = vector.multi_reduction <add>, %94, %cst_39 [1] : vector<8x32xf32> to vector<8xf32>
    %98 = vector.shape_cast %97 : vector<8xf32> to vector<8x1xf32>
    %cst_40 = arith.constant 3.200000e+01 : f32
    %99 = vector.broadcast %cst_40 : f32 to vector<8x1xf32>
    %100 = arith.divf %98, %99 : vector<8x1xf32>
    %101 = vector.broadcast %100 : vector<8x1xf32> to vector<8x32xf32>
    %102 = arith.subf %94, %101 : vector<8x32xf32>
    %103 = arith.mulf %102, %102 : vector<8x32xf32>
    %cst_41 = arith.constant dense<0.000000e+00> : vector<8xf32>
    %104 = vector.multi_reduction <add>, %103, %cst_41 [1] : vector<8x32xf32> to vector<8xf32>
    %105 = vector.shape_cast %104 : vector<8xf32> to vector<8x1xf32>
    %cst_42 = arith.constant 3.200000e+01 : f32
    %106 = vector.broadcast %cst_42 : f32 to vector<8x1xf32>
    %107 = arith.divf %105, %106 : vector<8x1xf32>
    %cst_43 = arith.constant 9.99999996E-13 : f32
    %108 = vector.broadcast %cst_43 : f32 to vector<8x1xf32>
    %109 = arith.addf %107, %108 : vector<8x1xf32>
    %110 = math.rsqrt %109 : vector<8x1xf32>
    %111 = vector.broadcast %110 : vector<8x1xf32> to vector<8x32xf32>
    %112 = arith.mulf %102, %111 : vector<8x32xf32>
    %113 = vector.broadcast %95 : vector<1x32xf32> to vector<8x32xf32>
    %114 = arith.mulf %112, %113 : vector<8x32xf32>
    %115 = vector.broadcast %96 : vector<1x32xf32> to vector<8x32xf32>
    %116 = arith.addf %114, %115 : vector<8x32xf32>
    %117 = arith.truncf %116 : vector<8x32xf32> to vector<8x32xbf16>
    %cst_44 = arith.constant 0.000000e+00 : f32
    %118 = vector.broadcast %cst_44 : f32 to vector<8x32xf32>
    %c0_45 = arith.constant 0 : index
    %c0_46 = arith.constant 0 : index
    %119 = vector.load %arg10[%c0_45, %c0_46] : memref<64x32xbf16, #tpu.memory_space<vmem>>, vector<64x32xbf16>
    %cst_47 = arith.constant dense<0.000000e+00> : vector<8x64xf32>
    %120 = tpu.matmul %117, %119, %cst_47 {dimension_numbers = #tpu.dot_dimension_numbers<[1], [1], [0], [0], [0, 0, 1, 0], [], []>} : vector<8x32xbf16>, vector<64x32xbf16>, vector<8x64xf32> -> vector<8x64xf32>
    %c0_48 = arith.constant 0 : index
    %c0_49 = arith.constant 0 : index
    %121 = vector.load %arg11[%c0_48, %c0_49] : memref<1x64xf32, #tpu.memory_space<vmem>>, vector<1x64xf32>
    %122 = vector.broadcast %121 : vector<1x64xf32> to vector<8x64xf32>
    %123 = arith.addf %120, %122 : vector<8x64xf32>
    %cst_50 = arith.constant 5.000000e-01 : f32
    %124 = vector.broadcast %cst_50 : f32 to vector<8x64xf32>
    %125 = arith.mulf %124, %123 : vector<8x64xf32>
    %cst_51 = arith.constant 0.707106769 : f32
    %126 = vector.broadcast %cst_51 : f32 to vector<8x64xf32>
    %127 = arith.mulf %123, %126 : vector<8x64xf32>
    %cst_52 = arith.constant -4.000000e+00 : f32
    %cst_53 = arith.constant 4.000000e+00 : f32
    %128 = vector.broadcast %cst_52 : f32 to vector<8x64xf32>
    %129 = arith.maximumf %128, %127 : vector<8x64xf32>
    %130 = vector.broadcast %cst_53 : f32 to vector<8x64xf32>
    %131 = arith.minimumf %130, %129 : vector<8x64xf32>
    %132 = arith.mulf %131, %131 : vector<8x64xf32>
    %cst_54 = arith.constant -2.72614237E-10 : f32
    %133 = vector.broadcast %cst_54 : f32 to vector<8x64xf32>
    %134 = arith.mulf %133, %132 : vector<8x64xf32>
    %cst_55 = arith.constant 2.77068146E-8 : f32
    %135 = vector.broadcast %cst_55 : f32 to vector<8x64xf32>
    %136 = arith.addf %134, %135 : vector<8x64xf32>
    %137 = arith.mulf %136, %132 : vector<8x64xf32>
    %cst_56 = arith.constant -2.10102394E-6 : f32
    %138 = vector.broadcast %cst_56 : f32 to vector<8x64xf32>
    %139 = arith.addf %137, %138 : vector<8x64xf32>
    %140 = arith.mulf %139, %132 : vector<8x64xf32>
    %cst_57 = arith.constant -5.69250624E-5 : f32
    %141 = vector.broadcast %cst_57 : f32 to vector<8x64xf32>
    %142 = arith.addf %140, %141 : vector<8x64xf32>
    %143 = arith.mulf %142, %132 : vector<8x64xf32>
    %cst_58 = arith.constant -7.34990637E-4 : f32
    %144 = vector.broadcast %cst_58 : f32 to vector<8x64xf32>
    %145 = arith.addf %143, %144 : vector<8x64xf32>
    %146 = arith.mulf %145, %132 : vector<8x64xf32>
    %cst_59 = arith.constant -2.954600e-03 : f32
    %147 = vector.broadcast %cst_59 : f32 to vector<8x64xf32>
    %148 = arith.addf %146, %147 : vector<8x64xf32>
    %149 = arith.mulf %148, %132 : vector<8x64xf32>
    %cst_60 = arith.constant -0.0160960332 : f32
    %150 = vector.broadcast %cst_60 : f32 to vector<8x64xf32>
    %151 = arith.addf %149, %150 : vector<8x64xf32>
    %cst_61 = arith.constant -1.45660715E-5 : f32
    %152 = vector.broadcast %cst_61 : f32 to vector<8x64xf32>
    %153 = arith.mulf %152, %132 : vector<8x64xf32>
    %cst_62 = arith.constant -2.13374049E-4 : f32
    %154 = vector.broadcast %cst_62 : f32 to vector<8x64xf32>
    %155 = arith.addf %153, %154 : vector<8x64xf32>
    %156 = arith.mulf %155, %132 : vector<8x64xf32>
    %cst_63 = arith.constant -0.00168282702 : f32
    %157 = vector.broadcast %cst_63 : f32 to vector<8x64xf32>
    %158 = arith.addf %156, %157 : vector<8x64xf32>
    %159 = arith.mulf %158, %132 : vector<8x64xf32>
    %cst_64 = arith.constant -0.00737332925 : f32
    %160 = vector.broadcast %cst_64 : f32 to vector<8x64xf32>
    %161 = arith.addf %159, %160 : vector<8x64xf32>
    %162 = arith.mulf %161, %132 : vector<8x64xf32>
    %cst_65 = arith.constant -0.0142647391 : f32
    %163 = vector.broadcast %cst_65 : f32 to vector<8x64xf32>
    %164 = arith.addf %162, %163 : vector<8x64xf32>
    %165 = arith.mulf %131, %151 : vector<8x64xf32>
    %166 = tpu.reciprocal %164 {approx = true} : vector<8x64xf32> -> vector<8x64xf32>
    %167 = arith.mulf %165, %166 : vector<8x64xf32>
    %cst_66 = arith.constant 1.000000e+00 : f32
    %168 = vector.broadcast %cst_66 : f32 to vector<8x64xf32>
    %169 = arith.addf %168, %167 : vector<8x64xf32>
    %170 = arith.mulf %125, %169 : vector<8x64xf32>
    %171 = arith.truncf %170 : vector<8x64xf32> to vector<8x64xbf16>
    %c0_67 = arith.constant 0 : index
    %c0_68 = arith.constant 0 : index
    %172 = vector.load %arg12[%c0_67, %c0_68] : memref<32x64xbf16, #tpu.memory_space<vmem>>, vector<32x64xbf16>
    %cst_69 = arith.constant dense<0.000000e+00> : vector<8x32xf32>
    %173 = tpu.matmul %171, %172, %cst_69 {dimension_numbers = #tpu.dot_dimension_numbers<[1], [1], [0], [0], [0, 0, 1, 0], [], []>} : vector<8x64xbf16>, vector<32x64xbf16>, vector<8x32xf32> -> vector<8x32xf32>
    %174 = arith.addf %118, %173 : vector<8x32xf32>
    %c0_70 = arith.constant 0 : index
    %c0_71 = arith.constant 0 : index
    %175 = vector.load %arg13[%c0_70, %c0_71] : memref<1x32xf32, #tpu.memory_space<vmem>>, vector<1x32xf32>
    %176 = vector.broadcast %175 : vector<1x32xf32> to vector<8x32xf32>
    %177 = arith.addf %174, %176 : vector<8x32xf32>
    %178 = arith.addf %116, %177 : vector<8x32xf32>
    %c0_72 = arith.constant 0 : index
    %c0_73 = arith.constant 0 : index
    %179 = vector.load %arg8[%c0_72, %c0_73] : memref<1x32xf32, #tpu.memory_space<vmem>>, vector<1x32xf32>
    %c0_74 = arith.constant 0 : index
    %c0_75 = arith.constant 0 : index
    %180 = vector.load %arg9[%c0_74, %c0_75] : memref<1x32xf32, #tpu.memory_space<vmem>>, vector<1x32xf32>
    %cst_76 = arith.constant dense<0.000000e+00> : vector<8xf32>
    %181 = vector.multi_reduction <add>, %178, %cst_76 [1] : vector<8x32xf32> to vector<8xf32>
    %182 = vector.shape_cast %181 : vector<8xf32> to vector<8x1xf32>
    %cst_77 = arith.constant 3.200000e+01 : f32
    %183 = vector.broadcast %cst_77 : f32 to vector<8x1xf32>
    %184 = arith.divf %182, %183 : vector<8x1xf32>
    %185 = vector.broadcast %184 : vector<8x1xf32> to vector<8x32xf32>
    %186 = arith.subf %178, %185 : vector<8x32xf32>
    %187 = arith.mulf %186, %186 : vector<8x32xf32>
    %cst_78 = arith.constant dense<0.000000e+00> : vector<8xf32>
    %188 = vector.multi_reduction <add>, %187, %cst_78 [1] : vector<8x32xf32> to vector<8xf32>
    %189 = vector.shape_cast %188 : vector<8xf32> to vector<8x1xf32>
    %cst_79 = arith.constant 3.200000e+01 : f32
    %190 = vector.broadcast %cst_79 : f32 to vector<8x1xf32>
    %191 = arith.divf %189, %190 : vector<8x1xf32>
    %cst_80 = arith.constant 9.99999996E-13 : f32
    %192 = vector.broadcast %cst_80 : f32 to vector<8x1xf32>
    %193 = arith.addf %191, %192 : vector<8x1xf32>
    %194 = math.rsqrt %193 : vector<8x1xf32>
    %195 = vector.broadcast %194 : vector<8x1xf32> to vector<8x32xf32>
    %196 = arith.mulf %186, %195 : vector<8x32xf32>
    %197 = vector.broadcast %179 : vector<1x32xf32> to vector<8x32xf32>
    %198 = arith.mulf %196, %197 : vector<8x32xf32>
    %199 = vector.broadcast %180 : vector<1x32xf32> to vector<8x32xf32>
    %200 = arith.addf %198, %199 : vector<8x32xf32>
    %c0_81 = arith.constant 0 : index
    %c0_82 = arith.constant 0 : index
    %c0_83 = arith.constant 0 : index
    %201 = vector.load %arg14[%c0_81, %c0_82, %c0_83] : memref<1x8x32xf32, #tpu.memory_space<vmem>>, vector<1x8x32xf32>
    %202 = vector.shape_cast %201 : vector<1x8x32xf32> to vector<8x32xf32>
    %203 = vector.shape_cast %200 : vector<8x32xf32> to vector<1x8x32xf32>
    tpu.vector_store %arg14[%c0_81, %c0_82, %c0_83], %203 {strides = array<i32>} : memref<1x8x32xf32, #tpu.memory_space<vmem>>, vector<1x8x32xf32>,
    return
  }
  func.func @transform_0(%arg0: i32) -> (i32, i32, i32) {
    %c0_i32 = arith.constant 0 : i32
    %c0_i32_0 = arith.constant 0 : i32
    %c0_i32_1 = arith.constant 0 : i32
    return %arg0, %c0_i32, %c0_i32_0 : i32, i32, i32
  }
  func.func @transform_1(%arg0: i32) -> (i32, i32) {
    %c0_i32 = arith.constant 0 : i32
    %c0_i32_0 = arith.constant 0 : i32
    %c0_i32_1 = arith.constant 0 : i32
    return %c0_i32, %c0_i32_0 : i32, i32
  }
  func.func @transform_2(%arg0: i32) -> (i32, i32) {
    %c0_i32 = arith.constant 0 : i32
    %c0_i32_0 = arith.constant 0 : i32
    %c0_i32_1 = arith.constant 0 : i32
    return %c0_i32, %c0_i32_0 : i32, i32
  }
  func.func @transform_3(%arg0: i32) -> (i32, i32) {
    %c0_i32 = arith.constant 0 : i32
    %c0_i32_0 = arith.constant 0 : i32
    %c0_i32_1 = arith.constant 0 : i32
    return %c0_i32, %c0_i32_0 : i32, i32
  }
  func.func @transform_4(%arg0: i32) -> (i32, i32) {
    %c0_i32 = arith.constant 0 : i32
    %c0_i32_0 = arith.constant 0 : i32
    %c0_i32_1 = arith.constant 0 : i32
    return %c0_i32, %c0_i32_0 : i32, i32
  }
  func.func @transform_5(%arg0: i32) -> (i32, i32) {
    %c0_i32 = arith.constant 0 : i32
    %c0_i32_0 = arith.constant 0 : i32
    %c0_i32_1 = arith.constant 0 : i32
    return %c0_i32, %c0_i32_0 : i32, i32
  }
  func.func @transform_6(%arg0: i32) -> (i32, i32) {
    %c0_i32 = arith.constant 0 : i32
    %c0_i32_0 = arith.constant 0 : i32
    %c0_i32_1 = arith.constant 0 : i32
    return %c0_i32, %c0_i32_0 : i32, i32
  }
  func.func @transform_7(%arg0: i32) -> (i32, i32) {
    %c0_i32 = arith.constant 0 : i32
    %c0_i32_0 = arith.constant 0 : i32
    %c0_i32_1 = arith.constant 0 : i32
    return %c0_i32, %c0_i32_0 : i32, i32
  }
  func.func @transform_8(%arg0: i32) -> (i32, i32) {
    %c0_i32 = arith.constant 0 : i32
    %c0_i32_0 = arith.constant 0 : i32
    %c0_i32_1 = arith.constant 0 : i32
    return %c0_i32, %c0_i32_0 : i32, i32
  }
  func.func @transform_9(%arg0: i32) -> (i32, i32) {
    %c0_i32 = arith.constant 0 : i32
    %c0_i32_0 = arith.constant 0 : i32
    %c0_i32_1 = arith.constant 0 : i32
    return %c0_i32, %c0_i32_0 : i32, i32
  }
  func.func @transform_10(%arg0: i32) -> (i32, i32) {
    %c0_i32 = arith.constant 0 : i32
    %c0_i32_0 = arith.constant 0 : i32
    %c0_i32_1 = arith.constant 0 : i32
    return %c0_i32, %c0_i32_0 : i32, i32
  }
  func.func @transform_11(%arg0: i32) -> (i32, i32) {
    %c0_i32 = arith.constant 0 : i32
    %c0_i32_0 = arith.constant 0 : i32
    %c0_i32_1 = arith.constant 0 : i32
    return %c0_i32, %c0_i32_0 : i32, i32
  }
  func.func @transform_12(%arg0: i32) -> (i32, i32) {
    %c0_i32 = arith.constant 0 : i32
    %c0_i32_0 = arith.constant 0 : i32
    %c0_i32_1 = arith.constant 0 : i32
    return %c0_i32, %c0_i32_0 : i32, i32
  }
  func.func @transform_13(%arg0: i32) -> (i32, i32, i32) {
    %c0_i32 = arith.constant 0 : i32
    %c0_i32_0 = arith.constant 0 : i32
    %c0_i32_1 = arith.constant 0 : i32
    return %arg0, %c0_i32, %c0_i32_0 : i32, i32, i32
  }
}

module attributes {stable_mosaic.version = 11 : i64} {
  func.func @kernel(%arg0: i32, %arg1: memref<1x8x32xf32, #tpu.memory_space<vmem>>, %arg2: memref<96x32xbf16, #tpu.memory_space<vmem>>, %arg3: memref<1x96xf32, #tpu.memory_space<vmem>>, %arg4: memref<32x32xbf16, #tpu.memory_space<vmem>>, %arg5: memref<1x32xf32, #tpu.memory_space<vmem>>, %arg6: memref<1x32xf32, #tpu.memory_space<vmem>>, %arg7: memref<1x32xf32, #tpu.memory_space<vmem>>, %arg8: memref<1x32xf32, #tpu.memory_space<vmem>>, %arg9: memref<1x32xf32, #tpu.memory_space<vmem>>, %arg10: memref<64x32xbf16, #tpu.memory_space<vmem>>, %arg11: memref<1x64xf32, #tpu.memory_space<vmem>>, %arg12: memref<32x64xbf16, #tpu.memory_space<vmem>>, %arg13: memref<1x32xf32, #tpu.memory_space<vmem>>, %arg14: memref<1x8x32xf32, #tpu.memory_space<vmem>>, %arg15: memref<8x32xbf16, #tpu.memory_space<vmem>>) attributes {dimension_semantics = [#tpu.dimension_semantics<parallel>], iteration_bounds = array<i64: 2>, scalar_prefetch = 0 : i64, scratch_operands = 1 : i64, tpu.core_type = #tpu.core_type<tc>, window_params = [{transform_indices = @transform_0, window_bounds = array<i64: 1, 8, 32>}, {pipeline_mode = #tpu.pipeline_mode<synchronous>, transform_indices = @transform_1, window_bounds = array<i64: 96, 32>}, {pipeline_mode = #tpu.pipeline_mode<synchronous>, transform_indices = @transform_2, window_bounds = array<i64: 1, 96>}, {pipeline_mode = #tpu.pipeline_mode<synchronous>, transform_indices = @transform_3, window_bounds = array<i64: 32, 32>}, {pipeline_mode = #tpu.pipeline_mode<synchronous>, transform_indices = @transform_4, window_bounds = array<i64: 1, 32>}, {pipeline_mode = #tpu.pipeline_mode<synchronous>, transform_indices = @transform_5, window_bounds = array<i64: 1, 32>}, {pipeline_mode = #tpu.pipeline_mode<synchronous>, transform_indices = @transform_6, window_bounds = array<i64: 1, 32>}, {pipeline_mode = #tpu.pipeline_mode<synchronous>, transform_indices = @transform_7, window_bounds = array<i64: 1, 32>}, {pipeline_mode = #tpu.pipeline_mode<synchronous>, transform_indices = @transform_8, window_bounds = array<i64: 1, 32>}, {pipeline_mode = #tpu.pipeline_mode<synchronous>, transform_indices = @transform_9, window_bounds = array<i64: 64, 32>}, {pipeline_mode = #tpu.pipeline_mode<synchronous>, transform_indices = @transform_10, window_bounds = array<i64: 1, 64>}, {pipeline_mode = #tpu.pipeline_mode<synchronous>, transform_indices = @transform_11, window_bounds = array<i64: 32, 64>}, {pipeline_mode = #tpu.pipeline_mode<synchronous>, transform_indices = @transform_12, window_bounds = array<i64: 1, 32>}, {transform_indices = @transform_13, window_bounds = array<i64: 1, 8, 32>}]} {
    %c0 = arith.constant 0 : index
    %c0_0 = arith.constant 0 : index
    %c0_1 = arith.constant 0 : index
    %0 = vector.load %arg1[%c0, %c0_0, %c0_1] : memref<1x8x32xf32, #tpu.memory_space<vmem>>, vector<1x8x32xf32>
    %1 = vector.shape_cast %0 : vector<1x8x32xf32> to vector<8x32xf32>
    %2 = arith.truncf %1 : vector<8x32xf32> to vector<8x32xbf16>
    %c0_2 = arith.constant 0 : index
    %c0_3 = arith.constant 0 : index
    %3 = vector.load %arg2[%c0_2, %c0_3] : memref<96x32xbf16, #tpu.memory_space<vmem>>, vector<96x32xbf16>
    %cst = arith.constant dense<0.000000e+00> : vector<8x96xf32>
    %4 = tpu.matmul %2, %3, %cst {dimension_numbers = #tpu.dot_dimension_numbers<[1], [1], [0], [0], [0, 0, 1, 0], [], []>} : vector<8x32xbf16>, vector<96x32xbf16>, vector<8x96xf32> -> vector<8x96xf32>
    %c0_4 = arith.constant 0 : index
    %c0_5 = arith.constant 0 : index
    %5 = vector.load %arg3[%c0_4, %c0_5] : memref<1x96xf32, #tpu.memory_space<vmem>>, vector<1x96xf32>
    %6 = vector.broadcast %5 : vector<1x96xf32> to vector<8x96xf32>
    %7 = arith.addf %4, %6 : vector<8x96xf32>
    %8 = vector.extract_strided_slice %7 {offsets = [0, 0], sizes = [8, 32], strides = [1, 1]} : vector<8x96xf32> to vector<8x32xf32>
    %cst_6 = arith.constant 0.353553385 : f32
    %9 = vector.broadcast %cst_6 : f32 to vector<8x32xf32>
    %10 = arith.mulf %8, %9 : vector<8x32xf32>
    %11 = arith.truncf %10 : vector<8x32xf32> to vector<8x32xbf16>
    %12 = vector.extract_strided_slice %7 {offsets = [0, 32], sizes = [8, 32], strides = [1, 1]} : vector<8x96xf32> to vector<8x32xf32>
    %13 = arith.truncf %12 : vector<8x32xf32> to vector<8x32xbf16>
    %14 = vector.extract_strided_slice %7 {offsets = [0, 64], sizes = [8, 32], strides = [1, 1]} : vector<8x96xf32> to vector<8x32xf32>
    %15 = arith.truncf %14 : vector<8x32xf32> to vector<8x32xbf16>
    %16 = vector.extract_strided_slice %11 {offsets = [0, 0], sizes = [8, 8], strides = [1, 1]} : vector<8x32xbf16> to vector<8x8xbf16>
    %17 = vector.extract_strided_slice %13 {offsets = [0, 0], sizes = [8, 8], strides = [1, 1]} : vector<8x32xbf16> to vector<8x8xbf16>
    %18 = vector.extract_strided_slice %15 {offsets = [0, 0], sizes = [8, 8], strides = [1, 1]} : vector<8x32xbf16> to vector<8x8xbf16>
    %cst_7 = arith.constant dense<0.000000e+00> : vector<8x8xf32>
    %19 = tpu.matmul %16, %17, %cst_7 {dimension_numbers = #tpu.dot_dimension_numbers<[1], [1], [0], [0], [0, 0, 1, 0], [], []>} : vector<8x8xbf16>, vector<8x8xbf16>, vector<8x8xf32> -> vector<8x8xf32>
    %cst_8 = arith.constant dense<0xFF800000> : vector<8xf32>
    %20 = vector.multi_reduction <maximumf>, %19, %cst_8 [1] : vector<8x8xf32> to vector<8xf32>
    %21 = vector.shape_cast %20 : vector<8xf32> to vector<8x1xf32>
    %22 = vector.broadcast %21 : vector<8x1xf32> to vector<8x8xf32>
    %23 = arith.subf %19, %22 : vector<8x8xf32>
    %24 = math.exp %23 : vector<8x8xf32>
    %cst_9 = arith.constant dense<0.000000e+00> : vector<8xf32>
    %25 = vector.multi_reduction <add>, %24, %cst_9 [1] : vector<8x8xf32> to vector<8xf32>
    %26 = vector.shape_cast %25 : vector<8xf32> to vector<8x1xf32>
    %27 = tpu.reciprocal %26 {approx = true} : vector<8x1xf32> -> vector<8x1xf32>
    %28 = vector.broadcast %27 : vector<8x1xf32> to vector<8x8xf32>
    %29 = arith.mulf %24, %28 : vector<8x8xf32>
    %30 = arith.truncf %29 : vector<8x8xf32> to vector<8x8xbf16>
    %cst_10 = arith.constant dense<0.000000e+00> : vector<8x8xf32>
    %31 = tpu.matmul %30, %18, %cst_10 {dimension_numbers = #tpu.dot_dimension_numbers<[1], [0], [0], [1], [0, 0, 1, 1], [], []>} : vector<8x8xbf16>, vector<8x8xbf16>, vector<8x8xf32> -> vector<8x8xf32>
    %32 = arith.truncf %31 : vector<8x8xf32> to vector<8x8xbf16>
    %c0_11 = arith.constant 0 : index
    %c0_12 = arith.constant 0 : index
    %33 = vector.load %arg15[%c0_11, %c0_12] : memref<8x32xbf16, #tpu.memory_space<vmem>>, vector<8x8xbf16>
    tpu.vector_store %arg15[%c0_11, %c0_12], %32 {strides = array<i32>} : memref<8x32xbf16, #tpu.memory_space<vmem>>, vector<8x8xbf16>,
    %34 = vector.extract_strided_slice %11 {offsets = [0, 8], sizes = [8, 8], strides = [1, 1]} : vector<8x32xbf16> to vector<8x8xbf16>
    %35 = vector.extract_strided_slice %13 {offsets = [0, 8], sizes = [8, 8], strides = [1, 1]} : vector<8x32xbf16> to vector<8x8xbf16>
    %36 = vector.extract_strided_slice %15 {offsets = [0, 8], sizes = [8, 8], strides = [1, 1]} : vector<8x32xbf16> to vector<8x8xbf16>
    %cst_13 = arith.constant dense<0.000000e+00> : vector<8x8xf32>
    %37 = tpu.matmul %34, %35, %cst_13 {dimension_numbers = #tpu.dot_dimension_numbers<[1], [1], [0], [0], [0, 0, 1, 0], [], []>} : vector<8x8xbf16>, vector<8x8xbf16>, vector<8x8xf32> -> vector<8x8xf32>
    %cst_14 = arith.constant dense<0xFF800000> : vector<8xf32>
    %38 = vector.multi_reduction <maximumf>, %37, %cst_14 [1] : vector<8x8xf32> to vector<8xf32>
    %39 = vector.shape_cast %38 : vector<8xf32> to vector<8x1xf32>
    %40 = vector.broadcast %39 : vector<8x1xf32> to vector<8x8xf32>
    %41 = arith.subf %37, %40 : vector<8x8xf32>
    %42 = math.exp %41 : vector<8x8xf32>
    %cst_15 = arith.constant dense<0.000000e+00> : vector<8xf32>
    %43 = vector.multi_reduction <add>, %42, %cst_15 [1] : vector<8x8xf32> to vector<8xf32>
    %44 = vector.shape_cast %43 : vector<8xf32> to vector<8x1xf32>
    %45 = tpu.reciprocal %44 {approx = true} : vector<8x1xf32> -> vector<8x1xf32>
    %46 = vector.broadcast %45 : vector<8x1xf32> to vector<8x8xf32>
    %47 = arith.mulf %42, %46 : vector<8x8xf32>
    %48 = arith.truncf %47 : vector<8x8xf32> to vector<8x8xbf16>
    %cst_16 = arith.constant dense<0.000000e+00> : vector<8x8xf32>
    %49 = tpu.matmul %48, %36, %cst_16 {dimension_numbers = #tpu.dot_dimension_numbers<[1], [0], [0], [1], [0, 0, 1, 1], [], []>} : vector<8x8xbf16>, vector<8x8xbf16>, vector<8x8xf32> -> vector<8x8xf32>
    %50 = arith.truncf %49 : vector<8x8xf32> to vector<8x8xbf16>
    %c0_17 = arith.constant 0 : index
    %c8 = arith.constant 8 : index
    %51 = vector.load %arg15[%c0_17, %c8] : memref<8x32xbf16, #tpu.memory_space<vmem>>, vector<8x8xbf16>
    tpu.vector_store %arg15[%c0_17, %c8], %50 {strides = array<i32>} : memref<8x32xbf16, #tpu.memory_space<vmem>>, vector<8x8xbf16>,
    %52 = vector.extract_strided_slice %11 {offsets = [0, 16], sizes = [8, 8], strides = [1, 1]} : vector<8x32xbf16> to vector<8x8xbf16>
    %53 = vector.extract_strided_slice %13 {offsets = [0, 16], sizes = [8, 8], strides = [1, 1]} : vector<8x32xbf16> to vector<8x8xbf16>
    %54 = vector.extract_strided_slice %15 {offsets = [0, 16], sizes = [8, 8], strides = [1, 1]} : vector<8x32xbf16> to vector<8x8xbf16>
    %cst_18 = arith.constant dense<0.000000e+00> : vector<8x8xf32>
    %55 = tpu.matmul %52, %53, %cst_18 {dimension_numbers = #tpu.dot_dimension_numbers<[1], [1], [0], [0], [0, 0, 1, 0], [], []>} : vector<8x8xbf16>, vector<8x8xbf16>, vector<8x8xf32> -> vector<8x8xf32>
    %cst_19 = arith.constant dense<0xFF800000> : vector<8xf32>
    %56 = vector.multi_reduction <maximumf>, %55, %cst_19 [1] : vector<8x8xf32> to vector<8xf32>
    %57 = vector.shape_cast %56 : vector<8xf32> to vector<8x1xf32>
    %58 = vector.broadcast %57 : vector<8x1xf32> to vector<8x8xf32>
    %59 = arith.subf %55, %58 : vector<8x8xf32>
    %60 = math.exp %59 : vector<8x8xf32>
    %cst_20 = arith.constant dense<0.000000e+00> : vector<8xf32>
    %61 = vector.multi_reduction <add>, %60, %cst_20 [1] : vector<8x8xf32> to vector<8xf32>
    %62 = vector.shape_cast %61 : vector<8xf32> to vector<8x1xf32>
    %63 = tpu.reciprocal %62 {approx = true} : vector<8x1xf32> -> vector<8x1xf32>
    %64 = vector.broadcast %63 : vector<8x1xf32> to vector<8x8xf32>
    %65 = arith.mulf %60, %64 : vector<8x8xf32>
    %66 = arith.truncf %65 : vector<8x8xf32> to vector<8x8xbf16>
    %cst_21 = arith.constant dense<0.000000e+00> : vector<8x8xf32>
    %67 = tpu.matmul %66, %54, %cst_21 {dimension_numbers = #tpu.dot_dimension_numbers<[1], [0], [0], [1], [0, 0, 1, 1], [], []>} : vector<8x8xbf16>, vector<8x8xbf16>, vector<8x8xf32> -> vector<8x8xf32>
    %68 = arith.truncf %67 : vector<8x8xf32> to vector<8x8xbf16>
    %c0_22 = arith.constant 0 : index
    %c16 = arith.constant 16 : index
    %69 = vector.load %arg15[%c0_22, %c16] : memref<8x32xbf16, #tpu.memory_space<vmem>>, vector<8x8xbf16>
    tpu.vector_store %arg15[%c0_22, %c16], %68 {strides = array<i32>} : memref<8x32xbf16, #tpu.memory_space<vmem>>, vector<8x8xbf16>,
    %70 = vector.extract_strided_slice %11 {offsets = [0, 24], sizes = [8, 8], strides = [1, 1]} : vector<8x32xbf16> to vector<8x8xbf16>
    %71 = vector.extract_strided_slice %13 {offsets = [0, 24], sizes = [8, 8], strides = [1, 1]} : vector<8x32xbf16> to vector<8x8xbf16>
    %72 = vector.extract_strided_slice %15 {offsets = [0, 24], sizes = [8, 8], strides = [1, 1]} : vector<8x32xbf16> to vector<8x8xbf16>
    %cst_23 = arith.constant dense<0.000000e+00> : vector<8x8xf32>
    %73 = tpu.matmul %70, %71, %cst_23 {dimension_numbers = #tpu.dot_dimension_numbers<[1], [1], [0], [0], [0, 0, 1, 0], [], []>} : vector<8x8xbf16>, vector<8x8xbf16>, vector<8x8xf32> -> vector<8x8xf32>
    %cst_24 = arith.constant dense<0xFF800000> : vector<8xf32>
    %74 = vector.multi_reduction <maximumf>, %73, %cst_24 [1] : vector<8x8xf32> to vector<8xf32>
    %75 = vector.shape_cast %74 : vector<8xf32> to vector<8x1xf32>
    %76 = vector.broadcast %75 : vector<8x1xf32> to vector<8x8xf32>
    %77 = arith.subf %73, %76 : vector<8x8xf32>
    %78 = math.exp %77 : vector<8x8xf32>
    %cst_25 = arith.constant dense<0.000000e+00> : vector<8xf32>
    %79 = vector.multi_reduction <add>, %78, %cst_25 [1] : vector<8x8xf32> to vector<8xf32>
    %80 = vector.shape_cast %79 : vector<8xf32> to vector<8x1xf32>
    %81 = tpu.reciprocal %80 {approx = true} : vector<8x1xf32> -> vector<8x1xf32>
    %82 = vector.broadcast %81 : vector<8x1xf32> to vector<8x8xf32>
    %83 = arith.mulf %78, %82 : vector<8x8xf32>
    %84 = arith.truncf %83 : vector<8x8xf32> to vector<8x8xbf16>
    %cst_26 = arith.constant dense<0.000000e+00> : vector<8x8xf32>
    %85 = tpu.matmul %84, %72, %cst_26 {dimension_numbers = #tpu.dot_dimension_numbers<[1], [0], [0], [1], [0, 0, 1, 1], [], []>} : vector<8x8xbf16>, vector<8x8xbf16>, vector<8x8xf32> -> vector<8x8xf32>
    %86 = arith.truncf %85 : vector<8x8xf32> to vector<8x8xbf16>
    %c0_27 = arith.constant 0 : index
    %c24 = arith.constant 24 : index
    %87 = vector.load %arg15[%c0_27, %c24] : memref<8x32xbf16, #tpu.memory_space<vmem>>, vector<8x8xbf16>
    tpu.vector_store %arg15[%c0_27, %c24], %86 {strides = array<i32>} : memref<8x32xbf16, #tpu.memory_space<vmem>>, vector<8x8xbf16>,
    %c0_28 = arith.constant 0 : index
    %c0_29 = arith.constant 0 : index
    %88 = vector.load %arg15[%c0_28, %c0_29] : memref<8x32xbf16, #tpu.memory_space<vmem>>, vector<8x32xbf16>
    %c0_30 = arith.constant 0 : index
    %c0_31 = arith.constant 0 : index
    %89 = vector.load %arg4[%c0_30, %c0_31] : memref<32x32xbf16, #tpu.memory_space<vmem>>, vector<32x32xbf16>
    %cst_32 = arith.constant dense<0.000000e+00> : vector<8x32xf32>
    %90 = tpu.matmul %88, %89, %cst_32 {dimension_numbers = #tpu.dot_dimension_numbers<[1], [1], [0], [0], [0, 0, 1, 0], [], []>} : vector<8x32xbf16>, vector<32x32xbf16>, vector<8x32xf32> -> vector<8x32xf32>
    %c0_33 = arith.constant 0 : index
    %c0_34 = arith.constant 0 : index
    %91 = vector.load %arg5[%c0_33, %c0_34] : memref<1x32xf32, #tpu.memory_space<vmem>>, vector<1x32xf32>
    %92 = vector.broadcast %91 : vector<1x32xf32> to vector<8x32xf32>
    %93 = arith.addf %90, %92 : vector<8x32xf32>
    %94 = arith.addf %1, %93 : vector<8x32xf32>
    %c0_35 = arith.constant 0 : index
    %c0_36 = arith.constant 0 : index
    %95 = vector.load %arg6[%c0_35, %c0_36] : memref<1x32xf32, #tpu.memory_space<vmem>>, vector<1x32xf32>
    %c0_37 = arith.constant 0 : index
    %c0_38 = arith.constant 0 : index
    %96 = vector.load %arg7[%c0_37, %c0_38] : memref<1x32xf32, #tpu.memory_space<vmem>>, vector<1x32xf32>
    %cst_39 = arith.constant dense<0.000000e+00> : vector<8xf32>
    %97 = vector.multi_reduction <add>, %94, %cst_39 [1] : vector<8x32xf32> to vector<8xf32>
    %98 = vector.shape_cast %97 : vector<8xf32> to vector<8x1xf32>
    %cst_40 = arith.constant 3.200000e+01 : f32
    %99 = vector.broadcast %cst_40 : f32 to vector<8x1xf32>
    %100 = arith.divf %98, %99 : vector<8x1xf32>
    %101 = vector.broadcast %100 : vector<8x1xf32> to vector<8x32xf32>
    %102 = arith.subf %94, %101 : vector<8x32xf32>
    %103 = arith.mulf %102, %102 : vector<8x32xf32>
    %cst_41 = arith.constant dense<0.000000e+00> : vector<8xf32>
    %104 = vector.multi_reduction <add>, %103, %cst_41 [1] : vector<8x32xf32> to vector<8xf32>
    %105 = vector.shape_cast %104 : vector<8xf32> to vector<8x1xf32>
    %cst_42 = arith.constant 3.200000e+01 : f32
    %106 = vector.broadcast %cst_42 : f32 to vector<8x1xf32>
    %107 = arith.divf %105, %106 : vector<8x1xf32>
    %cst_43 = arith.constant 9.99999996E-13 : f32
    %108 = vector.broadcast %cst_43 : f32 to vector<8x1xf32>
    %109 = arith.addf %107, %108 : vector<8x1xf32>
    %110 = math.rsqrt %109 : vector<8x1xf32>
    %111 = vector.broadcast %110 : vector<8x1xf32> to vector<8x32xf32>
    %112 = arith.mulf %102, %111 : vector<8x32xf32>
    %113 = vector.broadcast %95 : vector<1x32xf32> to vector<8x32xf32>
    %114 = arith.mulf %112, %113 : vector<8x32xf32>
    %115 = vector.broadcast %96 : vector<1x32xf32> to vector<8x32xf32>
    %116 = arith.addf %114, %115 : vector<8x32xf32>
    %117 = arith.truncf %116 : vector<8x32xf32> to vector<8x32xbf16>
    %cst_44 = arith.constant 0.000000e+00 : f32
    %118 = vector.broadcast %cst_44 : f32 to vector<8x32xf32>
    %c0_45 = arith.constant 0 : index
    %c0_46 = arith.constant 0 : index
    %119 = vector.load %arg10[%c0_45, %c0_46] : memref<64x32xbf16, #tpu.memory_space<vmem>>, vector<64x32xbf16>
    %cst_47 = arith.constant dense<0.000000e+00> : vector<8x64xf32>
    %120 = tpu.matmul %117, %119, %cst_47 {dimension_numbers = #tpu.dot_dimension_numbers<[1], [1], [0], [0], [0, 0, 1, 0], [], []>} : vector<8x32xbf16>, vector<64x32xbf16>, vector<8x64xf32> -> vector<8x64xf32>
    %c0_48 = arith.constant 0 : index
    %c0_49 = arith.constant 0 : index
    %121 = vector.load %arg11[%c0_48, %c0_49] : memref<1x64xf32, #tpu.memory_space<vmem>>, vector<1x64xf32>
    %122 = vector.broadcast %121 : vector<1x64xf32> to vector<8x64xf32>
    %123 = arith.addf %120, %122 : vector<8x64xf32>
    %cst_50 = arith.constant 5.000000e-01 : f32
    %124 = vector.broadcast %cst_50 : f32 to vector<8x64xf32>
    %125 = arith.mulf %124, %123 : vector<8x64xf32>
    %cst_51 = arith.constant 0.707106769 : f32
    %126 = vector.broadcast %cst_51 : f32 to vector<8x64xf32>
    %127 = arith.mulf %123, %126 : vector<8x64xf32>
    %cst_52 = arith.constant -4.000000e+00 : f32
    %cst_53 = arith.constant 4.000000e+00 : f32
    %128 = vector.broadcast %cst_52 : f32 to vector<8x64xf32>
    %129 = arith.maximumf %128, %127 : vector<8x64xf32>
    %130 = vector.broadcast %cst_53 : f32 to vector<8x64xf32>
    %131 = arith.minimumf %130, %129 : vector<8x64xf32>
    %132 = arith.mulf %131, %131 : vector<8x64xf32>
    %cst_54 = arith.constant -2.72614237E-10 : f32
    %133 = vector.broadcast %cst_54 : f32 to vector<8x64xf32>
    %134 = arith.mulf %133, %132 : vector<8x64xf32>
    %cst_55 = arith.constant 2.77068146E-8 : f32
    %135 = vector.broadcast %cst_55 : f32 to vector<8x64xf32>
    %136 = arith.addf %134, %135 : vector<8x64xf32>
    %137 = arith.mulf %136, %132 : vector<8x64xf32>
    %cst_56 = arith.constant -2.10102394E-6 : f32
    %138 = vector.broadcast %cst_56 : f32 to vector<8x64xf32>
    %139 = arith.addf %137, %138 : vector<8x64xf32>
    %140 = arith.mulf %139, %132 : vector<8x64xf32>
    %cst_57 = arith.constant -5.69250624E-5 : f32
    %141 = vector.broadcast %cst_57 : f32 to vector<8x64xf32>
    %142 = arith.addf %140, %141 : vector<8x64xf32>
    %143 = arith.mulf %142, %132 : vector<8x64xf32>
    %cst_58 = arith.constant -7.34990637E-4 : f32
    %144 = vector.broadcast %cst_58 : f32 to vector<8x64xf32>
    %145 = arith.addf %143, %144 : vector<8x64xf32>
    %146 = arith.mulf %145, %132 : vector<8x64xf32>
    %cst_59 = arith.constant -2.954600e-03 : f32
    %147 = vector.broadcast %cst_59 : f32 to vector<8x64xf32>
    %148 = arith.addf %146, %147 : vector<8x64xf32>
    %149 = arith.mulf %148, %132 : vector<8x64xf32>
    %cst_60 = arith.constant -0.0160960332 : f32
    %150 = vector.broadcast %cst_60 : f32 to vector<8x64xf32>
    %151 = arith.addf %149, %150 : vector<8x64xf32>
    %cst_61 = arith.constant -1.45660715E-5 : f32
    %152 = vector.broadcast %cst_61 : f32 to vector<8x64xf32>
    %153 = arith.mulf %152, %132 : vector<8x64xf32>
    %cst_62 = arith.constant -2.13374049E-4 : f32
    %154 = vector.broadcast %cst_62 : f32 to vector<8x64xf32>
    %155 = arith.addf %153, %154 : vector<8x64xf32>
    %156 = arith.mulf %155, %132 : vector<8x64xf32>
    %cst_63 = arith.constant -0.00168282702 : f32
    %157 = vector.broadcast %cst_63 : f32 to vector<8x64xf32>
    %158 = arith.addf %156, %157 : vector<8x64xf32>
    %159 = arith.mulf %158, %132 : vector<8x64xf32>
    %cst_64 = arith.constant -0.00737332925 : f32
    %160 = vector.broadcast %cst_64 : f32 to vector<8x64xf32>
    %161 = arith.addf %159, %160 : vector<8x64xf32>
    %162 = arith.mulf %161, %132 : vector<8x64xf32>
    %cst_65 = arith.constant -0.0142647391 : f32
    %163 = vector.broadcast %cst_65 : f32 to vector<8x64xf32>
    %164 = arith.addf %162, %163 : vector<8x64xf32>
    %165 = arith.mulf %131, %151 : vector<8x64xf32>
    %166 = tpu.reciprocal %164 {approx = true} : vector<8x64xf32> -> vector<8x64xf32>
    %167 = arith.mulf %165, %166 : vector<8x64xf32>
    %cst_66 = arith.constant 1.000000e+00 : f32
    %168 = vector.broadcast %cst_66 : f32 to vector<8x64xf32>
    %169 = arith.addf %168, %167 : vector<8x64xf32>
    %170 = arith.mulf %125, %169 : vector<8x64xf32>
    %171 = arith.truncf %170 : vector<8x64xf32> to vector<8x64xbf16>
    %c0_67 = arith.constant 0 : index
    %c0_68 = arith.constant 0 : index
    %172 = vector.load %arg12[%c0_67, %c0_68] : memref<32x64xbf16, #tpu.memory_space<vmem>>, vector<32x64xbf16>
    %cst_69 = arith.constant dense<0.000000e+00> : vector<8x32xf32>
    %173 = tpu.matmul %171, %172, %cst_69 {dimension_numbers = #tpu.dot_dimension_numbers<[1], [1], [0], [0], [0, 0, 1, 0], [], []>} : vector<8x64xbf16>, vector<32x64xbf16>, vector<8x32xf32> -> vector<8x32xf32>
    %174 = arith.addf %118, %173 : vector<8x32xf32>
    %c0_70 = arith.constant 0 : index
    %c0_71 = arith.constant 0 : index
    %175 = vector.load %arg13[%c0_70, %c0_71] : memref<1x32xf32, #tpu.memory_space<vmem>>, vector<1x32xf32>
    %176 = vector.broadcast %175 : vector<1x32xf32> to vector<8x32xf32>
    %177 = arith.addf %174, %176 : vector<8x32xf32>
    %178 = arith.addf %116, %177 : vector<8x32xf32>
    %c0_72 = arith.constant 0 : index
    %c0_73 = arith.constant 0 : index
    %179 = vector.load %arg8[%c0_72, %c0_73] : memref<1x32xf32, #tpu.memory_space<vmem>>, vector<1x32xf32>
    %c0_74 = arith.constant 0 : index
    %c0_75 = arith.constant 0 : index
    %180 = vector.load %arg9[%c0_74, %c0_75] : memref<1x32xf32, #tpu.memory_space<vmem>>, vector<1x32xf32>
    %cst_76 = arith.constant dense<0.000000e+00> : vector<8xf32>
    %181 = vector.multi_reduction <add>, %178, %cst_76 [1] : vector<8x32xf32> to vector<8xf32>
    %182 = vector.shape_cast %181 : vector<8xf32> to vector<8x1xf32>
    %cst_77 = arith.constant 3.200000e+01 : f32
    %183 = vector.broadcast %cst_77 : f32 to vector<8x1xf32>
    %184 = arith.divf %182, %183 : vector<8x1xf32>
    %185 = vector.broadcast %184 : vector<8x1xf32> to vector<8x32xf32>
    %186 = arith.subf %178, %185 : vector<8x32xf32>
    %187 = arith.mulf %186, %186 : vector<8x32xf32>
    %cst_78 = arith.constant dense<0.000000e+00> : vector<8xf32>
    %188 = vector.multi_reduction <add>, %187, %cst_78 [1] : vector<8x32xf32> to vector<8xf32>
    %189 = vector.shape_cast %188 : vector<8xf32> to vector<8x1xf32>
    %cst_79 = arith.constant 3.200000e+01 : f32
    %190 = vector.broadcast %cst_79 : f32 to vector<8x1xf32>
    %191 = arith.divf %189, %190 : vector<8x1xf32>
    %cst_80 = arith.constant 9.99999996E-13 : f32
    %192 = vector.broadcast %cst_80 : f32 to vector<8x1xf32>
    %193 = arith.addf %191, %192 : vector<8x1xf32>
    %194 = math.rsqrt %193 : vector<8x1xf32>
    %195 = vector.broadcast %194 : vector<8x1xf32> to vector<8x32xf32>
    %196 = arith.mulf %186, %195 : vector<8x32xf32>
    %197 = vector.broadcast %179 : vector<1x32xf32> to vector<8x32xf32>
    %198 = arith.mulf %196, %197 : vector<8x32xf32>
    %199 = vector.broadcast %180 : vector<1x32xf32> to vector<8x32xf32>
    %200 = arith.addf %198, %199 : vector<8x32xf32>
    %c0_81 = arith.constant 0 : index
    %c0_82 = arith.constant 0 : index
    %c0_83 = arith.constant 0 : index
    %201 = vector.load %arg14[%c0_81, %c0_82, %c0_83] : memref<1x8x32xf32, #tpu.memory_space<vmem>>, vector<1x8x32xf32>
    %202 = vector.shape_cast %201 : vector<1x8x32xf32> to vector<8x32xf32>
    %203 = vector.shape_cast %200 : vector<8x32xf32> to vector<1x8x32xf32>
    tpu.vector_store %arg14[%c0_81, %c0_82, %c0_83], %203 {strides = array<i32>} : memref<1x8x32xf32, #tpu.memory_space<vmem>>, vector<1x8x32xf32>,
    return
  }
  func.func @transform_0(%arg0: i32) -> (i32, i32, i32) {
    %c0_i32 = arith.constant 0 : i32
    %c0_i32_0 = arith.constant 0 : i32
    %c0_i32_1 = arith.constant 0 : i32
    return %arg0, %c0_i32, %c0_i32_0 : i32, i32, i32
  }
  func.func @transform_1(%arg0: i32) -> (i32, i32) {
    %c0_i32 = arith.constant 0 : i32
    %c0_i32_0 = arith.constant 0 : i32
    %c0_i32_1 = arith.constant 0 : i32
    return %c0_i32, %c0_i32_0 : i32, i32
  }
  func.func @transform_2(%arg0: i32) -> (i32, i32) {
    %c0_i32 = arith.constant 0 : i32
    %c0_i32_0 = arith.constant 0 : i32
    %c0_i32_1 = arith.constant 0 : i32
    return %c0_i32, %c0_i32_0 : i32, i32
  }
  func.func @transform_3(%arg0: i32) -> (i32, i32) {
    %c0_i32 = arith.constant 0 : i32
    %c0_i32_0 = arith.constant 0 : i32
    %c0_i32_1 = arith.constant 0 : i32
    return %c0_i32, %c0_i32_0 : i32, i32
  }
  func.func @transform_4(%arg0: i32) -> (i32, i32) {
    %c0_i32 = arith.constant 0 : i32
    %c0_i32_0 = arith.constant 0 : i32
    %c0_i32_1 = arith.constant 0 : i32
    return %c0_i32, %c0_i32_0 : i32, i32
  }
  func.func @transform_5(%arg0: i32) -> (i32, i32) {
    %c0_i32 = arith.constant 0 : i32
    %c0_i32_0 = arith.constant 0 : i32
    %c0_i32_1 = arith.constant 0 : i32
    return %c0_i32, %c0_i32_0 : i32, i32
  }
  func.func @transform_6(%arg0: i32) -> (i32, i32) {
    %c0_i32 = arith.constant 0 : i32
    %c0_i32_0 = arith.constant 0 : i32
    %c0_i32_1 = arith.constant 0 : i32
    return %c0_i32, %c0_i32_0 : i32, i32
  }
  func.func @transform_7(%arg0: i32) -> (i32, i32) {
    %c0_i32 = arith.constant 0 : i32
    %c0_i32_0 = arith.constant 0 : i32
    %c0_i32_1 = arith.constant 0 : i32
    return %c0_i32, %c0_i32_0 : i32, i32
  }
  func.func @transform_8(%arg0: i32) -> (i32, i32) {
    %c0_i32 = arith.constant 0 : i32
    %c0_i32_0 = arith.constant 0 : i32
    %c0_i32_1 = arith.constant 0 : i32
    return %c0_i32, %c0_i32_0 : i32, i32
  }
  func.func @transform_9(%arg0: i32) -> (i32, i32) {
    %c0_i32 = arith.constant 0 : i32
    %c0_i32_0 = arith.constant 0 : i32
    %c0_i32_1 = arith.constant 0 : i32
    return %c0_i32, %c0_i32_0 : i32, i32
  }
  func.func @transform_10(%arg0: i32) -> (i32, i32) {
    %c0_i32 = arith.constant 0 : i32
    %c0_i32_0 = arith.constant 0 : i32
    %c0_i32_1 = arith.constant 0 : i32
    return %c0_i32, %c0_i32_0 : i32, i32
  }
  func.func @transform_11(%arg0: i32) -> (i32, i32) {
    %c0_i32 = arith.constant 0 : i32
    %c0_i32_0 = arith.constant 0 : i32
    %c0_i32_1 = arith.constant 0 : i32
    return %c0_i32, %c0_i32_0 : i32, i32
  }
  func.func @transform_12(%arg0: i32) -> (i32, i32) {
    %c0_i32 = arith.constant 0 : i32
    %c0_i32_0 = arith.constant 0 : i32
    %c0_i32_1 = arith.constant 0 : i32
    return %c0_i32, %c0_i32_0 : i32, i32
  }
  func.func @transform_13(%arg0: i32) -> (i32, i32, i32) {
    %c0_i32 = arith.constant 0 : i32
    %c0_i32_0 = arith.constant 0 : i32
    %c0_i32_1 = arith.constant 0 : i32
    return %arg0, %c0_i32, %c0_i32_0 : i32, i32, i32
  }
}

</mosaic_0001>

<llo_original>
// kernel: tpu_custom_call.1
$region0: #{tpu_custom_call.1}
  #allocation0 [shape = 'u32[]', space=smem, size = 0x4, offset = 0x4, fixed_abs, tag = 'smem constant byte address 0x4 - core index']
  #allocation1 [shape = 'u32[144,128]{1,0:T(1,128)}', space=vmem, size = 0x12000, scoped, tag = 'internal scratch']
  #allocation2 [shape = 'bf16[8,32]{1,0:T(8,128)(2,1)}', space=vmem, size = 0x800, scoped, tag = 'scratch operand']
  %s0 = inlined_call_operand.vmem [shape: f32[2,8,32], index: 0, kind: input, shape index: {}]
  %s1 = inlined_call_operand.vmem [shape: bf16[96,32], index: 1, kind: input, shape index: {}]
  %s2 = inlined_call_operand.vmem [shape: f32[1,96], index: 2, kind: input, shape index: {}]
  %s3 = inlined_call_operand.vmem [shape: bf16[32,32], index: 3, kind: input, shape index: {}]
  %s4 = inlined_call_operand.vmem [shape: f32[1,32], index: 4, kind: input, shape index: {}]
  %s5 = inlined_call_operand.vmem [shape: f32[1,32], index: 5, kind: input, shape index: {}]
  %s6 = inlined_call_operand.vmem [shape: f32[1,32], index: 6, kind: input, shape index: {}]
  %s7 = inlined_call_operand.vmem [shape: f32[1,32], index: 7, kind: input, shape index: {}]
  %s8 = inlined_call_operand.vmem [shape: f32[1,32], index: 8, kind: input, shape index: {}]
  %s9 = inlined_call_operand.vmem [shape: bf16[64,32], index: 9, kind: input, shape index: {}]
  %s10 = inlined_call_operand.vmem [shape: f32[1,64], index: 10, kind: input, shape index: {}]
  %s11 = inlined_call_operand.vmem [shape: bf16[32,64], index: 11, kind: input, shape index: {}]
  %s12 = inlined_call_operand.vmem [shape: f32[1,32], index: 12, kind: input, shape index: {}]
  %s13 = inlined_call_operand.hbm [shape: f32[2,8,32], index: 13, kind: output, shape index: {}]
  %s14 = sld [smem:[#allocation0]]
  $region85: #{tpu_custom_call.1} parent=0
    _
  %s16 = ssub.s32 1, %s14
  %s17 = scalar_select 0, %s16, %s14
  $region1: #{tpu_custom_call.1} parent=0
    #allocation3 [shape = 'u8[8192]{0}', space=vmem, size = 0x2000, scoped, tag = 'output window, operand 0']
    #allocation4 [shape = 's32[2]{0}', space=sflag, size = 0x8, scoped, tag = 'scoped memory for tpu_custom_call.1']
    %18 = vsyncpa [#allocation4], 0
    %s19 = scalar_lea.sflag [#allocation4], 1
    %20 = vsyncpa %s19, 0
    loop: start=0, step=1, limit=4
    $region2: #{tpu_custom_call.1} parent=1 // loop_pre_header
      _
    $region3: #{tpu_custom_call.1} parent=1 // loop_header
      %s22 = sphi 0, %s26
      %p23 = scmp.ge.s32.totalorder %s22, 4
      %s32 = sphi 0, %s34
      %s35 = sphi 0, %s32
      %s36 = sphi 0, %s35
      %s52 = sphi 0, %s36
      %s56 = sphi 0, %s56
      %s58 = sphi 0, %s56
      %s59 = sphi 0, %s58
      %s73 = sphi 0, %s59
      %s77 = sphi 0, %s77
      %s79 = sphi 0, %s77
      %s80 = sphi 0, %s79
      %s94 = sphi 0, %s80
      %s98 = sphi 0, %s98
      %s100 = sphi 0, %s98
      %s101 = sphi 0, %s100
      %s115 = sphi 0, %s101
      %s119 = sphi 0, %s119
      %s121 = sphi 0, %s119
      %s122 = sphi 0, %s121
      %s136 = sphi 0, %s122
      %s140 = sphi 0, %s140
      %s142 = sphi 0, %s140
      %s143 = sphi 0, %s142
      %s157 = sphi 0, %s143
      %s161 = sphi 0, %s161
      %s163 = sphi 0, %s161
      %s164 = sphi 0, %s163
      %s178 = sphi 0, %s164
      %s182 = sphi 0, %s182
      %s184 = sphi 0, %s182
      %s185 = sphi 0, %s184
      %s199 = sphi 0, %s185
      %s203 = sphi 0, %s203
      %s205 = sphi 0, %s203
      %s206 = sphi 0, %s205
      %s220 = sphi 0, %s206
      %s224 = sphi 0, %s224
      %s226 = sphi 0, %s224
      %s227 = sphi 0, %s226
      %s241 = sphi 0, %s227
      %s245 = sphi 0, %s245
      %s247 = sphi 0, %s245
      %s248 = sphi 0, %s247
      %s262 = sphi 0, %s248
      %s266 = sphi 0, %s266
      %s268 = sphi 0, %s266
      %s269 = sphi 0, %s268
      %s283 = sphi 0, %s269
      %s287 = sphi 0, %s287
      %s289 = sphi 0, %s287
      %s290 = sphi 0, %s289
      %s304 = sphi 0, %s290
      %s310 = sphi 0, %s312
      %s313 = sphi 0, %s310
      %s314 = sphi 0, %s313
      %s330 = sphi 0, %s314
    $region4: #{tpu_custom_call.1} parent=1 // loop_header_branch
      %25 = sbr.rel (%p23) target = $region8
    $region5: #{tpu_custom_call.1} parent=1 // loop_body
      %s27 = ssub.s32 %s22, 1
      %s28 = ssub.s32 %s22, 2
      %s29 = sadd.s32 %s22, 1
      %s30 = ssub.s32 %s22, %s29
      %p31 = scmp.eq.s32.totalorder %s30, 0
      %s33 = sadd.s32 %s32, 1
      %s34 = scalar_select %p31, %s32, %s33
      %p37 = pneg %p31
      %p38 = scmp.eq.s32.totalorder %s22, 1
      %p39 = por %p37, %p38
      %p40 = scmp.ne.s32.totalorder %s32, %s35
      %p41 = scmp.eq.s32.totalorder %s22, 0
      %p42 = por %p40, %p41
      %p43 = scmp.ne.s32.totalorder %s32, %s35
      %p44 = scmp.eq.s32.totalorder %s27, 1
      %p45 = por %p43, %p44
      %p46 = scmp.ne.s32.totalorder %s35, %s36
      %p47 = scmp.eq.s32.totalorder %s27, 0
      %p48 = por %p46, %p47
      %p49 = scmp.ne.s32.totalorder %s35, %s36
      %p50 = scmp.eq.s32.totalorder %s28, 1
      %p51 = por %p49, %p50
      %p53 = scmp.ne.s32.totalorder %s36, %s52
      %p54 = scmp.eq.s32.totalorder %s28, 0
      %p55 = por %p53, %p54
      %s57 = sadd.s32 %s56, 1
      %p60 = scmp.eq.s32.totalorder %s22, 1
      %p61 = scmp.ne.s32.totalorder %s56, %s58
      %p62 = scmp.eq.s32.totalorder %s22, 0
      %p63 = por %p61, %p62
      %p64 = scmp.ne.s32.totalorder %s56, %s58
      %p65 = scmp.eq.s32.totalorder %s27, 1
      %p66 = por %p64, %p65
      %p67 = scmp.ne.s32.totalorder %s58, %s59
      %p68 = scmp.eq.s32.totalorder %s27, 0
      %p69 = por %p67, %p68
      %p70 = scmp.ne.s32.totalorder %s58, %s59
      %p71 = scmp.eq.s32.totalorder %s28, 1
      %p72 = por %p70, %p71
      %p74 = scmp.ne.s32.totalorder %s59, %s73
      %p75 = scmp.eq.s32.totalorder %s28, 0
      %p76 = por %p74, %p75
      %s78 = sadd.s32 %s77, 1
      %p81 = scmp.eq.s32.totalorder %s22, 1
      %p82 = scmp.ne.s32.totalorder %s77, %s79
      %p83 = scmp.eq.s32.totalorder %s22, 0
      %p84 = por %p82, %p83
      %p85 = scmp.ne.s32.totalorder %s77, %s79
      %p86 = scmp.eq.s32.totalorder %s27, 1
      %p87 = por %p85, %p86
      %p88 = scmp.ne.s32.totalorder %s79, %s80
      %p89 = scmp.eq.s32.totalorder %s27, 0
      %p90 = por %p88, %p89
      %p91 = scmp.ne.s32.totalorder %s79, %s80
      %p92 = scmp.eq.s32.totalorder %s28, 1
      %p93 = por %p91, %p92
      %p95 = scmp.ne.s32.totalorder %s80, %s94
      %p96 = scmp.eq.s32.totalorder %s28, 0
      %p97 = por %p95, %p96
      %s99 = sadd.s32 %s98, 1
      %p102 = scmp.eq.s32.totalorder %s22, 1
      %p103 = scmp.ne.s32.totalorder %s98, %s100
      %p104 = scmp.eq.s32.totalorder %s22, 0
      %p105 = por %p103, %p104
      %p106 = scmp.ne.s32.totalorder %s98, %s100
      %p107 = scmp.eq.s32.totalorder %s27, 1
      %p108 = por %p106, %p107
      %p109 = scmp.ne.s32.totalorder %s100, %s101
      %p110 = scmp.eq.s32.totalorder %s27, 0
      %p111 = por %p109, %p110
      %p112 = scmp.ne.s32.totalorder %s100, %s101
      %p113 = scmp.eq.s32.totalorder %s28, 1
      %p114 = por %p112, %p113
      %p116 = scmp.ne.s32.totalorder %s101, %s115
      %p117 = scmp.eq.s32.totalorder %s28, 0
      %p118 = por %p116, %p117
      %s120 = sadd.s32 %s119, 1
      %p123 = scmp.eq.s32.totalorder %s22, 1
      %p124 = scmp.ne.s32.totalorder %s119, %s121
      %p125 = scmp.eq.s32.totalorder %s22, 0
      %p126 = por %p124, %p125
      %p127 = scmp.ne.s32.totalorder %s119, %s121
      %p128 = scmp.eq.s32.totalorder %s27, 1
      %p129 = por %p127, %p128
      %p130 = scmp.ne.s32.totalorder %s121, %s122
      %p131 = scmp.eq.s32.totalorder %s27, 0
      %p132 = por %p130, %p131
      %p133 = scmp.ne.s32.totalorder %s121, %s122
      %p134 = scmp.eq.s32.totalorder %s28, 1
      %p135 = por %p133, %p134
      %p137 = scmp.ne.s32.totalorder %s122, %s136
      %p138 = scmp.eq.s32.totalorder %s28, 0
      %p139 = por %p137, %p138
      %s141 = sadd.s32 %s140, 1
      %p144 = scmp.eq.s32.totalorder %s22, 1
      %p145 = scmp.ne.s32.totalorder %s140, %s142
      %p146 = scmp.eq.s32.totalorder %s22, 0
      %p147 = por %p145, %p146
      %p148 = scmp.ne.s32.totalorder %s140, %s142
      %p149 = scmp.eq.s32.totalorder %s27, 1
      %p150 = por %p148, %p149
      %p151 = scmp.ne.s32.totalorder %s142, %s143
      %p152 = scmp.eq.s32.totalorder %s27, 0
      %p153 = por %p151, %p152
      %p154 = scmp.ne.s32.totalorder %s142, %s143
      %p155 = scmp.eq.s32.totalorder %s28, 1
      %p156 = por %p154, %p155
      %p158 = scmp.ne.s32.totalorder %s143, %s157
      %p159 = scmp.eq.s32.totalorder %s28, 0
      %p160 = por %p158, %p159
      %s162 = sadd.s32 %s161, 1
      %p165 = scmp.eq.s32.totalorder %s22, 1
      %p166 = scmp.ne.s32.totalorder %s161, %s163
      %p167 = scmp.eq.s32.totalorder %s22, 0
      %p168 = por %p166, %p167
      %p169 = scmp.ne.s32.totalorder %s161, %s163
      %p170 = scmp.eq.s32.totalorder %s27, 1
      %p171 = por %p169, %p170
      %p172 = scmp.ne.s32.totalorder %s163, %s164
      %p173 = scmp.eq.s32.totalorder %s27, 0
      %p174 = por %p172, %p173
      %p175 = scmp.ne.s32.totalorder %s163, %s164
      %p176 = scmp.eq.s32.totalorder %s28, 1
      %p177 = por %p175, %p176
      %p179 = scmp.ne.s32.totalorder %s164, %s178
      %p180 = scmp.eq.s32.totalorder %s28, 0
      %p181 = por %p179, %p180
      %s183 = sadd.s32 %s182, 1
      %p186 = scmp.eq.s32.totalorder %s22, 1
      %p187 = scmp.ne.s32.totalorder %s182, %s184
      %p188 = scmp.eq.s32.totalorder %s22, 0
      %p189 = por %p187, %p188
      %p190 = scmp.ne.s32.totalorder %s182, %s184
      %p191 = scmp.eq.s32.totalorder %s27, 1
      %p192 = por %p190, %p191
      %p193 = scmp.ne.s32.totalorder %s184, %s185
      %p194 = scmp.eq.s32.totalorder %s27, 0
      %p195 = por %p193, %p194
      %p196 = scmp.ne.s32.totalorder %s184, %s185
      %p197 = scmp.eq.s32.totalorder %s28, 1
      %p198 = por %p196, %p197
      %p200 = scmp.ne.s32.totalorder %s185, %s199
      %p201 = scmp.eq.s32.totalorder %s28, 0
      %p202 = por %p200, %p201
      %s204 = sadd.s32 %s203, 1
      %p207 = scmp.eq.s32.totalorder %s22, 1
      %p208 = scmp.ne.s32.totalorder %s203, %s205
      %p209 = scmp.eq.s32.totalorder %s22, 0
      %p210 = por %p208, %p209
      %p211 = scmp.ne.s32.totalorder %s203, %s205
      %p212 = scmp.eq.s32.totalorder %s27, 1
      %p213 = por %p211, %p212
      %p214 = scmp.ne.s32.totalorder %s205, %s206
      %p215 = scmp.eq.s32.totalorder %s27, 0
      %p216 = por %p214, %p215
      %p217 = scmp.ne.s32.totalorder %s205, %s206
      %p218 = scmp.eq.s32.totalorder %s28, 1
      %p219 = por %p217, %p218
      %p221 = scmp.ne.s32.totalorder %s206, %s220
      %p222 = scmp.eq.s32.totalorder %s28, 0
      %p223 = por %p221, %p222
      %s225 = sadd.s32 %s224, 1
      %p228 = scmp.eq.s32.totalorder %s22, 1
      %p229 = scmp.ne.s32.totalorder %s224, %s226
      %p230 = scmp.eq.s32.totalorder %s22, 0
      %p231 = por %p229, %p230
      %p232 = scmp.ne.s32.totalorder %s224, %s226
      %p233 = scmp.eq.s32.totalorder %s27, 1
      %p234 = por %p232, %p233
      %p235 = scmp.ne.s32.totalorder %s226, %s227
      %p236 = scmp.eq.s32.totalorder %s27, 0
      %p237 = por %p235, %p236
      %p238 = scmp.ne.s32.totalorder %s226, %s227
      %p239 = scmp.eq.s32.totalorder %s28, 1
      %p240 = por %p238, %p239
      %p242 = scmp.ne.s32.totalorder %s227, %s241
      %p243 = scmp.eq.s32.totalorder %s28, 0
      %p244 = por %p242, %p243
      %s246 = sadd.s32 %s245, 1
      %p249 = scmp.eq.s32.totalorder %s22, 1
      %p250 = scmp.ne.s32.totalorder %s245, %s247
      %p251 = scmp.eq.s32.totalorder %s22, 0
      %p252 = por %p250, %p251
      %p253 = scmp.ne.s32.totalorder %s245, %s247
      %p254 = scmp.eq.s32.totalorder %s27, 1
      %p255 = por %p253, %p254
      %p256 = scmp.ne.s32.totalorder %s247, %s248
      %p257 = scmp.eq.s32.totalorder %s27, 0
      %p258 = por %p256, %p257
      %p259 = scmp.ne.s32.totalorder %s247, %s248
      %p260 = scmp.eq.s32.totalorder %s28, 1
      %p261 = por %p259, %p260
      %p263 = scmp.ne.s32.totalorder %s248, %s262
      %p264 = scmp.eq.s32.totalorder %s28, 0
      %p265 = por %p263, %p264
      %s267 = sadd.s32 %s266, 1
      %p270 = scmp.eq.s32.totalorder %s22, 1
      %p271 = scmp.ne.s32.totalorder %s266, %s268
      %p272 = scmp.eq.s32.totalorder %s22, 0
      %p273 = por %p271, %p272
      %p274 = scmp.ne.s32.totalorder %s266, %s268
      %p275 = scmp.eq.s32.totalorder %s27, 1
      %p276 = por %p274, %p275
      %p277 = scmp.ne.s32.totalorder %s268, %s269
      %p278 = scmp.eq.s32.totalorder %s27, 0
      %p279 = por %p277, %p278
      %p280 = scmp.ne.s32.totalorder %s268, %s269
      %p281 = scmp.eq.s32.totalorder %s28, 1
      %p282 = por %p280, %p281
      %p284 = scmp.ne.s32.totalorder %s269, %s283
      %p285 = scmp.eq.s32.totalorder %s28, 0
      %p286 = por %p284, %p285
      %s288 = sadd.s32 %s287, 1
      %p291 = scmp.eq.s32.totalorder %s22, 1
      %p292 = scmp.ne.s32.totalorder %s287, %s289
      %p293 = scmp.eq.s32.totalorder %s22, 0
      %p294 = por %p292, %p293
      %p295 = scmp.ne.s32.totalorder %s287, %s289
      %p296 = scmp.eq.s32.totalorder %s27, 1
      %p297 = por %p295, %p296
      %p298 = scmp.ne.s32.totalorder %s289, %s290
      %p299 = scmp.eq.s32.totalorder %s27, 0
      %p300 = por %p298, %p299
      %p301 = scmp.ne.s32.totalorder %s289, %s290
      %p302 = scmp.eq.s32.totalorder %s28, 1
      %p303 = por %p301, %p302
      %p305 = scmp.ne.s32.totalorder %s290, %s304
      %p306 = scmp.eq.s32.totalorder %s28, 0
      %p307 = por %p305, %p306
      %s308 = ssub.s32 %s22, %s29
      %p309 = scmp.eq.s32.totalorder %s308, 0
      %s311 = sadd.s32 %s310, 1
      %s312 = scalar_select %p309, %s310, %s311
      %p315 = pneg %p309
      %p316 = scmp.eq.s32.totalorder %s22, 1
      %p317 = por %p315, %p316
      %p318 = scmp.ne.s32.totalorder %s310, %s313
      %p319 = scmp.eq.s32.totalorder %s22, 0
      %p320 = por %p318, %p319
      %p321 = scmp.ne.s32.totalorder %s310, %s313
      %p322 = scmp.eq.s32.totalorder %s27, 1
      %p323 = por %p321, %p322
      %p324 = scmp.ne.s32.totalorder %s313, %s314
      %p325 = scmp.eq.s32.totalorder %s27, 0
      %p326 = por %p324, %p325
      %p327 = scmp.ne.s32.totalorder %s313, %s314
      %p328 = scmp.eq.s32.totalorder %s28, 1
      %p329 = por %p327, %p328
      %p331 = scmp.ne.s32.totalorder %s314, %s330
      %p332 = scmp.eq.s32.totalorder %s28, 0
      %p333 = por %p331, %p332
      %p334 = scmp.le.s32.totalorder 1, %s22
      %p335 = scmp.lt.s32.totalorder %s22, 3
      %p336 = pnand %p334, %p335
      %p337 = pneg %p336
      // Predicated region
      $region9: #{tpu_custom_call.1} parent=5 // pred_check
        _
      $region10: #{tpu_custom_call.1} parent=5 // pred_check_branch
        %339 = sbr.rel (%p336) target = $region12
      $region11: #{tpu_custom_call.1} parent=5 // pred_region
        %s340 = ssub.s32 %s22, 1
        // Predicated region
        $region13: #{tpu_custom_call.1} parent=11 // pred_check
          %p341 = pneg %p69
        $region14: #{tpu_custom_call.1} parent=11 // pred_check_branch
          %343 = sbr.rel (%p341) target = $region16
        $region15: #{tpu_custom_call.1} parent=11 // pred_region
          _
        $region16: #{tpu_custom_call.1} parent=11 // pred_fallthru
          _
        // Predicated region
        $region17: #{tpu_custom_call.1} parent=11 // pred_check
          %p344 = pneg %p90
        $region18: #{tpu_custom_call.1} parent=11 // pred_check_branch
          %346 = sbr.rel (%p344) target = $region20
        $region19: #{tpu_custom_call.1} parent=11 // pred_region
          _
        $region20: #{tpu_custom_call.1} parent=11 // pred_fallthru
          _
        // Predicated region
        $region21: #{tpu_custom_call.1} parent=11 // pred_check
          %p347 = pneg %p111
        $region22: #{tpu_custom_call.1} parent=11 // pred_check_branch
          %349 = sbr.rel (%p347) target = $region24
        $region23: #{tpu_custom_call.1} parent=11 // pred_region
          _
        $region24: #{tpu_custom_call.1} parent=11 // pred_fallthru
          _
        // Predicated region
        $region25: #{tpu_custom_call.1} parent=11 // pred_check
          %p350 = pneg %p132
        $region26: #{tpu_custom_call.1} parent=11 // pred_check_branch
          %352 = sbr.rel (%p350) target = $region28
        $region27: #{tpu_custom_call.1} parent=11 // pred_region
          _
        $region28: #{tpu_custom_call.1} parent=11 // pred_fallthru
          _
        // Predicated region
        $region29: #{tpu_custom_call.1} parent=11 // pred_check
          %p353 = pneg %p153
        $region30: #{tpu_custom_call.1} parent=11 // pred_check_branch
          %355 = sbr.rel (%p353) target = $region32
        $region31: #{tpu_custom_call.1} parent=11 // pred_region
          _
        $region32: #{tpu_custom_call.1} parent=11 // pred_fallthru
          _
        // Predicated region
        $region33: #{tpu_custom_call.1} parent=11 // pred_check
          %p356 = pneg %p174
        $region34: #{tpu_custom_call.1} parent=11 // pred_check_branch
          %358 = sbr.rel (%p356) target = $region36
        $region35: #{tpu_custom_call.1} parent=11 // pred_region
          _
        $region36: #{tpu_custom_call.1} parent=11 // pred_fallthru
          _
        // Predicated region
        $region37: #{tpu_custom_call.1} parent=11 // pred_check
          %p359 = pneg %p195
        $region38: #{tpu_custom_call.1} parent=11 // pred_check_branch
          %361 = sbr.rel (%p359) target = $region40
        $region39: #{tpu_custom_call.1} parent=11 // pred_region
          _
        $region40: #{tpu_custom_call.1} parent=11 // pred_fallthru
          _
        // Predicated region
        $region41: #{tpu_custom_call.1} parent=11 // pred_check
          %p362 = pneg %p216
        $region42: #{tpu_custom_call.1} parent=11 // pred_check_branch
          %364 = sbr.rel (%p362) target = $region44
        $region43: #{tpu_custom_call.1} parent=11 // pred_region
          _
        $region44: #{tpu_custom_call.1} parent=11 // pred_fallthru
          _
        // Predicated region
        $region45: #{tpu_custom_call.1} parent=11 // pred_check
          %p365 = pneg %p237
        $region46: #{tpu_custom_call.1} parent=11 // pred_check_branch
          %367 = sbr.rel (%p365) target = $region48
        $region47: #{tpu_custom_call.1} parent=11 // pred_region
          _
        $region48: #{tpu_custom_call.1} parent=11 // pred_fallthru
          _
        // Predicated region
        $region49: #{tpu_custom_call.1} parent=11 // pred_check
          %p368 = pneg %p258
        $region50: #{tpu_custom_call.1} parent=11 // pred_check_branch
          %370 = sbr.rel (%p368) target = $region52
        $region51: #{tpu_custom_call.1} parent=11 // pred_region
          _
        $region52: #{tpu_custom_call.1} parent=11 // pred_fallthru
          _
        // Predicated region
        $region53: #{tpu_custom_call.1} parent=11 // pred_check
          %p371 = pneg %p279
        $region54: #{tpu_custom_call.1} parent=11 // pred_check_branch
          %373 = sbr.rel (%p371) target = $region56
        $region55: #{tpu_custom_call.1} parent=11 // pred_region
          _
        $region56: #{tpu_custom_call.1} parent=11 // pred_fallthru
          _
        // Predicated region
        $region57: #{tpu_custom_call.1} parent=11 // pred_check
          %p374 = pneg %p300
        $region58: #{tpu_custom_call.1} parent=11 // pred_check_branch
          %376 = sbr.rel (%p374) target = $region60
        $region59: #{tpu_custom_call.1} parent=11 // pred_region
          _
        $region60: #{tpu_custom_call.1} parent=11 // pred_fallthru
          _
      $region12: #{tpu_custom_call.1} parent=5 // pred_fallthru
        _
      %p377 = scmp.lt.s32.totalorder %s22, 2
      // Predicated region
      $region61: #{tpu_custom_call.1} parent=5 // pred_check
        %p378 = pneg %p377
      $region62: #{tpu_custom_call.1} parent=5 // pred_check_branch
        %380 = sbr.rel (%p378) target = $region64
      $region63: #{tpu_custom_call.1} parent=5 // pred_region
        // Predicated region
        $region65: #{tpu_custom_call.1} parent=63 // pred_check
          %p381 = pneg %p42
        $region66: #{tpu_custom_call.1} parent=63 // pred_check_branch
          %383 = sbr.rel (%p381) target = $region68
        $region67: #{tpu_custom_call.1} parent=63 // pred_region
          %p384 = scmp.lt.s32.totalorder %s22, 1
          %s385 = scalar_select %p384, %s22, 1
          %s386 = smul.addr %s385, 8
          %s387 = scalar_lea.vmem %s0, %s386
        $region68: #{tpu_custom_call.1} parent=63 // pred_fallthru
          _
      $region64: #{tpu_custom_call.1} parent=5 // pred_fallthru
        _
      %p388 = scmp.le.s32.totalorder 1, %s22
      %p389 = scmp.lt.s32.totalorder %s22, 3
      %p390 = pnand %p388, %p389
      %p391 = pneg %p390
      // Predicated region
      $region69: #{tpu_custom_call.1} parent=5 // pred_check
        _
      $region70: #{tpu_custom_call.1} parent=5 // pred_check_branch
        %393 = sbr.rel (%p390) target = $region72
      $region71: #{tpu_custom_call.1} parent=5 // pred_region
        %s394 = ssub.s32 %s22, 1
        %p395 = scmp.lt.s32.totalorder %s27, 1
        %s396 = scalar_select %p395, %s27, 1
        %s397 = smul.addr %s396, 8
        %s398 = scalar_lea.vmem %s0, %s397
        %p399 = pneg %p48
        %p400 = pneg %p45
        %p401 = pneg %p69
        %p402 = pneg %p66
        %p403 = pneg %p90
        %p404 = pneg %p87
        %p405 = pneg %p111
        %p406 = pneg %p108
        %p407 = pneg %p132
        %p408 = pneg %p129
        %p409 = pneg %p153
        %p410 = pneg %p150
        %p411 = pneg %p174
        %p412 = pneg %p171
        %p413 = pneg %p195
        %p414 = pneg %p192
        %p415 = pneg %p216
        %p416 = pneg %p213
        %p417 = pneg %p237
        %p418 = pneg %p234
        %p419 = pneg %p258
        %p420 = pneg %p255
        %p421 = pneg %p279
        %p422 = pneg %p276
        %p423 = pneg %p300
        %p424 = pneg %p297
        %p425 = pneg %p326
        %p426 = pneg %p323
        %s427 = sand.u32 %s313, 1
        %s428 = scalar_lea.sflag [#allocation4], %s427
        %s429 = sand.u32 %s313, 1
        %s430 = smul.addr %s429, 8
        %s431 = scalar_lea.vmem [#allocation3], %s430
        %p432 = scmp.lt.s32.totalorder %s27, 1
        %s433 = scalar_select %p432, %s27, 1
        %s434 = smul.addr %s433, 8
        %s435 = scalar_lea.vmem %s0, %s434
        %v437 = vld [vmem:[%s435] sm:$0xff]
        %v438 = vpack.c.bf16 %v437, %v437
        %v439 = vld [vmem:[%s1] sm:$0xf]
        %v440 = vld [vmem:[%s1 + $0x4] sm:$0xf]
        %v441 = vld [vmem:[%s1 + $0x8] sm:$0xf]
        %v442 = vld [vmem:[%s1 + $0xc] sm:$0xf]
        %v443 = vld [vmem:[%s1 + $0x10] sm:$0xf]
        %v444 = vld [vmem:[%s1 + $0x14] sm:$0xf]
        %v445 = vld [vmem:[%s1 + $0x18] sm:$0xf]
        %v446 = vld [vmem:[%s1 + $0x1c] sm:$0xf]
        %v447 = vld [vmem:[%s1 + $0x20] sm:$0xf]
        %v448 = vld [vmem:[%s1 + $0x24] sm:$0xf]
        %v449 = vld [vmem:[%s1 + $0x28] sm:$0xf]
        %v450 = vld [vmem:[%s1 + $0x2c] sm:$0xf]
        %v451 = vld [vmem:[%s2] sm:$0x1]
        %v453 = vlaneseq
        %v454 = vshrl.u32 %v453, 7
        %v455 = vsub.s32 0, %v454
        %v456 = vrot.slane %v451, %v455
        %v470 = vunpack.c.l.b16 %v439
        %v471 = vunpack.c.l.b16 %v440
        %v472 = vunpack.c.l.b16 %v441
        %v473 = vunpack.c.l.b16 %v442
        %v474 = vunpack.c.l.b16 %v443
        %v475 = vunpack.c.l.b16 %v444
        %v476 = vunpack.c.l.b16 %v445
        %v477 = vunpack.c.l.b16 %v446
        %v478 = vunpack.c.l.b16 %v447
        %v479 = vunpack.c.l.b16 %v448
        %v480 = vunpack.c.l.b16 %v449
        %v481 = vunpack.c.l.b16 %v450
        %v482 = vpack.c.b16 %v471, %v470
        %v483 = vpack.c.b16 %v473, %v472
        %v484 = vpack.c.b16 %v475, %v474
        %v485 = vpack.c.b16 %v477, %v476
        %v486 = vpack.c.b16 %v479, %v478
        %v487 = vpack.c.b16 %v481, %v480
        %vm488 = vcmask 261120
        %v490 = vsel %vm488, %v438, 0
        %v493 = vsel %vm488, %v482, 0
        %v496 = vsel %vm488, %v483, 0
        %v499 = vsel %vm488, %v484, 0
        %v502 = vsel %vm488, %v485, 0
        %v505 = vsel %vm488, %v486, 0
        %v508 = vsel %vm488, %v487, 0
        %510 = vmatprep.subr.bf16.mxu0 0
        %511 = vmatpush1.bf16.xpose.msra.mxu0 %v493
        %512 = vmatprep.subr.bf16.mxu0 0
        %513 = vmatpush1.bf16.xpose.msra.mxu0 %v496
        %514 = vmatprep.subr.bf16.mxu0 0
        %515 = vmatpush1.bf16.xpose.msra.mxu0 %v499
        %516 = vmatprep.subr.bf16.mxu0 0
        %517 = vmatpush1.bf16.xpose.msra.mxu0 %v502
        %518 = vmatprep.subr.bf16.mxu0 0
        %519 = vmatpush1.bf16.xpose.msra.mxu0 %v505
        %520 = vmatprep.subr.bf16.mxu0 0
        %521 = vmatpush1.bf16.xpose.msra.mxu0 %v508
        %522 = vmatprep.subr.bf16.mxu0 0
        %523 = vmatpush1.bf16.xpose.msra.mxu0 0
        %524 = vmatprep.subr.bf16.mxu0 0
        %525 = vmatpush1.bf16.xpose.msra.mxu0 0
        %526 = vmatprep.subr.bf16.mxu0 0
        %527 = vmatpush1.bf16.xpose.msra.mxu0 0
        %528 = vmatprep.subr.bf16.mxu0 0
        %529 = vmatpush1.bf16.xpose.msra.mxu0 0
        %530 = vmatprep.subr.bf16.mxu0 0
        %531 = vmatpush1.bf16.xpose.msra.mxu0 0
        %532 = vmatprep.subr.bf16.mxu0 0
        %533 = vmatpush1.bf16.xpose.msra.mxu0 0
        %534 = vmatprep.subr.bf16.mxu0 0
        %535 = vmatpush1.bf16.xpose.msra.mxu0 0
        %536 = vmatprep.subr.bf16.mxu0 0
        %537 = vmatpush1.bf16.xpose.msra.mxu0 0
        %538 = vmatprep.subr.bf16.mxu0 0
        %539 = vmatpush1.bf16.xpose.msra.mxu0 0
        %540 = vmatprep.subr.bf16.mxu0 0
        %541 = vmatpush1.bf16.xpose.msra.mxu0 0
        %542 = vmatprep.mubr.bf16.mxu0 0
        %543 = vmatmul.mubr.bf16.gmra.mrb[0].mxu0 %v490
        %v544 = vpop.f32.mrb[0].mxu0
        %v545 = vadd.f32 %v456, %v544
        %v546 = vpop.f32.mrb[0].mxu0
        %v547 = vpop.f32.mrb[0].mxu0
        %v548 = vpop.f32.mrb[0].mxu0
        %549 = vdwg.mxu0
        %v550 = vmul.f32 %v545, 0.35355338
        %v551 = vpack.c.bf16 %v550, %v550
        %v552 = vpack.c.bf16 %v545, %v545
        %554 = vrot.lane.b32.xlu0 %v552, 96
        %v555 = vpop.permute.xlu0 %554
        %vm556 = vcmask 64512
        %v558 = vsel %vm556, %v551, 0
        %v561 = vsel %vm556, %v555, 0
        %563 = vmatprep.subr.bf16.mxu0 0
        %564 = vmatpush1.bf16.xpose.msra.mxu0 %v561
        %565 = vmatprep.subr.bf16.mxu0 0
        %566 = vmatpush1.bf16.xpose.msra.mxu0 0
        %567 = vmatprep.subr.bf16.mxu0 0
        %568 = vmatpush1.bf16.xpose.msra.mxu0 0
        %569 = vmatprep.subr.bf16.mxu0 0
        %570 = vmatpush1.bf16.xpose.msra.mxu0 0
        %571 = vmatprep.subr.bf16.mxu0 0
        %572 = vmatpush1.bf16.xpose.msra.mxu0 0
        %573 = vmatprep.subr.bf16.mxu0 0
        %574 = vmatpush1.bf16.xpose.msra.mxu0 0
        %575 = vmatprep.subr.bf16.mxu0 0
        %576 = vmatpush1.bf16.xpose.msra.mxu0 0
        %577 = vmatprep.subr.bf16.mxu0 0
        %578 = vmatpush1.bf16.xpose.msra.mxu0 0
        %579 = vmatprep.subr.bf16.mxu0 0
        %580 = vmatpush1.bf16.xpose.msra.mxu0 0
        %581 = vmatprep.subr.bf16.mxu0 0
        %582 = vmatpush1.bf16.xpose.msra.mxu0 0
        %583 = vmatprep.subr.bf16.mxu0 0
        %584 = vmatpush1.bf16.xpose.msra.mxu0 0
        %585 = vmatprep.subr.bf16.mxu0 0
        %586 = vmatpush1.bf16.xpose.msra.mxu0 0
        %587 = vmatprep.subr.bf16.mxu0 0
        %588 = vmatpush1.bf16.xpose.msra.mxu0 0
        %589 = vmatprep.subr.bf16.mxu0 0
        %590 = vmatpush1.bf16.xpose.msra.mxu0 0
        %591 = vmatprep.subr.bf16.mxu0 0
        %592 = vmatpush1.bf16.xpose.msra.mxu0 0
        %593 = vmatprep.subr.bf16.mxu0 0
        %594 = vmatpush1.bf16.xpose.msra.mxu0 0
        %595 = vmatprep.mubr.bf16.mxu0 0
        %596 = vmatmul.mubr.bf16.gmra.mrb[0].mxu0 %v558
        %v597 = vpop.f32.mrb[0].mxu0
        %v598 = vadd.f32 0.0, %v597
        %v599 = vpop.f32.mrb[0].mxu0
        %v600 = vpop.f32.mrb[0].mxu0
        %v601 = vpop.f32.mrb[0].mxu0
        %602 = vdwg.mxu0
        %v603 = vsel %vm556, %v598, -inf
        %604 = vmax.xlane.f32.xlu0 %v603
        %v605 = vpop.xlane.xlu0 %604
        %v606 = vsub.f32 %v598, %v605
        %v607 = vmul.f32 %v606, 1.442695
        %v608 = vpow.pop %v607
        %v609 = vsel %vm556, %v608, 0.0
        %610 = vadd.xlane.f32.xlu0 %v609
        %v611 = vpop.xlane.xlu0 %610
        %v612 = vrcp.pop %v611
        %v613 = vmul.f32 %v608, %v612
        %v614 = vpack.c.bf16 %v613, %v613
        %615 = vrot.lane.b32.xlu0 %v552, 64
        %v616 = vpop.permute.xlu0 %615
        %v618 = vsel %vm556, %v614, 0
        %vm620 = vcmask 1043456
        %v622 = vsel %vm620, %v616, 0
        %624 = vmatprep.subr.bf16.mxu0 0
        %625 = vmatpush1.bf16.msra.mxu0 %v622
        %626 = vmatprep.subr.bf16.mxu0 0
        %627 = vmatpush1.bf16.msra.mxu0 0
        %628 = vmatprep.subr.bf16.mxu0 0
        %629 = vmatpush1.bf16.msra.mxu0 0
        %630 = vmatprep.subr.bf16.mxu0 0
        %631 = vmatpush1.bf16.msra.mxu0 0
        %632 = vmatprep.subr.bf16.mxu0 0
        %633 = vmatpush1.bf16.msra.mxu0 0
        %634 = vmatprep.subr.bf16.mxu0 0
        %635 = vmatpush1.bf16.msra.mxu0 0
        %636 = vmatprep.subr.bf16.mxu0 0
        %637 = vmatpush1.bf16.msra.mxu0 0
        %638 = vmatprep.subr.bf16.mxu0 0
        %639 = vmatpush1.bf16.msra.mxu0 0
        %640 = vmatprep.subr.bf16.mxu0 0
        %641 = vmatpush1.bf16.msra.mxu0 0
        %642 = vmatprep.subr.bf16.mxu0 0
        %643 = vmatpush1.bf16.msra.mxu0 0
        %644 = vmatprep.subr.bf16.mxu0 0
        %645 = vmatpush1.bf16.msra.mxu0 0
        %646 = vmatprep.subr.bf16.mxu0 0
        %647 = vmatpush1.bf16.msra.mxu0 0
        %648 = vmatprep.subr.bf16.mxu0 0
        %649 = vmatpush1.bf16.msra.mxu0 0
        %650 = vmatprep.subr.bf16.mxu0 0
        %651 = vmatpush1.bf16.msra.mxu0 0
        %652 = vmatprep.subr.bf16.mxu0 0
        %653 = vmatpush1.bf16.msra.mxu0 0
        %654 = vmatprep.subr.bf16.mxu0 0
        %655 = vmatpush1.bf16.msra.mxu0 0
        %656 = vmatprep.mubr.bf16.mxu0 0
        %657 = vmatmul.mubr.bf16.gmra.mrb[0].mxu0 %v618
        %v658 = vpop.f32.mrb[0].mxu0
        %v659 = vadd.f32 0.0, %v658
        %v660 = vpop.f32.mrb[0].mxu0
        %v661 = vpop.f32.mrb[0].mxu0
        %v662 = vpop.f32.mrb[0].mxu0
        %663 = vdwg.mxu0
        %v664 = vpack.c.bf16 %v659, %v659
        %vm665 = vcmask 60416
        %666 = vst.msk [vmem:[#allocation2] sm:$0xf] %vm665, %v664
        %668 = vrot.lane.b32.xlu0 %v551, 120
        %v669 = vpop.permute.xlu0 %668
        %670 = vrot.lane.b32.xlu0 %v552, 88
        %v671 = vpop.permute.xlu0 %670
        %v673 = vsel %vm556, %v669, 0
        %v676 = vsel %vm556, %v671, 0
        %678 = vmatprep.subr.bf16.mxu0 0
        %679 = vmatpush1.bf16.xpose.msra.mxu0 %v676
        %680 = vmatprep.subr.bf16.mxu0 0
        %681 = vmatpush1.bf16.xpose.msra.mxu0 0
        %682 = vmatprep.subr.bf16.mxu0 0
        %683 = vmatpush1.bf16.xpose.msra.mxu0 0
        %684 = vmatprep.subr.bf16.mxu0 0
        %685 = vmatpush1.bf16.xpose.msra.mxu0 0
        %686 = vmatprep.subr.bf16.mxu0 0
        %687 = vmatpush1.bf16.xpose.msra.mxu0 0
        %688 = vmatprep.subr.bf16.mxu0 0
        %689 = vmatpush1.bf16.xpose.msra.mxu0 0
        %690 = vmatprep.subr.bf16.mxu0 0
        %691 = vmatpush1.bf16.xpose.msra.mxu0 0
        %692 = vmatprep.subr.bf16.mxu0 0
        %693 = vmatpush1.bf16.xpose.msra.mxu0 0
        %694 = vmatprep.subr.bf16.mxu0 0
        %695 = vmatpush1.bf16.xpose.msra.mxu0 0
        %696 = vmatprep.subr.bf16.mxu0 0
        %697 = vmatpush1.bf16.xpose.msra.mxu0 0
        %698 = vmatprep.subr.bf16.mxu0 0
        %699 = vmatpush1.bf16.xpose.msra.mxu0 0
        %700 = vmatprep.subr.bf16.mxu0 0
        %701 = vmatpush1.bf16.xpose.msra.mxu0 0
        %702 = vmatprep.subr.bf16.mxu0 0
        %703 = vmatpush1.bf16.xpose.msra.mxu0 0
        %704 = vmatprep.subr.bf16.mxu0 0
        %705 = vmatpush1.bf16.xpose.msra.mxu0 0
        %706 = vmatprep.subr.bf16.mxu0 0
        %707 = vmatpush1.bf16.xpose.msra.mxu0 0
        %708 = vmatprep.subr.bf16.mxu0 0
        %709 = vmatpush1.bf16.xpose.msra.mxu0 0
        %710 = vmatprep.mubr.bf16.mxu0 0
        %711 = vmatmul.mubr.bf16.gmra.mrb[0].mxu0 %v673
        %v712 = vpop.f32.mrb[0].mxu0
        %v713 = vadd.f32 0.0, %v712
        %v714 = vpop.f32.mrb[0].mxu0
        %v715 = vpop.f32.mrb[0].mxu0
        %v716 = vpop.f32.mrb[0].mxu0
        %717 = vdwg.mxu0
        %v718 = vsel %vm556, %v713, -inf
        %719 = vmax.xlane.f32.xlu0 %v718
        %v720 = vpop.xlane.xlu0 %719
        %v721 = vsub.f32 %v713, %v720
        %v722 = vmul.f32 %v721, 1.442695
        %v723 = vpow.pop %v722
        %v724 = vsel %vm556, %v723, 0.0
        %725 = vadd.xlane.f32.xlu0 %v724
        %v726 = vpop.xlane.xlu0 %725
        %v727 = vrcp.pop %v726
        %v728 = vmul.f32 %v723, %v727
        %v729 = vpack.c.bf16 %v728, %v728
        %730 = vrot.lane.b32.xlu0 %v552, 56
        %v731 = vpop.permute.xlu0 %730
        %v733 = vsel %vm556, %v729, 0
        %v736 = vsel %vm620, %v731, 0
        %738 = vmatprep.subr.bf16.mxu0 0
        %739 = vmatpush1.bf16.msra.mxu0 %v736
        %740 = vmatprep.subr.bf16.mxu0 0
        %741 = vmatpush1.bf16.msra.mxu0 0
        %742 = vmatprep.subr.bf16.mxu0 0
        %743 = vmatpush1.bf16.msra.mxu0 0
        %744 = vmatprep.subr.bf16.mxu0 0
        %745 = vmatpush1.bf16.msra.mxu0 0
        %746 = vmatprep.subr.bf16.mxu0 0
        %747 = vmatpush1.bf16.msra.mxu0 0
        %748 = vmatprep.subr.bf16.mxu0 0
        %749 = vmatpush1.bf16.msra.mxu0 0
        %750 = vmatprep.subr.bf16.mxu0 0
        %751 = vmatpush1.bf16.msra.mxu0 0
        %752 = vmatprep.subr.bf16.mxu0 0
        %753 = vmatpush1.bf16.msra.mxu0 0
        %754 = vmatprep.subr.bf16.mxu0 0
        %755 = vmatpush1.bf16.msra.mxu0 0
        %756 = vmatprep.subr.bf16.mxu0 0
        %757 = vmatpush1.bf16.msra.mxu0 0
        %758 = vmatprep.subr.bf16.mxu0 0
        %759 = vmatpush1.bf16.msra.mxu0 0
        %760 = vmatprep.subr.bf16.mxu0 0
        %761 = vmatpush1.bf16.msra.mxu0 0
        %762 = vmatprep.subr.bf16.mxu0 0
        %763 = vmatpush1.bf16.msra.mxu0 0
        %764 = vmatprep.subr.bf16.mxu0 0
        %765 = vmatpush1.bf16.msra.mxu0 0
        %766 = vmatprep.subr.bf16.mxu0 0
        %767 = vmatpush1.bf16.msra.mxu0 0
        %768 = vmatprep.subr.bf16.mxu0 0
        %769 = vmatpush1.bf16.msra.mxu0 0
        %770 = vmatprep.mubr.bf16.mxu0 0
        %771 = vmatmul.mubr.bf16.gmra.mrb[0].mxu0 %v733
        %v772 = vpop.f32.mrb[0].mxu0
        %v773 = vadd.f32 0.0, %v772
        %v774 = vpop.f32.mrb[0].mxu0
        %v775 = vpop.f32.mrb[0].mxu0
        %v776 = vpop.f32.mrb[0].mxu0
        %777 = vdwg.mxu0
        %v778 = vpack.c.bf16 %v773, %v773
        %v780 = vunpack.c.l.b16 %v778
        %v781 = vpack.c.b16 %v780, %v780
        %782 = vrot.lane.b32.xlu0 %v781, 8
        %v783 = vpop.permute.xlu0 %782
        %vm785 = vcmask 126016
        %786 = vst.msk [vmem:[#allocation2] sm:$0xf] %vm785, %v783
        %787 = vrot.lane.b32.xlu0 %v551, 112
        %v788 = vpop.permute.xlu0 %787
        %789 = vrot.lane.b32.xlu0 %v552, 80
        %v790 = vpop.permute.xlu0 %789
        %v792 = vsel %vm556, %v788, 0
        %v795 = vsel %vm556, %v790, 0
        %797 = vmatprep.subr.bf16.mxu0 0
        %798 = vmatpush1.bf16.xpose.msra.mxu0 %v795
        %799 = vmatprep.subr.bf16.mxu0 0
        %800 = vmatpush1.bf16.xpose.msra.mxu0 0
        %801 = vmatprep.subr.bf16.mxu0 0
        %802 = vmatpush1.bf16.xpose.msra.mxu0 0
        %803 = vmatprep.subr.bf16.mxu0 0
        %804 = vmatpush1.bf16.xpose.msra.mxu0 0
        %805 = vmatprep.subr.bf16.mxu0 0
        %806 = vmatpush1.bf16.xpose.msra.mxu0 0
        %807 = vmatprep.subr.bf16.mxu0 0
        %808 = vmatpush1.bf16.xpose.msra.mxu0 0
        %809 = vmatprep.subr.bf16.mxu0 0
        %810 = vmatpush1.bf16.xpose.msra.mxu0 0
        %811 = vmatprep.subr.bf16.mxu0 0
        %812 = vmatpush1.bf16.xpose.msra.mxu0 0
        %813 = vmatprep.subr.bf16.mxu0 0
        %814 = vmatpush1.bf16.xpose.msra.mxu0 0
        %815 = vmatprep.subr.bf16.mxu0 0
        %816 = vmatpush1.bf16.xpose.msra.mxu0 0
        %817 = vmatprep.subr.bf16.mxu0 0
        %818 = vmatpush1.bf16.xpose.msra.mxu0 0
        %819 = vmatprep.subr.bf16.mxu0 0
        %820 = vmatpush1.bf16.xpose.msra.mxu0 0
        %821 = vmatprep.subr.bf16.mxu0 0
        %822 = vmatpush1.bf16.xpose.msra.mxu0 0
        %823 = vmatprep.subr.bf16.mxu0 0
        %824 = vmatpush1.bf16.xpose.msra.mxu0 0
        %825 = vmatprep.subr.bf16.mxu0 0
        %826 = vmatpush1.bf16.xpose.msra.mxu0 0
        %827 = vmatprep.subr.bf16.mxu0 0
        %828 = vmatpush1.bf16.xpose.msra.mxu0 0
        %829 = vmatprep.mubr.bf16.mxu0 0
        %830 = vmatmul.mubr.bf16.gmra.mrb[0].mxu0 %v792
        %v831 = vpop.f32.mrb[0].mxu0
        %v832 = vadd.f32 0.0, %v831
        %v833 = vpop.f32.mrb[0].mxu0
        %v834 = vpop.f32.mrb[0].mxu0
        %v835 = vpop.f32.mrb[0].mxu0
        %836 = vdwg.mxu0
        %v837 = vsel %vm556, %v832, -inf
        %838 = vmax.xlane.f32.xlu0 %v837
        %v839 = vpop.xlane.xlu0 %838
        %v840 = vsub.f32 %v832, %v839
        %v841 = vmul.f32 %v840, 1.442695
        %v842 = vpow.pop %v841
        %v843 = vsel %vm556, %v842, 0.0
        %844 = vadd.xlane.f32.xlu0 %v843
        %v845 = vpop.xlane.xlu0 %844
        %v846 = vrcp.pop %v845
        %v847 = vmul.f32 %v842, %v846
        %v848 = vpack.c.bf16 %v847, %v847
        %849 = vrot.lane.b32.xlu0 %v552, 48
        %v850 = vpop.permute.xlu0 %849
        %v852 = vsel %vm556, %v848, 0
        %v855 = vsel %vm620, %v850, 0
        %857 = vmatprep.subr.bf16.mxu0 0
        %858 = vmatpush1.bf16.msra.mxu0 %v855
        %859 = vmatprep.subr.bf16.mxu0 0
        %860 = vmatpush1.bf16.msra.mxu0 0
        %861 = vmatprep.subr.bf16.mxu0 0
        %862 = vmatpush1.bf16.msra.mxu0 0
        %863 = vmatprep.subr.bf16.mxu0 0
        %864 = vmatpush1.bf16.msra.mxu0 0
        %865 = vmatprep.subr.bf16.mxu0 0
        %866 = vmatpush1.bf16.msra.mxu0 0
        %867 = vmatprep.subr.bf16.mxu0 0
        %868 = vmatpush1.bf16.msra.mxu0 0
        %869 = vmatprep.subr.bf16.mxu0 0
        %870 = vmatpush1.bf16.msra.mxu0 0
        %871 = vmatprep.subr.bf16.mxu0 0
        %872 = vmatpush1.bf16.msra.mxu0 0
        %873 = vmatprep.subr.bf16.mxu0 0
        %874 = vmatpush1.bf16.msra.mxu0 0
        %875 = vmatprep.subr.bf16.mxu0 0
        %876 = vmatpush1.bf16.msra.mxu0 0
        %877 = vmatprep.subr.bf16.mxu0 0
        %878 = vmatpush1.bf16.msra.mxu0 0
        %879 = vmatprep.subr.bf16.mxu0 0
        %880 = vmatpush1.bf16.msra.mxu0 0
        %881 = vmatprep.subr.bf16.mxu0 0
        %882 = vmatpush1.bf16.msra.mxu0 0
        %883 = vmatprep.subr.bf16.mxu0 0
        %884 = vmatpush1.bf16.msra.mxu0 0
        %885 = vmatprep.subr.bf16.mxu0 0
        %886 = vmatpush1.bf16.msra.mxu0 0
        %887 = vmatprep.subr.bf16.mxu0 0
        %888 = vmatpush1.bf16.msra.mxu0 0
        %889 = vmatprep.mubr.bf16.mxu0 0
        %890 = vmatmul.mubr.bf16.gmra.mrb[0].mxu0 %v852
        %v891 = vpop.f32.mrb[0].mxu0
        %v892 = vadd.f32 0.0, %v891
        %v893 = vpop.f32.mrb[0].mxu0
        %v894 = vpop.f32.mrb[0].mxu0
        %v895 = vpop.f32.mrb[0].mxu0
        %896 = vdwg.mxu0
        %v897 = vpack.c.bf16 %v892, %v892
        %v899 = vunpack.c.l.b16 %v897
        %v900 = vpack.c.b16 %v899, %v899
        %901 = vrot.lane.b32.xlu0 %v900, 16
        %v902 = vpop.permute.xlu0 %901
        %vm904 = vcmask 191616
        %905 = vst.msk [vmem:[#allocation2] sm:$0xf] %vm904, %v902
        %906 = vrot.lane.b32.xlu0 %v551, 104
        %v907 = vpop.permute.xlu0 %906
        %908 = vrot.lane.b32.xlu0 %v552, 72
        %v909 = vpop.permute.xlu0 %908
        %v911 = vsel %vm556, %v907, 0
        %v914 = vsel %vm556, %v909, 0
        %916 = vmatprep.subr.bf16.mxu0 0
        %917 = vmatpush1.bf16.xpose.msra.mxu0 %v914
        %918 = vmatprep.subr.bf16.mxu0 0
        %919 = vmatpush1.bf16.xpose.msra.mxu0 0
        %920 = vmatprep.subr.bf16.mxu0 0
        %921 = vmatpush1.bf16.xpose.msra.mxu0 0
        %922 = vmatprep.subr.bf16.mxu0 0
        %923 = vmatpush1.bf16.xpose.msra.mxu0 0
        %924 = vmatprep.subr.bf16.mxu0 0
        %925 = vmatpush1.bf16.xpose.msra.mxu0 0
        %926 = vmatprep.subr.bf16.mxu0 0
        %927 = vmatpush1.bf16.xpose.msra.mxu0 0
        %928 = vmatprep.subr.bf16.mxu0 0
        %929 = vmatpush1.bf16.xpose.msra.mxu0 0
        %930 = vmatprep.subr.bf16.mxu0 0
        %931 = vmatpush1.bf16.xpose.msra.mxu0 0
        %932 = vmatprep.subr.bf16.mxu0 0
        %933 = vmatpush1.bf16.xpose.msra.mxu0 0
        %934 = vmatprep.subr.bf16.mxu0 0
        %935 = vmatpush1.bf16.xpose.msra.mxu0 0
        %936 = vmatprep.subr.bf16.mxu0 0
        %937 = vmatpush1.bf16.xpose.msra.mxu0 0
        %938 = vmatprep.subr.bf16.mxu0 0
        %939 = vmatpush1.bf16.xpose.msra.mxu0 0
        %940 = vmatprep.subr.bf16.mxu0 0
        %941 = vmatpush1.bf16.xpose.msra.mxu0 0
        %942 = vmatprep.subr.bf16.mxu0 0
        %943 = vmatpush1.bf16.xpose.msra.mxu0 0
        %944 = vmatprep.subr.bf16.mxu0 0
        %945 = vmatpush1.bf16.xpose.msra.mxu0 0
        %946 = vmatprep.subr.bf16.mxu0 0
        %947 = vmatpush1.bf16.xpose.msra.mxu0 0
        %948 = vmatprep.mubr.bf16.mxu0 0
        %949 = vmatmul.mubr.bf16.gmra.mrb[0].mxu0 %v911
        %v950 = vpop.f32.mrb[0].mxu0
        %v951 = vadd.f32 0.0, %v950
        %v952 = vpop.f32.mrb[0].mxu0
        %v953 = vpop.f32.mrb[0].mxu0
        %v954 = vpop.f32.mrb[0].mxu0
        %955 = vdwg.mxu0
        %v956 = vsel %vm556, %v951, -inf
        %957 = vmax.xlane.f32.xlu0 %v956
        %v958 = vpop.xlane.xlu0 %957
        %v959 = vsub.f32 %v951, %v958
        %v960 = vmul.f32 %v959, 1.442695
        %v961 = vpow.pop %v960
        %v962 = vsel %vm556, %v961, 0.0
        %963 = vadd.xlane.f32.xlu0 %v962
        %v964 = vpop.xlane.xlu0 %963
        %v965 = vrcp.pop %v964
        %v966 = vmul.f32 %v961, %v965
        %v967 = vpack.c.bf16 %v966, %v966
        %968 = vrot.lane.b32.xlu0 %v552, 40
        %v969 = vpop.permute.xlu0 %968
        %v971 = vsel %vm556, %v967, 0
        %v974 = vsel %vm620, %v969, 0
        %976 = vmatprep.subr.bf16.mxu0 0
        %977 = vmatpush1.bf16.msra.mxu0 %v974
        %978 = vmatprep.subr.bf16.mxu0 0
        %979 = vmatpush1.bf16.msra.mxu0 0
        %980 = vmatprep.subr.bf16.mxu0 0
        %981 = vmatpush1.bf16.msra.mxu0 0
        %982 = vmatprep.subr.bf16.mxu0 0
        %983 = vmatpush1.bf16.msra.mxu0 0
        %984 = vmatprep.subr.bf16.mxu0 0
        %985 = vmatpush1.bf16.msra.mxu0 0
        %986 = vmatprep.subr.bf16.mxu0 0
        %987 = vmatpush1.bf16.msra.mxu0 0
        %988 = vmatprep.subr.bf16.mxu0 0
        %989 = vmatpush1.bf16.msra.mxu0 0
        %990 = vmatprep.subr.bf16.mxu0 0
        %991 = vmatpush1.bf16.msra.mxu0 0
        %992 = vmatprep.subr.bf16.mxu0 0
        %993 = vmatpush1.bf16.msra.mxu0 0
        %994 = vmatprep.subr.bf16.mxu0 0
        %995 = vmatpush1.bf16.msra.mxu0 0
        %996 = vmatprep.subr.bf16.mxu0 0
        %997 = vmatpush1.bf16.msra.mxu0 0
        %998 = vmatprep.subr.bf16.mxu0 0
        %999 = vmatpush1.bf16.msra.mxu0 0
        %1000 = vmatprep.subr.bf16.mxu0 0
        %1001 = vmatpush1.bf16.msra.mxu0 0
        %1002 = vmatprep.subr.bf16.mxu0 0
        %1003 = vmatpush1.bf16.msra.mxu0 0
        %1004 = vmatprep.subr.bf16.mxu0 0
        %1005 = vmatpush1.bf16.msra.mxu0 0
        %1006 = vmatprep.subr.bf16.mxu0 0
        %1007 = vmatpush1.bf16.msra.mxu0 0
        %1008 = vmatprep.mubr.bf16.mxu0 0
        %1009 = vmatmul.mubr.bf16.gmra.mrb[0].mxu0 %v971
        %v1010 = vpop.f32.mrb[0].mxu0
        %v1011 = vadd.f32 0.0, %v1010
        %v1012 = vpop.f32.mrb[0].mxu0
        %v1013 = vpop.f32.mrb[0].mxu0
        %v1014 = vpop.f32.mrb[0].mxu0
        %1015 = vdwg.mxu0
        %v1016 = vpack.c.bf16 %v1011, %v1011
        %v1018 = vunpack.c.l.b16 %v1016
        %v1019 = vpack.c.b16 %v1018, %v1018
        %1020 = vrot.lane.b32.xlu0 %v1019, 24
        %v1021 = vpop.permute.xlu0 %1020
        %vm1023 = vcmask 257216
        %1024 = vst.msk [vmem:[#allocation2] sm:$0xf] %vm1023, %v1021
        %v1025 = vld [vmem:[#allocation2] sm:$0xf]
        %v1026 = vld [vmem:[%s3] sm:$0xf]
        %v1027 = vld [vmem:[%s3 + $0x4] sm:$0xf]
        %v1028 = vld [vmem:[%s3 + $0x8] sm:$0xf]
        %v1029 = vld [vmem:[%s3 + $0xc] sm:$0xf]
        %v1030 = vld [vmem:[%s4] sm:$0x1]
        %v1032 = vlaneseq
        %v1033 = vshrl.u32 %v1032, 7
        %v1034 = vsub.s32 0, %v1033
        %v1035 = vrot.slane %v1030, %v1034
        %v1041 = vunpack.c.l.b16 %v1026
        %v1042 = vunpack.c.l.b16 %v1027
        %v1043 = vunpack.c.l.b16 %v1028
        %v1044 = vunpack.c.l.b16 %v1029
        %v1045 = vpack.c.b16 %v1042, %v1041
        %v1046 = vpack.c.b16 %v1044, %v1043
        %v1048 = vsel %vm488, %v1025, 0
        %v1051 = vsel %vm488, %v1045, 0
        %v1054 = vsel %vm488, %v1046, 0
        %1056 = vmatprep.subr.bf16.mxu0 0
        %1057 = vmatpush1.bf16.xpose.msra.mxu0 %v1051
        %1058 = vmatprep.subr.bf16.mxu0 0
        %1059 = vmatpush1.bf16.xpose.msra.mxu0 %v1054
        %1060 = vmatprep.subr.bf16.mxu0 0
        %1061 = vmatpush1.bf16.xpose.msra.mxu0 0
        %1062 = vmatprep.subr.bf16.mxu0 0
        %1063 = vmatpush1.bf16.xpose.msra.mxu0 0
        %1064 = vmatprep.subr.bf16.mxu0 0
        %1065 = vmatpush1.bf16.xpose.msra.mxu0 0
        %1066 = vmatprep.subr.bf16.mxu0 0
        %1067 = vmatpush1.bf16.xpose.msra.mxu0 0
        %1068 = vmatprep.subr.bf16.mxu0 0
        %1069 = vmatpush1.bf16.xpose.msra.mxu0 0
        %1070 = vmatprep.subr.bf16.mxu0 0
        %1071 = vmatpush1.bf16.xpose.msra.mxu0 0
        %1072 = vmatprep.subr.bf16.mxu0 0
        %1073 = vmatpush1.bf16.xpose.msra.mxu0 0
        %1074 = vmatprep.subr.bf16.mxu0 0
        %1075 = vmatpush1.bf16.xpose.msra.mxu0 0
        %1076 = vmatprep.subr.bf16.mxu0 0
        %1077 = vmatpush1.bf16.xpose.msra.mxu0 0
        %1078 = vmatprep.subr.bf16.mxu0 0
        %1079 = vmatpush1.bf16.xpose.msra.mxu0 0
        %1080 = vmatprep.subr.bf16.mxu0 0
        %1081 = vmatpush1.bf16.xpose.msra.mxu0 0
        %1082 = vmatprep.subr.bf16.mxu0 0
        %1083 = vmatpush1.bf16.xpose.msra.mxu0 0
        %1084 = vmatprep.subr.bf16.mxu0 0
        %1085 = vmatpush1.bf16.xpose.msra.mxu0 0
        %1086 = vmatprep.subr.bf16.mxu0 0
        %1087 = vmatpush1.bf16.xpose.msra.mxu0 0
        %1088 = vmatprep.mubr.bf16.mxu0 0
        %1089 = vmatmul.mubr.bf16.gmra.mrb[0].mxu0 %v1048
        %v1090 = vpop.f32.mrb[0].mxu0
        %v1091 = vadd.f32 %v1035, %v1090
        %v1092 = vpop.f32.mrb[0].mxu0
        %v1093 = vpop.f32.mrb[0].mxu0
        %v1094 = vpop.f32.mrb[0].mxu0
        %1095 = vdwg.mxu0
        %v1096 = vadd.f32 %v437, %v1091
        %v1097 = vld [vmem:[%s5] sm:$0x1]
        %v1098 = vld [vmem:[%s6] sm:$0x1]
        %v1099 = vsel %vm488, %v1096, 0.0
        %1100 = vadd.xlane.f32.xlu0 %v1099
        %v1101 = vpop.xlane.xlu0 %1100
        %v1102 = vrcp.pop 32.0
        %v1103 = vmul.f32 %v1101, %v1102
        %v1104 = vsub.f32 %v1096, %v1103
        %v1105 = vmul.f32 %v1104, %v1104
        %v1106 = vsel %vm488, %v1105, 0.0
        %1107 = vadd.xlane.f32.xlu0 %v1106
        %v1108 = vpop.xlane.xlu0 %1107
        %v1109 = vmul.f32 %v1108, %v1102
        %v1110 = vadd.f32 %v1109, 1e-12
        %v1111 = vrsqrt.pop %v1110
        %v1112 = vmul.f32 %v1104, %v1111
        %v1114 = vlaneseq
        %v1115 = vshrl.u32 %v1114, 7
        %v1116 = vsub.s32 0, %v1115
        %v1117 = vrot.slane %v1097, %v1116
        %v1119 = vmul.f32 %v1112, %v1117
        %v1121 = vlaneseq
        %v1122 = vshrl.u32 %v1121, 7
        %v1123 = vsub.s32 0, %v1122
        %v1124 = vrot.slane %v1098, %v1123
        %v1126 = vadd.f32 %v1119, %v1124
        %v1127 = vpack.c.bf16 %v1126, %v1126
        %v1128 = vld [vmem:[%s9] sm:$0xf]
        %v1129 = vld [vmem:[%s9 + $0x4] sm:$0xf]
        %v1130 = vld [vmem:[%s9 + $0x8] sm:$0xf]
        %v1131 = vld [vmem:[%s9 + $0xc] sm:$0xf]
        %v1132 = vld [vmem:[%s9 + $0x10] sm:$0xf]
        %v1133 = vld [vmem:[%s9 + $0x14] sm:$0xf]
        %v1134 = vld [vmem:[%s9 + $0x18] sm:$0xf]
        %v1135 = vld [vmem:[%s9 + $0x1c] sm:$0xf]
        %v1136 = vld [vmem:[%s10] sm:$0x1]
        %v1138 = vlaneseq
        %v1139 = vshrl.u32 %v1138, 7
        %v1140 = vsub.s32 0, %v1139
        %v1141 = vrot.slane %v1136, %v1140
        %v1151 = vunpack.c.l.b16 %v1128
        %v1152 = vunpack.c.l.b16 %v1129
        %v1153 = vunpack.c.l.b16 %v1130
        %v1154 = vunpack.c.l.b16 %v1131
        %v1155 = vunpack.c.l.b16 %v1132
        %v1156 = vunpack.c.l.b16 %v1133
        %v1157 = vunpack.c.l.b16 %v1134
        %v1158 = vunpack.c.l.b16 %v1135
        %v1159 = vpack.c.b16 %v1152, %v1151
        %v1160 = vpack.c.b16 %v1154, %v1153
        %v1161 = vpack.c.b16 %v1156, %v1155
        %v1162 = vpack.c.b16 %v1158, %v1157
        %v1164 = vsel %vm488, %v1127, 0
        %v1167 = vsel %vm488, %v1159, 0
        %v1170 = vsel %vm488, %v1160, 0
        %v1173 = vsel %vm488, %v1161, 0
        %v1176 = vsel %vm488, %v1162, 0
        %1178 = vmatprep.subr.bf16.mxu0 0
        %1179 = vmatpush1.bf16.xpose.msra.mxu0 %v1167
        %1180 = vmatprep.subr.bf16.mxu0 0
        %1181 = vmatpush1.bf16.xpose.msra.mxu0 %v1170
        %1182 = vmatprep.subr.bf16.mxu0 0
        %1183 = vmatpush1.bf16.xpose.msra.mxu0 %v1173
        %1184 = vmatprep.subr.bf16.mxu0 0
        %1185 = vmatpush1.bf16.xpose.msra.mxu0 %v1176
        %1186 = vmatprep.subr.bf16.mxu0 0
        %1187 = vmatpush1.bf16.xpose.msra.mxu0 0
        %1188 = vmatprep.subr.bf16.mxu0 0
        %1189 = vmatpush1.bf16.xpose.msra.mxu0 0
        %1190 = vmatprep.subr.bf16.mxu0 0
        %1191 = vmatpush1.bf16.xpose.msra.mxu0 0
        %1192 = vmatprep.subr.bf16.mxu0 0
        %1193 = vmatpush1.bf16.xpose.msra.mxu0 0
        %1194 = vmatprep.subr.bf16.mxu0 0
        %1195 = vmatpush1.bf16.xpose.msra.mxu0 0
        %1196 = vmatprep.subr.bf16.mxu0 0
        %1197 = vmatpush1.bf16.xpose.msra.mxu0 0
        %1198 = vmatprep.subr.bf16.mxu0 0
        %1199 = vmatpush1.bf16.xpose.msra.mxu0 0
        %1200 = vmatprep.subr.bf16.mxu0 0
        %1201 = vmatpush1.bf16.xpose.msra.mxu0 0
        %1202 = vmatprep.subr.bf16.mxu0 0
        %1203 = vmatpush1.bf16.xpose.msra.mxu0 0
        %1204 = vmatprep.subr.bf16.mxu0 0
        %1205 = vmatpush1.bf16.xpose.msra.mxu0 0
        %1206 = vmatprep.subr.bf16.mxu0 0
        %1207 = vmatpush1.bf16.xpose.msra.mxu0 0
        %1208 = vmatprep.subr.bf16.mxu0 0
        %1209 = vmatpush1.bf16.xpose.msra.mxu0 0
        %1210 = vmatprep.mubr.bf16.mxu0 0
        %1211 = vmatmul.mubr.bf16.gmra.mrb[0].mxu0 %v1164
        %v1212 = vpop.f32.mrb[0].mxu0
        %v1213 = vadd.f32 %v1141, %v1212
        %v1214 = vpop.f32.mrb[0].mxu0
        %v1215 = vpop.f32.mrb[0].mxu0
        %v1216 = vpop.f32.mrb[0].mxu0
        %1217 = vdwg.mxu0
        %v1218 = vmul.f32 %v1213, 0.5
        %v1219 = vmul.f32 %v1213, 0.70710677
        %v1220 = vmax.f32 %v1219, -4.0
        %v1221 = vmin.f32 %v1220, 4.0
        %v1222 = vmul.f32 %v1221, %v1221
        %v1223 = vmul.f32 %v1222, -2.7261424e-10
        %v1224 = vadd.f32 %v1223, 2.7706815e-08
        %v1225 = vmul.f32 %v1224, %v1222
        %v1226 = vadd.f32 %v1225, -2.101024e-06
        %v1227 = vmul.f32 %v1226, %v1222
        %v1228 = vadd.f32 %v1227, -5.6925062e-05
        %v1229 = vmul.f32 %v1228, %v1222
        %v1230 = vadd.f32 %v1229, -0.00073499064
        %v1231 = vmul.f32 %v1230, %v1222
        %v1232 = vadd.f32 %v1231, -0.0029546
        %v1233 = vmul.f32 %v1232, %v1222
        %v1234 = vadd.f32 %v1233, -0.016096033
        %v1235 = vmul.f32 %v1222, -1.45660715e-05
        %v1236 = vadd.f32 %v1235, -0.00021337405
        %v1237 = vmul.f32 %v1236, %v1222
        %v1238 = vadd.f32 %v1237, -0.001682827
        %v1239 = vmul.f32 %v1238, %v1222
        %v1240 = vadd.f32 %v1239, -0.0073733293
        %v1241 = vmul.f32 %v1240, %v1222
        %v1242 = vadd.f32 %v1241, -0.014264739
        %v1243 = vmul.f32 %v1221, %v1234
        %v1244 = vrcp.pop %v1242
        %v1245 = vmul.f32 %v1243, %v1244
        %v1246 = vadd.f32 %v1245, 1.0
        %v1247 = vmul.f32 %v1218, %v1246
        %v1248 = vpack.c.bf16 %v1247, %v1247
        %v1249 = vld [vmem:[%s11] sm:$0xf]
        %v1250 = vld [vmem:[%s11 + $0x4] sm:$0xf]
        %v1251 = vld [vmem:[%s11 + $0x8] sm:$0xf]
        %v1252 = vld [vmem:[%s11 + $0xc] sm:$0xf]
        %v1253 = vld [vmem:[%s12] sm:$0x1]
        %v1255 = vlaneseq
        %v1256 = vshrl.u32 %v1255, 7
        %v1257 = vsub.s32 0, %v1256
        %v1258 = vrot.slane %v1253, %v1257
        %v1264 = vunpack.c.l.b16 %v1249
        %v1265 = vunpack.c.l.b16 %v1250
        %v1266 = vunpack.c.l.b16 %v1251
        %v1267 = vunpack.c.l.b16 %v1252
        %v1268 = vpack.c.b16 %v1265, %v1264
        %v1269 = vpack.c.b16 %v1267, %v1266
        %vm1270 = vcmask 523264
        %v1272 = vsel %vm1270, %v1248, 0
        %v1275 = vsel %vm1270, %v1268, 0
        %v1278 = vsel %vm1270, %v1269, 0
        %1280 = vmatprep.subr.bf16.mxu0 0
        %1281 = vmatpush1.bf16.xpose.msra.mxu0 %v1275
        %1282 = vmatprep.subr.bf16.mxu0 0
        %1283 = vmatpush1.bf16.xpose.msra.mxu0 %v1278
        %1284 = vmatprep.subr.bf16.mxu0 0
        %1285 = vmatpush1.bf16.xpose.msra.mxu0 0
        %1286 = vmatprep.subr.bf16.mxu0 0
        %1287 = vmatpush1.bf16.xpose.msra.mxu0 0
        %1288 = vmatprep.subr.bf16.mxu0 0
        %1289 = vmatpush1.bf16.xpose.msra.mxu0 0
        %1290 = vmatprep.subr.bf16.mxu0 0
        %1291 = vmatpush1.bf16.xpose.msra.mxu0 0
        %1292 = vmatprep.subr.bf16.mxu0 0
        %1293 = vmatpush1.bf16.xpose.msra.mxu0 0
        %1294 = vmatprep.subr.bf16.mxu0 0
        %1295 = vmatpush1.bf16.xpose.msra.mxu0 0
        %1296 = vmatprep.subr.bf16.mxu0 0
        %1297 = vmatpush1.bf16.xpose.msra.mxu0 0
        %1298 = vmatprep.subr.bf16.mxu0 0
        %1299 = vmatpush1.bf16.xpose.msra.mxu0 0
        %1300 = vmatprep.subr.bf16.mxu0 0
        %1301 = vmatpush1.bf16.xpose.msra.mxu0 0
        %1302 = vmatprep.subr.bf16.mxu0 0
        %1303 = vmatpush1.bf16.xpose.msra.mxu0 0
        %1304 = vmatprep.subr.bf16.mxu0 0
        %1305 = vmatpush1.bf16.xpose.msra.mxu0 0
        %1306 = vmatprep.subr.bf16.mxu0 0
        %1307 = vmatpush1.bf16.xpose.msra.mxu0 0
        %1308 = vmatprep.subr.bf16.mxu0 0
        %1309 = vmatpush1.bf16.xpose.msra.mxu0 0
        %1310 = vmatprep.subr.bf16.mxu0 0
        %1311 = vmatpush1.bf16.xpose.msra.mxu0 0
        %1312 = vmatprep.mubr.bf16.mxu0 0
        %1313 = vmatmul.mubr.bf16.gmra.mrb[0].mxu0 %v1272
        %v1314 = vpop.f32.mrb[0].mxu0
        %v1315 = vadd.f32 %v1258, %v1314
        %v1316 = vpop.f32.mrb[0].mxu0
        %v1317 = vpop.f32.mrb[0].mxu0
        %v1318 = vpop.f32.mrb[0].mxu0
        %1319 = vdwg.mxu0
        %v1320 = vadd.f32 %v1126, %v1315
        %v1321 = vld [vmem:[%s7] sm:$0x1]
        %v1322 = vld [vmem:[%s8] sm:$0x1]
        %v1323 = vsel %vm488, %v1320, 0.0
        %1324 = vadd.xlane.f32.xlu0 %v1323
        %v1325 = vpop.xlane.xlu0 %1324
        %v1326 = vmul.f32 %v1325, %v1102
        %v1327 = vsub.f32 %v1320, %v1326
        %v1328 = vmul.f32 %v1327, %v1327
        %v1329 = vsel %vm488, %v1328, 0.0
        %1330 = vadd.xlane.f32.xlu0 %v1329
        %v1331 = vpop.xlane.xlu0 %1330
        %v1332 = vmul.f32 %v1331, %v1102
        %v1333 = vadd.f32 %v1332, 1e-12
        %v1334 = vrsqrt.pop %v1333
        %v1335 = vmul.f32 %v1327, %v1334
        %v1337 = vlaneseq
        %v1338 = vshrl.u32 %v1337, 7
        %v1339 = vsub.s32 0, %v1338
        %v1340 = vrot.slane %v1321, %v1339
        %v1342 = vmul.f32 %v1335, %v1340
        %v1344 = vlaneseq
        %v1345 = vshrl.u32 %v1344, 7
        %v1346 = vsub.s32 0, %v1345
        %v1347 = vrot.slane %v1322, %v1346
        %v1349 = vadd.f32 %v1342, %v1347
        %1350 = vst.msk [vmem:[%s431] sm:$0xff] %vm488, %v1349
        %s1351 = sand.u32 %s313, 1
        %s1352 = scalar_lea.sflag [#allocation4], %s1351
        %s1353 = sand.u32 %s313, 1
        %s1354 = smul.addr %s1353, 8
        %s1355 = scalar_lea.vmem [#allocation3], %s1354
        // Predicated region
        $region73: #{tpu_custom_call.1} parent=71 // pred_check
          %p1356 = pneg %p323
        $region74: #{tpu_custom_call.1} parent=71 // pred_check_branch
          %1358 = sbr.rel (%p1356) target = $region76
        $region75: #{tpu_custom_call.1} parent=71 // pred_region
          %s1360 = ssub.s32 128, 128
          %1361 = vsyncadd %s1352, %s1360
          %s1362 = smul.addr %s27, 128
          %s1363 = scalar_lea.hbm %s13, %s1362
          %s1365 = sshll.u32 %s1355, 4
          %s1366 = int_to_ptr.vmem [resolvable:$true] %s1365
          %1368 = dma.vmem_to_hbm [thread:$0]  %s1366, 128, %s1363, %s1352
        $region76: #{tpu_custom_call.1} parent=71 // pred_fallthru
          _
      $region72: #{tpu_custom_call.1} parent=5 // pred_fallthru
        _
      %p1369 = scmp.le.s32.totalorder 2, %s22
      // Predicated region
      $region77: #{tpu_custom_call.1} parent=5 // pred_check
        %p1370 = pneg %p1369
      $region78: #{tpu_custom_call.1} parent=5 // pred_check_branch
        %1372 = sbr.rel (%p1370) target = $region80
      $region79: #{tpu_custom_call.1} parent=5 // pred_region
        %s1373 = ssub.s32 %s22, 2
        // Predicated region
        $region81: #{tpu_custom_call.1} parent=79 // pred_check
          %p1374 = pneg %p329
        $region82: #{tpu_custom_call.1} parent=79 // pred_check_branch
          %1376 = sbr.rel (%p1374) target = $region84
        $region83: #{tpu_custom_call.1} parent=79 // pred_region
          %s1377 = sand.u32 %s314, 1
          %s1378 = scalar_lea.sflag [#allocation4], %s1377
          %s1379 = sand.u32 %s314, 1
          %s1380 = smul.addr %s1379, 8
          %s1381 = scalar_lea.vmem [#allocation3], %s1380
          %1382 = dma.done %s1378, 128
        $region84: #{tpu_custom_call.1} parent=79 // pred_fallthru
          _
      $region80: #{tpu_custom_call.1} parent=5 // pred_fallthru
        _
    $region6: #{tpu_custom_call.1} parent=1 // loop_footer
      %s26 = sadd.s32 1, %s22
    $region7: #{tpu_custom_call.1} parent=1 // loop_footer_branch
      %21 = sbr.rel target = $region3
    $region8: #{tpu_custom_call.1} parent=1 // loop_exit
      _
    %1383 = vsyncpa [#allocation4], 1
    %s1384 = scalar_lea.sflag [#allocation4], 1
    %1385 = vsyncpa %s1384, 1

// kernel: tpu_custom_call.1
$region0: #{tpu_custom_call.1}
  #allocation0 [shape = 'u32[]', space=smem, size = 0x4, offset = 0x4, fixed_abs, tag = 'smem constant byte address 0x4 - core index']
  #allocation1 [shape = 'u32[144,128]{1,0:T(1,128)}', space=vmem, size = 0x12000, scoped, tag = 'internal scratch']
  #allocation2 [shape = 'bf16[8,32]{1,0:T(8,128)(2,1)}', space=vmem, size = 0x800, scoped, tag = 'scratch operand']
  %s0 = inlined_call_operand.vmem [shape: f32[2,8,32], index: 0, kind: input, shape index: {}]
  %s1 = inlined_call_operand.vmem [shape: bf16[96,32], index: 1, kind: input, shape index: {}]
  %s2 = inlined_call_operand.vmem [shape: f32[1,96], index: 2, kind: input, shape index: {}]
  %s3 = inlined_call_operand.vmem [shape: bf16[32,32], index: 3, kind: input, shape index: {}]
  %s4 = inlined_call_operand.vmem [shape: f32[1,32], index: 4, kind: input, shape index: {}]
  %s5 = inlined_call_operand.vmem [shape: f32[1,32], index: 5, kind: input, shape index: {}]
  %s6 = inlined_call_operand.vmem [shape: f32[1,32], index: 6, kind: input, shape index: {}]
  %s7 = inlined_call_operand.vmem [shape: f32[1,32], index: 7, kind: input, shape index: {}]
  %s8 = inlined_call_operand.vmem [shape: f32[1,32], index: 8, kind: input, shape index: {}]
  %s9 = inlined_call_operand.vmem [shape: bf16[64,32], index: 9, kind: input, shape index: {}]
  %s10 = inlined_call_operand.vmem [shape: f32[1,64], index: 10, kind: input, shape index: {}]
  %s11 = inlined_call_operand.vmem [shape: bf16[32,64], index: 11, kind: input, shape index: {}]
  %s12 = inlined_call_operand.vmem [shape: f32[1,32], index: 12, kind: input, shape index: {}]
  %s13 = inlined_call_operand.hbm [shape: f32[2,8,32], index: 13, kind: output, shape index: {}]
  %s14 = sld [smem:[#allocation0]]
  $region85: #{tpu_custom_call.1} parent=0
    _
  %s16 = ssub.s32 1, %s14
  %s17 = scalar_select 0, %s16, %s14
  $region1: #{tpu_custom_call.1} parent=0
    #allocation3 [shape = 'u8[8192]{0}', space=vmem, size = 0x2000, scoped, tag = 'output window, operand 0']
    #allocation4 [shape = 's32[2]{0}', space=sflag, size = 0x8, scoped, tag = 'scoped memory for tpu_custom_call.1']
    %18 = vsyncpa [#allocation4], 0
    %s19 = scalar_lea.sflag [#allocation4], 1
    %20 = vsyncpa %s19, 0
    loop: start=0, step=1, limit=4
    $region2: #{tpu_custom_call.1} parent=1 // loop_pre_header
      _
    $region3: #{tpu_custom_call.1} parent=1 // loop_header
      %s22 = sphi 0, %s26
      %p23 = scmp.ge.s32.totalorder %s22, 4
      %s32 = sphi 0, %s34
      %s35 = sphi 0, %s32
      %s36 = sphi 0, %s35
      %s52 = sphi 0, %s36
      %s56 = sphi 0, %s56
      %s58 = sphi 0, %s56
      %s59 = sphi 0, %s58
      %s73 = sphi 0, %s59
      %s77 = sphi 0, %s77
      %s79 = sphi 0, %s77
      %s80 = sphi 0, %s79
      %s94 = sphi 0, %s80
      %s98 = sphi 0, %s98
      %s100 = sphi 0, %s98
      %s101 = sphi 0, %s100
      %s115 = sphi 0, %s101
      %s119 = sphi 0, %s119
      %s121 = sphi 0, %s119
      %s122 = sphi 0, %s121
      %s136 = sphi 0, %s122
      %s140 = sphi 0, %s140
      %s142 = sphi 0, %s140
      %s143 = sphi 0, %s142
      %s157 = sphi 0, %s143
      %s161 = sphi 0, %s161
      %s163 = sphi 0, %s161
      %s164 = sphi 0, %s163
      %s178 = sphi 0, %s164
      %s182 = sphi 0, %s182
      %s184 = sphi 0, %s182
      %s185 = sphi 0, %s184
      %s199 = sphi 0, %s185
      %s203 = sphi 0, %s203
      %s205 = sphi 0, %s203
      %s206 = sphi 0, %s205
      %s220 = sphi 0, %s206
      %s224 = sphi 0, %s224
      %s226 = sphi 0, %s224
      %s227 = sphi 0, %s226
      %s241 = sphi 0, %s227
      %s245 = sphi 0, %s245
      %s247 = sphi 0, %s245
      %s248 = sphi 0, %s247
      %s262 = sphi 0, %s248
      %s266 = sphi 0, %s266
      %s268 = sphi 0, %s266
      %s269 = sphi 0, %s268
      %s283 = sphi 0, %s269
      %s287 = sphi 0, %s287
      %s289 = sphi 0, %s287
      %s290 = sphi 0, %s289
      %s304 = sphi 0, %s290
      %s310 = sphi 0, %s312
      %s313 = sphi 0, %s310
      %s314 = sphi 0, %s313
      %s330 = sphi 0, %s314
    $region4: #{tpu_custom_call.1} parent=1 // loop_header_branch
      %25 = sbr.rel (%p23) target = $region8
    $region5: #{tpu_custom_call.1} parent=1 // loop_body
      %s27 = ssub.s32 %s22, 1
      %s28 = ssub.s32 %s22, 2
      %s29 = sadd.s32 %s22, 1
      %s30 = ssub.s32 %s22, %s29
      %p31 = scmp.eq.s32.totalorder %s30, 0
      %s33 = sadd.s32 %s32, 1
      %s34 = scalar_select %p31, %s32, %s33
      %p37 = pneg %p31
      %p38 = scmp.eq.s32.totalorder %s22, 1
      %p39 = por %p37, %p38
      %p40 = scmp.ne.s32.totalorder %s32, %s35
      %p41 = scmp.eq.s32.totalorder %s22, 0
      %p42 = por %p40, %p41
      %p43 = scmp.ne.s32.totalorder %s32, %s35
      %p44 = scmp.eq.s32.totalorder %s27, 1
      %p45 = por %p43, %p44
      %p46 = scmp.ne.s32.totalorder %s35, %s36
      %p47 = scmp.eq.s32.totalorder %s27, 0
      %p48 = por %p46, %p47
      %p49 = scmp.ne.s32.totalorder %s35, %s36
      %p50 = scmp.eq.s32.totalorder %s28, 1
      %p51 = por %p49, %p50
      %p53 = scmp.ne.s32.totalorder %s36, %s52
      %p54 = scmp.eq.s32.totalorder %s28, 0
      %p55 = por %p53, %p54
      %s57 = sadd.s32 %s56, 1
      %p60 = scmp.eq.s32.totalorder %s22, 1
      %p61 = scmp.ne.s32.totalorder %s56, %s58
      %p62 = scmp.eq.s32.totalorder %s22, 0
      %p63 = por %p61, %p62
      %p64 = scmp.ne.s32.totalorder %s56, %s58
      %p65 = scmp.eq.s32.totalorder %s27, 1
      %p66 = por %p64, %p65
      %p67 = scmp.ne.s32.totalorder %s58, %s59
      %p68 = scmp.eq.s32.totalorder %s27, 0
      %p69 = por %p67, %p68
      %p70 = scmp.ne.s32.totalorder %s58, %s59
      %p71 = scmp.eq.s32.totalorder %s28, 1
      %p72 = por %p70, %p71
      %p74 = scmp.ne.s32.totalorder %s59, %s73
      %p75 = scmp.eq.s32.totalorder %s28, 0
      %p76 = por %p74, %p75
      %s78 = sadd.s32 %s77, 1
      %p81 = scmp.eq.s32.totalorder %s22, 1
      %p82 = scmp.ne.s32.totalorder %s77, %s79
      %p83 = scmp.eq.s32.totalorder %s22, 0
      %p84 = por %p82, %p83
      %p85 = scmp.ne.s32.totalorder %s77, %s79
      %p86 = scmp.eq.s32.totalorder %s27, 1
      %p87 = por %p85, %p86
      %p88 = scmp.ne.s32.totalorder %s79, %s80
      %p89 = scmp.eq.s32.totalorder %s27, 0
      %p90 = por %p88, %p89
      %p91 = scmp.ne.s32.totalorder %s79, %s80
      %p92 = scmp.eq.s32.totalorder %s28, 1
      %p93 = por %p91, %p92
      %p95 = scmp.ne.s32.totalorder %s80, %s94
      %p96 = scmp.eq.s32.totalorder %s28, 0
      %p97 = por %p95, %p96
      %s99 = sadd.s32 %s98, 1
      %p102 = scmp.eq.s32.totalorder %s22, 1
      %p103 = scmp.ne.s32.totalorder %s98, %s100
      %p104 = scmp.eq.s32.totalorder %s22, 0
      %p105 = por %p103, %p104
      %p106 = scmp.ne.s32.totalorder %s98, %s100
      %p107 = scmp.eq.s32.totalorder %s27, 1
      %p108 = por %p106, %p107
      %p109 = scmp.ne.s32.totalorder %s100, %s101
      %p110 = scmp.eq.s32.totalorder %s27, 0
      %p111 = por %p109, %p110
      %p112 = scmp.ne.s32.totalorder %s100, %s101
      %p113 = scmp.eq.s32.totalorder %s28, 1
      %p114 = por %p112, %p113
      %p116 = scmp.ne.s32.totalorder %s101, %s115
      %p117 = scmp.eq.s32.totalorder %s28, 0
      %p118 = por %p116, %p117
      %s120 = sadd.s32 %s119, 1
      %p123 = scmp.eq.s32.totalorder %s22, 1
      %p124 = scmp.ne.s32.totalorder %s119, %s121
      %p125 = scmp.eq.s32.totalorder %s22, 0
      %p126 = por %p124, %p125
      %p127 = scmp.ne.s32.totalorder %s119, %s121
      %p128 = scmp.eq.s32.totalorder %s27, 1
      %p129 = por %p127, %p128
      %p130 = scmp.ne.s32.totalorder %s121, %s122
      %p131 = scmp.eq.s32.totalorder %s27, 0
      %p132 = por %p130, %p131
      %p133 = scmp.ne.s32.totalorder %s121, %s122
      %p134 = scmp.eq.s32.totalorder %s28, 1
      %p135 = por %p133, %p134
      %p137 = scmp.ne.s32.totalorder %s122, %s136
      %p138 = scmp.eq.s32.totalorder %s28, 0
      %p139 = por %p137, %p138
      %s141 = sadd.s32 %s140, 1
      %p144 = scmp.eq.s32.totalorder %s22, 1
      %p145 = scmp.ne.s32.totalorder %s140, %s142
      %p146 = scmp.eq.s32.totalorder %s22, 0
      %p147 = por %p145, %p146
      %p148 = scmp.ne.s32.totalorder %s140, %s142
      %p149 = scmp.eq.s32.totalorder %s27, 1
      %p150 = por %p148, %p149
      %p151 = scmp.ne.s32.totalorder %s142, %s143
      %p152 = scmp.eq.s32.totalorder %s27, 0
      %p153 = por %p151, %p152
      %p154 = scmp.ne.s32.totalorder %s142, %s143
      %p155 = scmp.eq.s32.totalorder %s28, 1
      %p156 = por %p154, %p155
      %p158 = scmp.ne.s32.totalorder %s143, %s157
      %p159 = scmp.eq.s32.totalorder %s28, 0
      %p160 = por %p158, %p159
      %s162 = sadd.s32 %s161, 1
      %p165 = scmp.eq.s32.totalorder %s22, 1
      %p166 = scmp.ne.s32.totalorder %s161, %s163
      %p167 = scmp.eq.s32.totalorder %s22, 0
      %p168 = por %p166, %p167
      %p169 = scmp.ne.s32.totalorder %s161, %s163
      %p170 = scmp.eq.s32.totalorder %s27, 1
      %p171 = por %p169, %p170
      %p172 = scmp.ne.s32.totalorder %s163, %s164
      %p173 = scmp.eq.s32.totalorder %s27, 0
      %p174 = por %p172, %p173
      %p175 = scmp.ne.s32.totalorder %s163, %s164
      %p176 = scmp.eq.s32.totalorder %s28, 1
      %p177 = por %p175, %p176
      %p179 = scmp.ne.s32.totalorder %s164, %s178
      %p180 = scmp.eq.s32.totalorder %s28, 0
      %p181 = por %p179, %p180
      %s183 = sadd.s32 %s182, 1
      %p186 = scmp.eq.s32.totalorder %s22, 1
      %p187 = scmp.ne.s32.totalorder %s182, %s184
      %p188 = scmp.eq.s32.totalorder %s22, 0
      %p189 = por %p187, %p188
      %p190 = scmp.ne.s32.totalorder %s182, %s184
      %p191 = scmp.eq.s32.totalorder %s27, 1
      %p192 = por %p190, %p191
      %p193 = scmp.ne.s32.totalorder %s184, %s185
      %p194 = scmp.eq.s32.totalorder %s27, 0
      %p195 = por %p193, %p194
      %p196 = scmp.ne.s32.totalorder %s184, %s185
      %p197 = scmp.eq.s32.totalorder %s28, 1
      %p198 = por %p196, %p197
      %p200 = scmp.ne.s32.totalorder %s185, %s199
      %p201 = scmp.eq.s32.totalorder %s28, 0
      %p202 = por %p200, %p201
      %s204 = sadd.s32 %s203, 1
      %p207 = scmp.eq.s32.totalorder %s22, 1
      %p208 = scmp.ne.s32.totalorder %s203, %s205
      %p209 = scmp.eq.s32.totalorder %s22, 0
      %p210 = por %p208, %p209
      %p211 = scmp.ne.s32.totalorder %s203, %s205
      %p212 = scmp.eq.s32.totalorder %s27, 1
      %p213 = por %p211, %p212
      %p214 = scmp.ne.s32.totalorder %s205, %s206
      %p215 = scmp.eq.s32.totalorder %s27, 0
      %p216 = por %p214, %p215
      %p217 = scmp.ne.s32.totalorder %s205, %s206
      %p218 = scmp.eq.s32.totalorder %s28, 1
      %p219 = por %p217, %p218
      %p221 = scmp.ne.s32.totalorder %s206, %s220
      %p222 = scmp.eq.s32.totalorder %s28, 0
      %p223 = por %p221, %p222
      %s225 = sadd.s32 %s224, 1
      %p228 = scmp.eq.s32.totalorder %s22, 1
      %p229 = scmp.ne.s32.totalorder %s224, %s226
      %p230 = scmp.eq.s32.totalorder %s22, 0
      %p231 = por %p229, %p230
      %p232 = scmp.ne.s32.totalorder %s224, %s226
      %p233 = scmp.eq.s32.totalorder %s27, 1
      %p234 = por %p232, %p233
      %p235 = scmp.ne.s32.totalorder %s226, %s227
      %p236 = scmp.eq.s32.totalorder %s27, 0
      %p237 = por %p235, %p236
      %p238 = scmp.ne.s32.totalorder %s226, %s227
      %p239 = scmp.eq.s32.totalorder %s28, 1
      %p240 = por %p238, %p239
      %p242 = scmp.ne.s32.totalorder %s227, %s241
      %p243 = scmp.eq.s32.totalorder %s28, 0
      %p244 = por %p242, %p243
      %s246 = sadd.s32 %s245, 1
      %p249 = scmp.eq.s32.totalorder %s22, 1
      %p250 = scmp.ne.s32.totalorder %s245, %s247
      %p251 = scmp.eq.s32.totalorder %s22, 0
      %p252 = por %p250, %p251
      %p253 = scmp.ne.s32.totalorder %s245, %s247
      %p254 = scmp.eq.s32.totalorder %s27, 1
      %p255 = por %p253, %p254
      %p256 = scmp.ne.s32.totalorder %s247, %s248
      %p257 = scmp.eq.s32.totalorder %s27, 0
      %p258 = por %p256, %p257
      %p259 = scmp.ne.s32.totalorder %s247, %s248
      %p260 = scmp.eq.s32.totalorder %s28, 1
      %p261 = por %p259, %p260
      %p263 = scmp.ne.s32.totalorder %s248, %s262
      %p264 = scmp.eq.s32.totalorder %s28, 0
      %p265 = por %p263, %p264
      %s267 = sadd.s32 %s266, 1
      %p270 = scmp.eq.s32.totalorder %s22, 1
      %p271 = scmp.ne.s32.totalorder %s266, %s268
      %p272 = scmp.eq.s32.totalorder %s22, 0
      %p273 = por %p271, %p272
      %p274 = scmp.ne.s32.totalorder %s266, %s268
      %p275 = scmp.eq.s32.totalorder %s27, 1
      %p276 = por %p274, %p275
      %p277 = scmp.ne.s32.totalorder %s268, %s269
      %p278 = scmp.eq.s32.totalorder %s27, 0
      %p279 = por %p277, %p278
      %p280 = scmp.ne.s32.totalorder %s268, %s269
      %p281 = scmp.eq.s32.totalorder %s28, 1
      %p282 = por %p280, %p281
      %p284 = scmp.ne.s32.totalorder %s269, %s283
      %p285 = scmp.eq.s32.totalorder %s28, 0
      %p286 = por %p284, %p285
      %s288 = sadd.s32 %s287, 1
      %p291 = scmp.eq.s32.totalorder %s22, 1
      %p292 = scmp.ne.s32.totalorder %s287, %s289
      %p293 = scmp.eq.s32.totalorder %s22, 0
      %p294 = por %p292, %p293
      %p295 = scmp.ne.s32.totalorder %s287, %s289
      %p296 = scmp.eq.s32.totalorder %s27, 1
      %p297 = por %p295, %p296
      %p298 = scmp.ne.s32.totalorder %s289, %s290
      %p299 = scmp.eq.s32.totalorder %s27, 0
      %p300 = por %p298, %p299
      %p301 = scmp.ne.s32.totalorder %s289, %s290
      %p302 = scmp.eq.s32.totalorder %s28, 1
      %p303 = por %p301, %p302
      %p305 = scmp.ne.s32.totalorder %s290, %s304
      %p306 = scmp.eq.s32.totalorder %s28, 0
      %p307 = por %p305, %p306
      %s308 = ssub.s32 %s22, %s29
      %p309 = scmp.eq.s32.totalorder %s308, 0
      %s311 = sadd.s32 %s310, 1
      %s312 = scalar_select %p309, %s310, %s311
      %p315 = pneg %p309
      %p316 = scmp.eq.s32.totalorder %s22, 1
      %p317 = por %p315, %p316
      %p318 = scmp.ne.s32.totalorder %s310, %s313
      %p319 = scmp.eq.s32.totalorder %s22, 0
      %p320 = por %p318, %p319
      %p321 = scmp.ne.s32.totalorder %s310, %s313
      %p322 = scmp.eq.s32.totalorder %s27, 1
      %p323 = por %p321, %p322
      %p324 = scmp.ne.s32.totalorder %s313, %s314
      %p325 = scmp.eq.s32.totalorder %s27, 0
      %p326 = por %p324, %p325
      %p327 = scmp.ne.s32.totalorder %s313, %s314
      %p328 = scmp.eq.s32.totalorder %s28, 1
      %p329 = por %p327, %p328
      %p331 = scmp.ne.s32.totalorder %s314, %s330
      %p332 = scmp.eq.s32.totalorder %s28, 0
      %p333 = por %p331, %p332
      %p334 = scmp.le.s32.totalorder 1, %s22
      %p335 = scmp.lt.s32.totalorder %s22, 3
      %p336 = pnand %p334, %p335
      %p337 = pneg %p336
      // Predicated region
      $region9: #{tpu_custom_call.1} parent=5 // pred_check
        _
      $region10: #{tpu_custom_call.1} parent=5 // pred_check_branch
        %339 = sbr.rel (%p336) target = $region12
      $region11: #{tpu_custom_call.1} parent=5 // pred_region
        %s340 = ssub.s32 %s22, 1
        // Predicated region
        $region13: #{tpu_custom_call.1} parent=11 // pred_check
          %p341 = pneg %p69
        $region14: #{tpu_custom_call.1} parent=11 // pred_check_branch
          %343 = sbr.rel (%p341) target = $region16
        $region15: #{tpu_custom_call.1} parent=11 // pred_region
          _
        $region16: #{tpu_custom_call.1} parent=11 // pred_fallthru
          _
        // Predicated region
        $region17: #{tpu_custom_call.1} parent=11 // pred_check
          %p344 = pneg %p90
        $region18: #{tpu_custom_call.1} parent=11 // pred_check_branch
          %346 = sbr.rel (%p344) target = $region20
        $region19: #{tpu_custom_call.1} parent=11 // pred_region
          _
        $region20: #{tpu_custom_call.1} parent=11 // pred_fallthru
          _
        // Predicated region
        $region21: #{tpu_custom_call.1} parent=11 // pred_check
          %p347 = pneg %p111
        $region22: #{tpu_custom_call.1} parent=11 // pred_check_branch
          %349 = sbr.rel (%p347) target = $region24
        $region23: #{tpu_custom_call.1} parent=11 // pred_region
          _
        $region24: #{tpu_custom_call.1} parent=11 // pred_fallthru
          _
        // Predicated region
        $region25: #{tpu_custom_call.1} parent=11 // pred_check
          %p350 = pneg %p132
        $region26: #{tpu_custom_call.1} parent=11 // pred_check_branch
          %352 = sbr.rel (%p350) target = $region28
        $region27: #{tpu_custom_call.1} parent=11 // pred_region
          _
        $region28: #{tpu_custom_call.1} parent=11 // pred_fallthru
          _
        // Predicated region
        $region29: #{tpu_custom_call.1} parent=11 // pred_check
          %p353 = pneg %p153
        $region30: #{tpu_custom_call.1} parent=11 // pred_check_branch
          %355 = sbr.rel (%p353) target = $region32
        $region31: #{tpu_custom_call.1} parent=11 // pred_region
          _
        $region32: #{tpu_custom_call.1} parent=11 // pred_fallthru
          _
        // Predicated region
        $region33: #{tpu_custom_call.1} parent=11 // pred_check
          %p356 = pneg %p174
        $region34: #{tpu_custom_call.1} parent=11 // pred_check_branch
          %358 = sbr.rel (%p356) target = $region36
        $region35: #{tpu_custom_call.1} parent=11 // pred_region
          _
        $region36: #{tpu_custom_call.1} parent=11 // pred_fallthru
          _
        // Predicated region
        $region37: #{tpu_custom_call.1} parent=11 // pred_check
          %p359 = pneg %p195
        $region38: #{tpu_custom_call.1} parent=11 // pred_check_branch
          %361 = sbr.rel (%p359) target = $region40
        $region39: #{tpu_custom_call.1} parent=11 // pred_region
          _
        $region40: #{tpu_custom_call.1} parent=11 // pred_fallthru
          _
        // Predicated region
        $region41: #{tpu_custom_call.1} parent=11 // pred_check
          %p362 = pneg %p216
        $region42: #{tpu_custom_call.1} parent=11 // pred_check_branch
          %364 = sbr.rel (%p362) target = $region44
        $region43: #{tpu_custom_call.1} parent=11 // pred_region
          _
        $region44: #{tpu_custom_call.1} parent=11 // pred_fallthru
          _
        // Predicated region
        $region45: #{tpu_custom_call.1} parent=11 // pred_check
          %p365 = pneg %p237
        $region46: #{tpu_custom_call.1} parent=11 // pred_check_branch
          %367 = sbr.rel (%p365) target = $region48
        $region47: #{tpu_custom_call.1} parent=11 // pred_region
          _
        $region48: #{tpu_custom_call.1} parent=11 // pred_fallthru
          _
        // Predicated region
        $region49: #{tpu_custom_call.1} parent=11 // pred_check
          %p368 = pneg %p258
        $region50: #{tpu_custom_call.1} parent=11 // pred_check_branch
          %370 = sbr.rel (%p368) target = $region52
        $region51: #{tpu_custom_call.1} parent=11 // pred_region
          _
        $region52: #{tpu_custom_call.1} parent=11 // pred_fallthru
          _
        // Predicated region
        $region53: #{tpu_custom_call.1} parent=11 // pred_check
          %p371 = pneg %p279
        $region54: #{tpu_custom_call.1} parent=11 // pred_check_branch
          %373 = sbr.rel (%p371) target = $region56
        $region55: #{tpu_custom_call.1} parent=11 // pred_region
          _
        $region56: #{tpu_custom_call.1} parent=11 // pred_fallthru
          _
        // Predicated region
        $region57: #{tpu_custom_call.1} parent=11 // pred_check
          %p374 = pneg %p300
        $region58: #{tpu_custom_call.1} parent=11 // pred_check_branch
          %376 = sbr.rel (%p374) target = $region60
        $region59: #{tpu_custom_call.1} parent=11 // pred_region
          _
        $region60: #{tpu_custom_call.1} parent=11 // pred_fallthru
          _
      $region12: #{tpu_custom_call.1} parent=5 // pred_fallthru
        _
      %p377 = scmp.lt.s32.totalorder %s22, 2
      // Predicated region
      $region61: #{tpu_custom_call.1} parent=5 // pred_check
        %p378 = pneg %p377
      $region62: #{tpu_custom_call.1} parent=5 // pred_check_branch
        %380 = sbr.rel (%p378) target = $region64
      $region63: #{tpu_custom_call.1} parent=5 // pred_region
        // Predicated region
        $region65: #{tpu_custom_call.1} parent=63 // pred_check
          %p381 = pneg %p42
        $region66: #{tpu_custom_call.1} parent=63 // pred_check_branch
          %383 = sbr.rel (%p381) target = $region68
        $region67: #{tpu_custom_call.1} parent=63 // pred_region
          %p384 = scmp.lt.s32.totalorder %s22, 1
          %s385 = scalar_select %p384, %s22, 1
          %s386 = smul.addr %s385, 8
          %s387 = scalar_lea.vmem %s0, %s386
        $region68: #{tpu_custom_call.1} parent=63 // pred_fallthru
          _
      $region64: #{tpu_custom_call.1} parent=5 // pred_fallthru
        _
      %p388 = scmp.le.s32.totalorder 1, %s22
      %p389 = scmp.lt.s32.totalorder %s22, 3
      %p390 = pnand %p388, %p389
      %p391 = pneg %p390
      // Predicated region
      $region69: #{tpu_custom_call.1} parent=5 // pred_check
        _
      $region70: #{tpu_custom_call.1} parent=5 // pred_check_branch
        %393 = sbr.rel (%p390) target = $region72
      $region71: #{tpu_custom_call.1} parent=5 // pred_region
        %s394 = ssub.s32 %s22, 1
        %p395 = scmp.lt.s32.totalorder %s27, 1
        %s396 = scalar_select %p395, %s27, 1
        %s397 = smul.addr %s396, 8
        %s398 = scalar_lea.vmem %s0, %s397
        %p399 = pneg %p48
        %p400 = pneg %p45
        %p401 = pneg %p69
        %p402 = pneg %p66
        %p403 = pneg %p90
        %p404 = pneg %p87
        %p405 = pneg %p111
        %p406 = pneg %p108
        %p407 = pneg %p132
        %p408 = pneg %p129
        %p409 = pneg %p153
        %p410 = pneg %p150
        %p411 = pneg %p174
        %p412 = pneg %p171
        %p413 = pneg %p195
        %p414 = pneg %p192
        %p415 = pneg %p216
        %p416 = pneg %p213
        %p417 = pneg %p237
        %p418 = pneg %p234
        %p419 = pneg %p258
        %p420 = pneg %p255
        %p421 = pneg %p279
        %p422 = pneg %p276
        %p423 = pneg %p300
        %p424 = pneg %p297
        %p425 = pneg %p326
        %p426 = pneg %p323
        %s427 = sand.u32 %s313, 1
        %s428 = scalar_lea.sflag [#allocation4], %s427
        %s429 = sand.u32 %s313, 1
        %s430 = smul.addr %s429, 8
        %s431 = scalar_lea.vmem [#allocation3], %s430
        %p432 = scmp.lt.s32.totalorder %s27, 1
        %s433 = scalar_select %p432, %s27, 1
        %s434 = smul.addr %s433, 8
        %s435 = scalar_lea.vmem %s0, %s434
        %v437 = vld [vmem:[%s435] sm:$0xff]
        %v438 = vpack.c.bf16 %v437, %v437
        %v439 = vld [vmem:[%s1] sm:$0xf]
        %v440 = vld [vmem:[%s1 + $0x4] sm:$0xf]
        %v441 = vld [vmem:[%s1 + $0x8] sm:$0xf]
        %v442 = vld [vmem:[%s1 + $0xc] sm:$0xf]
        %v443 = vld [vmem:[%s1 + $0x10] sm:$0xf]
        %v444 = vld [vmem:[%s1 + $0x14] sm:$0xf]
        %v445 = vld [vmem:[%s1 + $0x18] sm:$0xf]
        %v446 = vld [vmem:[%s1 + $0x1c] sm:$0xf]
        %v447 = vld [vmem:[%s1 + $0x20] sm:$0xf]
        %v448 = vld [vmem:[%s1 + $0x24] sm:$0xf]
        %v449 = vld [vmem:[%s1 + $0x28] sm:$0xf]
        %v450 = vld [vmem:[%s1 + $0x2c] sm:$0xf]
        %v451 = vld [vmem:[%s2] sm:$0x1]
        %v453 = vlaneseq
        %v454 = vshrl.u32 %v453, 7
        %v455 = vsub.s32 0, %v454
        %v456 = vrot.slane %v451, %v455
        %v470 = vunpack.c.l.b16 %v439
        %v471 = vunpack.c.l.b16 %v440
        %v472 = vunpack.c.l.b16 %v441
        %v473 = vunpack.c.l.b16 %v442
        %v474 = vunpack.c.l.b16 %v443
        %v475 = vunpack.c.l.b16 %v444
        %v476 = vunpack.c.l.b16 %v445
        %v477 = vunpack.c.l.b16 %v446
        %v478 = vunpack.c.l.b16 %v447
        %v479 = vunpack.c.l.b16 %v448
        %v480 = vunpack.c.l.b16 %v449
        %v481 = vunpack.c.l.b16 %v450
        %v482 = vpack.c.b16 %v471, %v470
        %v483 = vpack.c.b16 %v473, %v472
        %v484 = vpack.c.b16 %v475, %v474
        %v485 = vpack.c.b16 %v477, %v476
        %v486 = vpack.c.b16 %v479, %v478
        %v487 = vpack.c.b16 %v481, %v480
        %vm488 = vcmask 261120
        %v490 = vsel %vm488, %v438, 0
        %v493 = vsel %vm488, %v482, 0
        %v496 = vsel %vm488, %v483, 0
        %v499 = vsel %vm488, %v484, 0
        %v502 = vsel %vm488, %v485, 0
        %v505 = vsel %vm488, %v486, 0
        %v508 = vsel %vm488, %v487, 0
        %510 = vmatprep.subr.bf16.mxu0 0
        %511 = vmatpush1.bf16.xpose.msra.mxu0 %v493
        %512 = vmatprep.subr.bf16.mxu0 0
        %513 = vmatpush1.bf16.xpose.msra.mxu0 %v496
        %514 = vmatprep.subr.bf16.mxu0 0
        %515 = vmatpush1.bf16.xpose.msra.mxu0 %v499
        %516 = vmatprep.subr.bf16.mxu0 0
        %517 = vmatpush1.bf16.xpose.msra.mxu0 %v502
        %518 = vmatprep.subr.bf16.mxu0 0
        %519 = vmatpush1.bf16.xpose.msra.mxu0 %v505
        %520 = vmatprep.subr.bf16.mxu0 0
        %521 = vmatpush1.bf16.xpose.msra.mxu0 %v508
        %522 = vmatprep.subr.bf16.mxu0 0
        %523 = vmatpush1.bf16.xpose.msra.mxu0 0
        %524 = vmatprep.subr.bf16.mxu0 0
        %525 = vmatpush1.bf16.xpose.msra.mxu0 0
        %526 = vmatprep.subr.bf16.mxu0 0
        %527 = vmatpush1.bf16.xpose.msra.mxu0 0
        %528 = vmatprep.subr.bf16.mxu0 0
        %529 = vmatpush1.bf16.xpose.msra.mxu0 0
        %530 = vmatprep.subr.bf16.mxu0 0
        %531 = vmatpush1.bf16.xpose.msra.mxu0 0
        %532 = vmatprep.subr.bf16.mxu0 0
        %533 = vmatpush1.bf16.xpose.msra.mxu0 0
        %534 = vmatprep.subr.bf16.mxu0 0
        %535 = vmatpush1.bf16.xpose.msra.mxu0 0
        %536 = vmatprep.subr.bf16.mxu0 0
        %537 = vmatpush1.bf16.xpose.msra.mxu0 0
        %538 = vmatprep.subr.bf16.mxu0 0
        %539 = vmatpush1.bf16.xpose.msra.mxu0 0
        %540 = vmatprep.subr.bf16.mxu0 0
        %541 = vmatpush1.bf16.xpose.msra.mxu0 0
        %542 = vmatprep.mubr.bf16.mxu0 0
        %543 = vmatmul.mubr.bf16.gmra.mrb[0].mxu0 %v490
        %v544 = vpop.f32.mrb[0].mxu0
        %v545 = vadd.f32 %v456, %v544
        %v546 = vpop.f32.mrb[0].mxu0
        %v547 = vpop.f32.mrb[0].mxu0
        %v548 = vpop.f32.mrb[0].mxu0
        %549 = vdwg.mxu0
        %v550 = vmul.f32 %v545, 0.35355338
        %v551 = vpack.c.bf16 %v550, %v550
        %v552 = vpack.c.bf16 %v545, %v545
        %554 = vrot.lane.b32.xlu0 %v552, 96
        %v555 = vpop.permute.xlu0 %554
        %vm556 = vcmask 64512
        %v558 = vsel %vm556, %v551, 0
        %v561 = vsel %vm556, %v555, 0
        %563 = vmatprep.subr.bf16.mxu0 0
        %564 = vmatpush1.bf16.xpose.msra.mxu0 %v561
        %565 = vmatprep.subr.bf16.mxu0 0
        %566 = vmatpush1.bf16.xpose.msra.mxu0 0
        %567 = vmatprep.subr.bf16.mxu0 0
        %568 = vmatpush1.bf16.xpose.msra.mxu0 0
        %569 = vmatprep.subr.bf16.mxu0 0
        %570 = vmatpush1.bf16.xpose.msra.mxu0 0
        %571 = vmatprep.subr.bf16.mxu0 0
        %572 = vmatpush1.bf16.xpose.msra.mxu0 0
        %573 = vmatprep.subr.bf16.mxu0 0
        %574 = vmatpush1.bf16.xpose.msra.mxu0 0
        %575 = vmatprep.subr.bf16.mxu0 0
        %576 = vmatpush1.bf16.xpose.msra.mxu0 0
        %577 = vmatprep.subr.bf16.mxu0 0
        %578 = vmatpush1.bf16.xpose.msra.mxu0 0
        %579 = vmatprep.subr.bf16.mxu0 0
        %580 = vmatpush1.bf16.xpose.msra.mxu0 0
        %581 = vmatprep.subr.bf16.mxu0 0
        %582 = vmatpush1.bf16.xpose.msra.mxu0 0
        %583 = vmatprep.subr.bf16.mxu0 0
        %584 = vmatpush1.bf16.xpose.msra.mxu0 0
        %585 = vmatprep.subr.bf16.mxu0 0
        %586 = vmatpush1.bf16.xpose.msra.mxu0 0
        %587 = vmatprep.subr.bf16.mxu0 0
        %588 = vmatpush1.bf16.xpose.msra.mxu0 0
        %589 = vmatprep.subr.bf16.mxu0 0
        %590 = vmatpush1.bf16.xpose.msra.mxu0 0
        %591 = vmatprep.subr.bf16.mxu0 0
        %592 = vmatpush1.bf16.xpose.msra.mxu0 0
        %593 = vmatprep.subr.bf16.mxu0 0
        %594 = vmatpush1.bf16.xpose.msra.mxu0 0
        %595 = vmatprep.mubr.bf16.mxu0 0
        %596 = vmatmul.mubr.bf16.gmra.mrb[0].mxu0 %v558
        %v597 = vpop.f32.mrb[0].mxu0
        %v598 = vadd.f32 0.0, %v597
        %v599 = vpop.f32.mrb[0].mxu0
        %v600 = vpop.f32.mrb[0].mxu0
        %v601 = vpop.f32.mrb[0].mxu0
        %602 = vdwg.mxu0
        %v603 = vsel %vm556, %v598, -inf
        %604 = vmax.xlane.f32.xlu0 %v603
        %v605 = vpop.xlane.xlu0 %604
        %v606 = vsub.f32 %v598, %v605
        %v607 = vmul.f32 %v606, 1.442695
        %v608 = vpow.pop %v607
        %v609 = vsel %vm556, %v608, 0.0
        %610 = vadd.xlane.f32.xlu0 %v609
        %v611 = vpop.xlane.xlu0 %610
        %v612 = vrcp.pop %v611
        %v613 = vmul.f32 %v608, %v612
        %v614 = vpack.c.bf16 %v613, %v613
        %615 = vrot.lane.b32.xlu0 %v552, 64
        %v616 = vpop.permute.xlu0 %615
        %v618 = vsel %vm556, %v614, 0
        %vm620 = vcmask 1043456
        %v622 = vsel %vm620, %v616, 0
        %624 = vmatprep.subr.bf16.mxu0 0
        %625 = vmatpush1.bf16.msra.mxu0 %v622
        %626 = vmatprep.subr.bf16.mxu0 0
        %627 = vmatpush1.bf16.msra.mxu0 0
        %628 = vmatprep.subr.bf16.mxu0 0
        %629 = vmatpush1.bf16.msra.mxu0 0
        %630 = vmatprep.subr.bf16.mxu0 0
        %631 = vmatpush1.bf16.msra.mxu0 0
        %632 = vmatprep.subr.bf16.mxu0 0
        %633 = vmatpush1.bf16.msra.mxu0 0
        %634 = vmatprep.subr.bf16.mxu0 0
        %635 = vmatpush1.bf16.msra.mxu0 0
        %636 = vmatprep.subr.bf16.mxu0 0
        %637 = vmatpush1.bf16.msra.mxu0 0
        %638 = vmatprep.subr.bf16.mxu0 0
        %639 = vmatpush1.bf16.msra.mxu0 0
        %640 = vmatprep.subr.bf16.mxu0 0
        %641 = vmatpush1.bf16.msra.mxu0 0
        %642 = vmatprep.subr.bf16.mxu0 0
        %643 = vmatpush1.bf16.msra.mxu0 0
        %644 = vmatprep.subr.bf16.mxu0 0
        %645 = vmatpush1.bf16.msra.mxu0 0
        %646 = vmatprep.subr.bf16.mxu0 0
        %647 = vmatpush1.bf16.msra.mxu0 0
        %648 = vmatprep.subr.bf16.mxu0 0
        %649 = vmatpush1.bf16.msra.mxu0 0
        %650 = vmatprep.subr.bf16.mxu0 0
        %651 = vmatpush1.bf16.msra.mxu0 0
        %652 = vmatprep.subr.bf16.mxu0 0
        %653 = vmatpush1.bf16.msra.mxu0 0
        %654 = vmatprep.subr.bf16.mxu0 0
        %655 = vmatpush1.bf16.msra.mxu0 0
        %656 = vmatprep.mubr.bf16.mxu0 0
        %657 = vmatmul.mubr.bf16.gmra.mrb[0].mxu0 %v618
        %v658 = vpop.f32.mrb[0].mxu0
        %v659 = vadd.f32 0.0, %v658
        %v660 = vpop.f32.mrb[0].mxu0
        %v661 = vpop.f32.mrb[0].mxu0
        %v662 = vpop.f32.mrb[0].mxu0
        %663 = vdwg.mxu0
        %v664 = vpack.c.bf16 %v659, %v659
        %vm665 = vcmask 60416
        %666 = vst.msk [vmem:[#allocation2] sm:$0xf] %vm665, %v664
        %668 = vrot.lane.b32.xlu0 %v551, 120
        %v669 = vpop.permute.xlu0 %668
        %670 = vrot.lane.b32.xlu0 %v552, 88
        %v671 = vpop.permute.xlu0 %670
        %v673 = vsel %vm556, %v669, 0
        %v676 = vsel %vm556, %v671, 0
        %678 = vmatprep.subr.bf16.mxu0 0
        %679 = vmatpush1.bf16.xpose.msra.mxu0 %v676
        %680 = vmatprep.subr.bf16.mxu0 0
        %681 = vmatpush1.bf16.xpose.msra.mxu0 0
        %682 = vmatprep.subr.bf16.mxu0 0
        %683 = vmatpush1.bf16.xpose.msra.mxu0 0
        %684 = vmatprep.subr.bf16.mxu0 0
        %685 = vmatpush1.bf16.xpose.msra.mxu0 0
        %686 = vmatprep.subr.bf16.mxu0 0
        %687 = vmatpush1.bf16.xpose.msra.mxu0 0
        %688 = vmatprep.subr.bf16.mxu0 0
        %689 = vmatpush1.bf16.xpose.msra.mxu0 0
        %690 = vmatprep.subr.bf16.mxu0 0
        %691 = vmatpush1.bf16.xpose.msra.mxu0 0
        %692 = vmatprep.subr.bf16.mxu0 0
        %693 = vmatpush1.bf16.xpose.msra.mxu0 0
        %694 = vmatprep.subr.bf16.mxu0 0
        %695 = vmatpush1.bf16.xpose.msra.mxu0 0
        %696 = vmatprep.subr.bf16.mxu0 0
        %697 = vmatpush1.bf16.xpose.msra.mxu0 0
        %698 = vmatprep.subr.bf16.mxu0 0
        %699 = vmatpush1.bf16.xpose.msra.mxu0 0
        %700 = vmatprep.subr.bf16.mxu0 0
        %701 = vmatpush1.bf16.xpose.msra.mxu0 0
        %702 = vmatprep.subr.bf16.mxu0 0
        %703 = vmatpush1.bf16.xpose.msra.mxu0 0
        %704 = vmatprep.subr.bf16.mxu0 0
        %705 = vmatpush1.bf16.xpose.msra.mxu0 0
        %706 = vmatprep.subr.bf16.mxu0 0
        %707 = vmatpush1.bf16.xpose.msra.mxu0 0
        %708 = vmatprep.subr.bf16.mxu0 0
        %709 = vmatpush1.bf16.xpose.msra.mxu0 0
        %710 = vmatprep.mubr.bf16.mxu0 0
        %711 = vmatmul.mubr.bf16.gmra.mrb[0].mxu0 %v673
        %v712 = vpop.f32.mrb[0].mxu0
        %v713 = vadd.f32 0.0, %v712
        %v714 = vpop.f32.mrb[0].mxu0
        %v715 = vpop.f32.mrb[0].mxu0
        %v716 = vpop.f32.mrb[0].mxu0
        %717 = vdwg.mxu0
        %v718 = vsel %vm556, %v713, -inf
        %719 = vmax.xlane.f32.xlu0 %v718
        %v720 = vpop.xlane.xlu0 %719
        %v721 = vsub.f32 %v713, %v720
        %v722 = vmul.f32 %v721, 1.442695
        %v723 = vpow.pop %v722
        %v724 = vsel %vm556, %v723, 0.0
        %725 = vadd.xlane.f32.xlu0 %v724
        %v726 = vpop.xlane.xlu0 %725
        %v727 = vrcp.pop %v726
        %v728 = vmul.f32 %v723, %v727
        %v729 = vpack.c.bf16 %v728, %v728
        %730 = vrot.lane.b32.xlu0 %v552, 56
        %v731 = vpop.permute.xlu0 %730
        %v733 = vsel %vm556, %v729, 0
        %v736 = vsel %vm620, %v731, 0
        %738 = vmatprep.subr.bf16.mxu0 0
        %739 = vmatpush1.bf16.msra.mxu0 %v736
        %740 = vmatprep.subr.bf16.mxu0 0
        %741 = vmatpush1.bf16.msra.mxu0 0
        %742 = vmatprep.subr.bf16.mxu0 0
        %743 = vmatpush1.bf16.msra.mxu0 0
        %744 = vmatprep.subr.bf16.mxu0 0
        %745 = vmatpush1.bf16.msra.mxu0 0
        %746 = vmatprep.subr.bf16.mxu0 0
        %747 = vmatpush1.bf16.msra.mxu0 0
        %748 = vmatprep.subr.bf16.mxu0 0
        %749 = vmatpush1.bf16.msra.mxu0 0
        %750 = vmatprep.subr.bf16.mxu0 0
        %751 = vmatpush1.bf16.msra.mxu0 0
        %752 = vmatprep.subr.bf16.mxu0 0
        %753 = vmatpush1.bf16.msra.mxu0 0
        %754 = vmatprep.subr.bf16.mxu0 0
        %755 = vmatpush1.bf16.msra.mxu0 0
        %756 = vmatprep.subr.bf16.mxu0 0
        %757 = vmatpush1.bf16.msra.mxu0 0
        %758 = vmatprep.subr.bf16.mxu0 0
        %759 = vmatpush1.bf16.msra.mxu0 0
        %760 = vmatprep.subr.bf16.mxu0 0
        %761 = vmatpush1.bf16.msra.mxu0 0
        %762 = vmatprep.subr.bf16.mxu0 0
        %763 = vmatpush1.bf16.msra.mxu0 0
        %764 = vmatprep.subr.bf16.mxu0 0
        %765 = vmatpush1.bf16.msra.mxu0 0
        %766 = vmatprep.subr.bf16.mxu0 0
        %767 = vmatpush1.bf16.msra.mxu0 0
        %768 = vmatprep.subr.bf16.mxu0 0
        %769 = vmatpush1.bf16.msra.mxu0 0
        %770 = vmatprep.mubr.bf16.mxu0 0
        %771 = vmatmul.mubr.bf16.gmra.mrb[0].mxu0 %v733
        %v772 = vpop.f32.mrb[0].mxu0
        %v773 = vadd.f32 0.0, %v772
        %v774 = vpop.f32.mrb[0].mxu0
        %v775 = vpop.f32.mrb[0].mxu0
        %v776 = vpop.f32.mrb[0].mxu0
        %777 = vdwg.mxu0
        %v778 = vpack.c.bf16 %v773, %v773
        %v780 = vunpack.c.l.b16 %v778
        %v781 = vpack.c.b16 %v780, %v780
        %782 = vrot.lane.b32.xlu0 %v781, 8
        %v783 = vpop.permute.xlu0 %782
        %vm785 = vcmask 126016
        %786 = vst.msk [vmem:[#allocation2] sm:$0xf] %vm785, %v783
        %787 = vrot.lane.b32.xlu0 %v551, 112
        %v788 = vpop.permute.xlu0 %787
        %789 = vrot.lane.b32.xlu0 %v552, 80
        %v790 = vpop.permute.xlu0 %789
        %v792 = vsel %vm556, %v788, 0
        %v795 = vsel %vm556, %v790, 0
        %797 = vmatprep.subr.bf16.mxu0 0
        %798 = vmatpush1.bf16.xpose.msra.mxu0 %v795
        %799 = vmatprep.subr.bf16.mxu0 0
        %800 = vmatpush1.bf16.xpose.msra.mxu0 0
        %801 = vmatprep.subr.bf16.mxu0 0
        %802 = vmatpush1.bf16.xpose.msra.mxu0 0
        %803 = vmatprep.subr.bf16.mxu0 0
        %804 = vmatpush1.bf16.xpose.msra.mxu0 0
        %805 = vmatprep.subr.bf16.mxu0 0
        %806 = vmatpush1.bf16.xpose.msra.mxu0 0
        %807 = vmatprep.subr.bf16.mxu0 0
        %808 = vmatpush1.bf16.xpose.msra.mxu0 0
        %809 = vmatprep.subr.bf16.mxu0 0
        %810 = vmatpush1.bf16.xpose.msra.mxu0 0
        %811 = vmatprep.subr.bf16.mxu0 0
        %812 = vmatpush1.bf16.xpose.msra.mxu0 0
        %813 = vmatprep.subr.bf16.mxu0 0
        %814 = vmatpush1.bf16.xpose.msra.mxu0 0
        %815 = vmatprep.subr.bf16.mxu0 0
        %816 = vmatpush1.bf16.xpose.msra.mxu0 0
        %817 = vmatprep.subr.bf16.mxu0 0
        %818 = vmatpush1.bf16.xpose.msra.mxu0 0
        %819 = vmatprep.subr.bf16.mxu0 0
        %820 = vmatpush1.bf16.xpose.msra.mxu0 0
        %821 = vmatprep.subr.bf16.mxu0 0
        %822 = vmatpush1.bf16.xpose.msra.mxu0 0
        %823 = vmatprep.subr.bf16.mxu0 0
        %824 = vmatpush1.bf16.xpose.msra.mxu0 0
        %825 = vmatprep.subr.bf16.mxu0 0
        %826 = vmatpush1.bf16.xpose.msra.mxu0 0
        %827 = vmatprep.subr.bf16.mxu0 0
        %828 = vmatpush1.bf16.xpose.msra.mxu0 0
        %829 = vmatprep.mubr.bf16.mxu0 0
        %830 = vmatmul.mubr.bf16.gmra.mrb[0].mxu0 %v792
        %v831 = vpop.f32.mrb[0].mxu0
        %v832 = vadd.f32 0.0, %v831
        %v833 = vpop.f32.mrb[0].mxu0
        %v834 = vpop.f32.mrb[0].mxu0
        %v835 = vpop.f32.mrb[0].mxu0
        %836 = vdwg.mxu0
        %v837 = vsel %vm556, %v832, -inf
        %838 = vmax.xlane.f32.xlu0 %v837
        %v839 = vpop.xlane.xlu0 %838
        %v840 = vsub.f32 %v832, %v839
        %v841 = vmul.f32 %v840, 1.442695
        %v842 = vpow.pop %v841
        %v843 = vsel %vm556, %v842, 0.0
        %844 = vadd.xlane.f32.xlu0 %v843
        %v845 = vpop.xlane.xlu0 %844
        %v846 = vrcp.pop %v845
        %v847 = vmul.f32 %v842, %v846
        %v848 = vpack.c.bf16 %v847, %v847
        %849 = vrot.lane.b32.xlu0 %v552, 48
        %v850 = vpop.permute.xlu0 %849
        %v852 = vsel %vm556, %v848, 0
        %v855 = vsel %vm620, %v850, 0
        %857 = vmatprep.subr.bf16.mxu0 0
        %858 = vmatpush1.bf16.msra.mxu0 %v855
        %859 = vmatprep.subr.bf16.mxu0 0
        %860 = vmatpush1.bf16.msra.mxu0 0
        %861 = vmatprep.subr.bf16.mxu0 0
        %862 = vmatpush1.bf16.msra.mxu0 0
        %863 = vmatprep.subr.bf16.mxu0 0
        %864 = vmatpush1.bf16.msra.mxu0 0
        %865 = vmatprep.subr.bf16.mxu0 0
        %866 = vmatpush1.bf16.msra.mxu0 0
        %867 = vmatprep.subr.bf16.mxu0 0
        %868 = vmatpush1.bf16.msra.mxu0 0
        %869 = vmatprep.subr.bf16.mxu0 0
        %870 = vmatpush1.bf16.msra.mxu0 0
        %871 = vmatprep.subr.bf16.mxu0 0
        %872 = vmatpush1.bf16.msra.mxu0 0
        %873 = vmatprep.subr.bf16.mxu0 0
        %874 = vmatpush1.bf16.msra.mxu0 0
        %875 = vmatprep.subr.bf16.mxu0 0
        %876 = vmatpush1.bf16.msra.mxu0 0
        %877 = vmatprep.subr.bf16.mxu0 0
        %878 = vmatpush1.bf16.msra.mxu0 0
        %879 = vmatprep.subr.bf16.mxu0 0
        %880 = vmatpush1.bf16.msra.mxu0 0
        %881 = vmatprep.subr.bf16.mxu0 0
        %882 = vmatpush1.bf16.msra.mxu0 0
        %883 = vmatprep.subr.bf16.mxu0 0
        %884 = vmatpush1.bf16.msra.mxu0 0
        %885 = vmatprep.subr.bf16.mxu0 0
        %886 = vmatpush1.bf16.msra.mxu0 0
        %887 = vmatprep.subr.bf16.mxu0 0
        %888 = vmatpush1.bf16.msra.mxu0 0
        %889 = vmatprep.mubr.bf16.mxu0 0
        %890 = vmatmul.mubr.bf16.gmra.mrb[0].mxu0 %v852
        %v891 = vpop.f32.mrb[0].mxu0
        %v892 = vadd.f32 0.0, %v891
        %v893 = vpop.f32.mrb[0].mxu0
        %v894 = vpop.f32.mrb[0].mxu0
        %v895 = vpop.f32.mrb[0].mxu0
        %896 = vdwg.mxu0
        %v897 = vpack.c.bf16 %v892, %v892
        %v899 = vunpack.c.l.b16 %v897
        %v900 = vpack.c.b16 %v899, %v899
        %901 = vrot.lane.b32.xlu0 %v900, 16
        %v902 = vpop.permute.xlu0 %901
        %vm904 = vcmask 191616
        %905 = vst.msk [vmem:[#allocation2] sm:$0xf] %vm904, %v902
        %906 = vrot.lane.b32.xlu0 %v551, 104
        %v907 = vpop.permute.xlu0 %906
        %908 = vrot.lane.b32.xlu0 %v552, 72
        %v909 = vpop.permute.xlu0 %908
        %v911 = vsel %vm556, %v907, 0
        %v914 = vsel %vm556, %v909, 0
        %916 = vmatprep.subr.bf16.mxu0 0
        %917 = vmatpush1.bf16.xpose.msra.mxu0 %v914
        %918 = vmatprep.subr.bf16.mxu0 0
        %919 = vmatpush1.bf16.xpose.msra.mxu0 0
        %920 = vmatprep.subr.bf16.mxu0 0
        %921 = vmatpush1.bf16.xpose.msra.mxu0 0
        %922 = vmatprep.subr.bf16.mxu0 0
        %923 = vmatpush1.bf16.xpose.msra.mxu0 0
        %924 = vmatprep.subr.bf16.mxu0 0
        %925 = vmatpush1.bf16.xpose.msra.mxu0 0
        %926 = vmatprep.subr.bf16.mxu0 0
        %927 = vmatpush1.bf16.xpose.msra.mxu0 0
        %928 = vmatprep.subr.bf16.mxu0 0
        %929 = vmatpush1.bf16.xpose.msra.mxu0 0
        %930 = vmatprep.subr.bf16.mxu0 0
        %931 = vmatpush1.bf16.xpose.msra.mxu0 0
        %932 = vmatprep.subr.bf16.mxu0 0
        %933 = vmatpush1.bf16.xpose.msra.mxu0 0
        %934 = vmatprep.subr.bf16.mxu0 0
        %935 = vmatpush1.bf16.xpose.msra.mxu0 0
        %936 = vmatprep.subr.bf16.mxu0 0
        %937 = vmatpush1.bf16.xpose.msra.mxu0 0
        %938 = vmatprep.subr.bf16.mxu0 0
        %939 = vmatpush1.bf16.xpose.msra.mxu0 0
        %940 = vmatprep.subr.bf16.mxu0 0
        %941 = vmatpush1.bf16.xpose.msra.mxu0 0
        %942 = vmatprep.subr.bf16.mxu0 0
        %943 = vmatpush1.bf16.xpose.msra.mxu0 0
        %944 = vmatprep.subr.bf16.mxu0 0
        %945 = vmatpush1.bf16.xpose.msra.mxu0 0
        %946 = vmatprep.subr.bf16.mxu0 0
        %947 = vmatpush1.bf16.xpose.msra.mxu0 0
        %948 = vmatprep.mubr.bf16.mxu0 0
        %949 = vmatmul.mubr.bf16.gmra.mrb[0].mxu0 %v911
        %v950 = vpop.f32.mrb[0].mxu0
        %v951 = vadd.f32 0.0, %v950
        %v952 = vpop.f32.mrb[0].mxu0
        %v953 = vpop.f32.mrb[0].mxu0
        %v954 = vpop.f32.mrb[0].mxu0
        %955 = vdwg.mxu0
        %v956 = vsel %vm556, %v951, -inf
        %957 = vmax.xlane.f32.xlu0 %v956
        %v958 = vpop.xlane.xlu0 %957
        %v959 = vsub.f32 %v951, %v958
        %v960 = vmul.f32 %v959, 1.442695
        %v961 = vpow.pop %v960
        %v962 = vsel %vm556, %v961, 0.0
        %963 = vadd.xlane.f32.xlu0 %v962
        %v964 = vpop.xlane.xlu0 %963
        %v965 = vrcp.pop %v964
        %v966 = vmul.f32 %v961, %v965
        %v967 = vpack.c.bf16 %v966, %v966
        %968 = vrot.lane.b32.xlu0 %v552, 40
        %v969 = vpop.permute.xlu0 %968
        %v971 = vsel %vm556, %v967, 0
        %v974 = vsel %vm620, %v969, 0
        %976 = vmatprep.subr.bf16.mxu0 0
        %977 = vmatpush1.bf16.msra.mxu0 %v974
        %978 = vmatprep.subr.bf16.mxu0 0
        %979 = vmatpush1.bf16.msra.mxu0 0
        %980 = vmatprep.subr.bf16.mxu0 0
        %981 = vmatpush1.bf16.msra.mxu0 0
        %982 = vmatprep.subr.bf16.mxu0 0
        %983 = vmatpush1.bf16.msra.mxu0 0
        %984 = vmatprep.subr.bf16.mxu0 0
        %985 = vmatpush1.bf16.msra.mxu0 0
        %986 = vmatprep.subr.bf16.mxu0 0
        %987 = vmatpush1.bf16.msra.mxu0 0
        %988 = vmatprep.subr.bf16.mxu0 0
        %989 = vmatpush1.bf16.msra.mxu0 0
        %990 = vmatprep.subr.bf16.mxu0 0
        %991 = vmatpush1.bf16.msra.mxu0 0
        %992 = vmatprep.subr.bf16.mxu0 0
        %993 = vmatpush1.bf16.msra.mxu0 0
        %994 = vmatprep.subr.bf16.mxu0 0
        %995 = vmatpush1.bf16.msra.mxu0 0
        %996 = vmatprep.subr.bf16.mxu0 0
        %997 = vmatpush1.bf16.msra.mxu0 0
        %998 = vmatprep.subr.bf16.mxu0 0
        %999 = vmatpush1.bf16.msra.mxu0 0
        %1000 = vmatprep.subr.bf16.mxu0 0
        %1001 = vmatpush1.bf16.msra.mxu0 0
        %1002 = vmatprep.subr.bf16.mxu0 0
        %1003 = vmatpush1.bf16.msra.mxu0 0
        %1004 = vmatprep.subr.bf16.mxu0 0
        %1005 = vmatpush1.bf16.msra.mxu0 0
        %1006 = vmatprep.subr.bf16.mxu0 0
        %1007 = vmatpush1.bf16.msra.mxu0 0
        %1008 = vmatprep.mubr.bf16.mxu0 0
        %1009 = vmatmul.mubr.bf16.gmra.mrb[0].mxu0 %v971
        %v1010 = vpop.f32.mrb[0].mxu0
        %v1011 = vadd.f32 0.0, %v1010
        %v1012 = vpop.f32.mrb[0].mxu0
        %v1013 = vpop.f32.mrb[0].mxu0
        %v1014 = vpop.f32.mrb[0].mxu0
        %1015 = vdwg.mxu0
        %v1016 = vpack.c.bf16 %v1011, %v1011
        %v1018 = vunpack.c.l.b16 %v1016
        %v1019 = vpack.c.b16 %v1018, %v1018
        %1020 = vrot.lane.b32.xlu0 %v1019, 24
        %v1021 = vpop.permute.xlu0 %1020
        %vm1023 = vcmask 257216
        %1024 = vst.msk [vmem:[#allocation2] sm:$0xf] %vm1023, %v1021
        %v1025 = vld [vmem:[#allocation2] sm:$0xf]
        %v1026 = vld [vmem:[%s3] sm:$0xf]
        %v1027 = vld [vmem:[%s3 + $0x4] sm:$0xf]
        %v1028 = vld [vmem:[%s3 + $0x8] sm:$0xf]
        %v1029 = vld [vmem:[%s3 + $0xc] sm:$0xf]
        %v1030 = vld [vmem:[%s4] sm:$0x1]
        %v1032 = vlaneseq
        %v1033 = vshrl.u32 %v1032, 7
        %v1034 = vsub.s32 0, %v1033
        %v1035 = vrot.slane %v1030, %v1034
        %v1041 = vunpack.c.l.b16 %v1026
        %v1042 = vunpack.c.l.b16 %v1027
        %v1043 = vunpack.c.l.b16 %v1028
        %v1044 = vunpack.c.l.b16 %v1029
        %v1045 = vpack.c.b16 %v1042, %v1041
        %v1046 = vpack.c.b16 %v1044, %v1043
        %v1048 = vsel %vm488, %v1025, 0
        %v1051 = vsel %vm488, %v1045, 0
        %v1054 = vsel %vm488, %v1046, 0
        %1056 = vmatprep.subr.bf16.mxu0 0
        %1057 = vmatpush1.bf16.xpose.msra.mxu0 %v1051
        %1058 = vmatprep.subr.bf16.mxu0 0
        %1059 = vmatpush1.bf16.xpose.msra.mxu0 %v1054
        %1060 = vmatprep.subr.bf16.mxu0 0
        %1061 = vmatpush1.bf16.xpose.msra.mxu0 0
        %1062 = vmatprep.subr.bf16.mxu0 0
        %1063 = vmatpush1.bf16.xpose.msra.mxu0 0
        %1064 = vmatprep.subr.bf16.mxu0 0
        %1065 = vmatpush1.bf16.xpose.msra.mxu0 0
        %1066 = vmatprep.subr.bf16.mxu0 0
        %1067 = vmatpush1.bf16.xpose.msra.mxu0 0
        %1068 = vmatprep.subr.bf16.mxu0 0
        %1069 = vmatpush1.bf16.xpose.msra.mxu0 0
        %1070 = vmatprep.subr.bf16.mxu0 0
        %1071 = vmatpush1.bf16.xpose.msra.mxu0 0
        %1072 = vmatprep.subr.bf16.mxu0 0
        %1073 = vmatpush1.bf16.xpose.msra.mxu0 0
        %1074 = vmatprep.subr.bf16.mxu0 0
        %1075 = vmatpush1.bf16.xpose.msra.mxu0 0
        %1076 = vmatprep.subr.bf16.mxu0 0
        %1077 = vmatpush1.bf16.xpose.msra.mxu0 0
        %1078 = vmatprep.subr.bf16.mxu0 0
        %1079 = vmatpush1.bf16.xpose.msra.mxu0 0
        %1080 = vmatprep.subr.bf16.mxu0 0
        %1081 = vmatpush1.bf16.xpose.msra.mxu0 0
        %1082 = vmatprep.subr.bf16.mxu0 0
        %1083 = vmatpush1.bf16.xpose.msra.mxu0 0
        %1084 = vmatprep.subr.bf16.mxu0 0
        %1085 = vmatpush1.bf16.xpose.msra.mxu0 0
        %1086 = vmatprep.subr.bf16.mxu0 0
        %1087 = vmatpush1.bf16.xpose.msra.mxu0 0
        %1088 = vmatprep.mubr.bf16.mxu0 0
        %1089 = vmatmul.mubr.bf16.gmra.mrb[0].mxu0 %v1048
        %v1090 = vpop.f32.mrb[0].mxu0
        %v1091 = vadd.f32 %v1035, %v1090
        %v1092 = vpop.f32.mrb[0].mxu0
        %v1093 = vpop.f32.mrb[0].mxu0
        %v1094 = vpop.f32.mrb[0].mxu0
        %1095 = vdwg.mxu0
        %v1096 = vadd.f32 %v437, %v1091
        %v1097 = vld [vmem:[%s5] sm:$0x1]
        %v1098 = vld [vmem:[%s6] sm:$0x1]
        %v1099 = vsel %vm488, %v1096, 0.0
        %1100 = vadd.xlane.f32.xlu0 %v1099
        %v1101 = vpop.xlane.xlu0 %1100
        %v1102 = vrcp.pop 32.0
        %v1103 = vmul.f32 %v1101, %v1102
        %v1104 = vsub.f32 %v1096, %v1103
        %v1105 = vmul.f32 %v1104, %v1104
        %v1106 = vsel %vm488, %v1105, 0.0
        %1107 = vadd.xlane.f32.xlu0 %v1106
        %v1108 = vpop.xlane.xlu0 %1107
        %v1109 = vmul.f32 %v1108, %v1102
        %v1110 = vadd.f32 %v1109, 1e-12
        %v1111 = vrsqrt.pop %v1110
        %v1112 = vmul.f32 %v1104, %v1111
        %v1114 = vlaneseq
        %v1115 = vshrl.u32 %v1114, 7
        %v1116 = vsub.s32 0, %v1115
        %v1117 = vrot.slane %v1097, %v1116
        %v1119 = vmul.f32 %v1112, %v1117
        %v1121 = vlaneseq
        %v1122 = vshrl.u32 %v1121, 7
        %v1123 = vsub.s32 0, %v1122
        %v1124 = vrot.slane %v1098, %v1123
        %v1126 = vadd.f32 %v1119, %v1124
        %v1127 = vpack.c.bf16 %v1126, %v1126
        %v1128 = vld [vmem:[%s9] sm:$0xf]
        %v1129 = vld [vmem:[%s9 + $0x4] sm:$0xf]
        %v1130 = vld [vmem:[%s9 + $0x8] sm:$0xf]
        %v1131 = vld [vmem:[%s9 + $0xc] sm:$0xf]
        %v1132 = vld [vmem:[%s9 + $0x10] sm:$0xf]
        %v1133 = vld [vmem:[%s9 + $0x14] sm:$0xf]
        %v1134 = vld [vmem:[%s9 + $0x18] sm:$0xf]
        %v1135 = vld [vmem:[%s9 + $0x1c] sm:$0xf]
        %v1136 = vld [vmem:[%s10] sm:$0x1]
        %v1138 = vlaneseq
        %v1139 = vshrl.u32 %v1138, 7
        %v1140 = vsub.s32 0, %v1139
        %v1141 = vrot.slane %v1136, %v1140
        %v1151 = vunpack.c.l.b16 %v1128
        %v1152 = vunpack.c.l.b16 %v1129
        %v1153 = vunpack.c.l.b16 %v1130
        %v1154 = vunpack.c.l.b16 %v1131
        %v1155 = vunpack.c.l.b16 %v1132
        %v1156 = vunpack.c.l.b16 %v1133
        %v1157 = vunpack.c.l.b16 %v1134
        %v1158 = vunpack.c.l.b16 %v1135
        %v1159 = vpack.c.b16 %v1152, %v1151
        %v1160 = vpack.c.b16 %v1154, %v1153
        %v1161 = vpack.c.b16 %v1156, %v1155
        %v1162 = vpack.c.b16 %v1158, %v1157
        %v1164 = vsel %vm488, %v1127, 0
        %v1167 = vsel %vm488, %v1159, 0
        %v1170 = vsel %vm488, %v1160, 0
        %v1173 = vsel %vm488, %v1161, 0
        %v1176 = vsel %vm488, %v1162, 0
        %1178 = vmatprep.subr.bf16.mxu0 0
        %1179 = vmatpush1.bf16.xpose.msra.mxu0 %v1167
        %1180 = vmatprep.subr.bf16.mxu0 0
        %1181 = vmatpush1.bf16.xpose.msra.mxu0 %v1170
        %1182 = vmatprep.subr.bf16.mxu0 0
        %1183 = vmatpush1.bf16.xpose.msra.mxu0 %v1173
        %1184 = vmatprep.subr.bf16.mxu0 0
        %1185 = vmatpush1.bf16.xpose.msra.mxu0 %v1176
        %1186 = vmatprep.subr.bf16.mxu0 0
        %1187 = vmatpush1.bf16.xpose.msra.mxu0 0
        %1188 = vmatprep.subr.bf16.mxu0 0
        %1189 = vmatpush1.bf16.xpose.msra.mxu0 0
        %1190 = vmatprep.subr.bf16.mxu0 0
        %1191 = vmatpush1.bf16.xpose.msra.mxu0 0
        %1192 = vmatprep.subr.bf16.mxu0 0
        %1193 = vmatpush1.bf16.xpose.msra.mxu0 0
        %1194 = vmatprep.subr.bf16.mxu0 0
        %1195 = vmatpush1.bf16.xpose.msra.mxu0 0
        %1196 = vmatprep.subr.bf16.mxu0 0
        %1197 = vmatpush1.bf16.xpose.msra.mxu0 0
        %1198 = vmatprep.subr.bf16.mxu0 0
        %1199 = vmatpush1.bf16.xpose.msra.mxu0 0
        %1200 = vmatprep.subr.bf16.mxu0 0
        %1201 = vmatpush1.bf16.xpose.msra.mxu0 0
        %1202 = vmatprep.subr.bf16.mxu0 0
        %1203 = vmatpush1.bf16.xpose.msra.mxu0 0
        %1204 = vmatprep.subr.bf16.mxu0 0
        %1205 = vmatpush1.bf16.xpose.msra.mxu0 0
        %1206 = vmatprep.subr.bf16.mxu0 0
        %1207 = vmatpush1.bf16.xpose.msra.mxu0 0
        %1208 = vmatprep.subr.bf16.mxu0 0
        %1209 = vmatpush1.bf16.xpose.msra.mxu0 0
        %1210 = vmatprep.mubr.bf16.mxu0 0
        %1211 = vmatmul.mubr.bf16.gmra.mrb[0].mxu0 %v1164
        %v1212 = vpop.f32.mrb[0].mxu0
        %v1213 = vadd.f32 %v1141, %v1212
        %v1214 = vpop.f32.mrb[0].mxu0
        %v1215 = vpop.f32.mrb[0].mxu0
        %v1216 = vpop.f32.mrb[0].mxu0
        %1217 = vdwg.mxu0
        %v1218 = vmul.f32 %v1213, 0.5
        %v1219 = vmul.f32 %v1213, 0.70710677
        %v1220 = vmax.f32 %v1219, -4.0
        %v1221 = vmin.f32 %v1220, 4.0
        %v1222 = vmul.f32 %v1221, %v1221
        %v1223 = vmul.f32 %v1222, -2.7261424e-10
        %v1224 = vadd.f32 %v1223, 2.7706815e-08
        %v1225 = vmul.f32 %v1224, %v1222
        %v1226 = vadd.f32 %v1225, -2.101024e-06
        %v1227 = vmul.f32 %v1226, %v1222
        %v1228 = vadd.f32 %v1227, -5.6925062e-05
        %v1229 = vmul.f32 %v1228, %v1222
        %v1230 = vadd.f32 %v1229, -0.00073499064
        %v1231 = vmul.f32 %v1230, %v1222
        %v1232 = vadd.f32 %v1231, -0.0029546
        %v1233 = vmul.f32 %v1232, %v1222
        %v1234 = vadd.f32 %v1233, -0.016096033
        %v1235 = vmul.f32 %v1222, -1.45660715e-05
        %v1236 = vadd.f32 %v1235, -0.00021337405
        %v1237 = vmul.f32 %v1236, %v1222
        %v1238 = vadd.f32 %v1237, -0.001682827
        %v1239 = vmul.f32 %v1238, %v1222
        %v1240 = vadd.f32 %v1239, -0.0073733293
        %v1241 = vmul.f32 %v1240, %v1222
        %v1242 = vadd.f32 %v1241, -0.014264739
        %v1243 = vmul.f32 %v1221, %v1234
        %v1244 = vrcp.pop %v1242
        %v1245 = vmul.f32 %v1243, %v1244
        %v1246 = vadd.f32 %v1245, 1.0
        %v1247 = vmul.f32 %v1218, %v1246
        %v1248 = vpack.c.bf16 %v1247, %v1247
        %v1249 = vld [vmem:[%s11] sm:$0xf]
        %v1250 = vld [vmem:[%s11 + $0x4] sm:$0xf]
        %v1251 = vld [vmem:[%s11 + $0x8] sm:$0xf]
        %v1252 = vld [vmem:[%s11 + $0xc] sm:$0xf]
        %v1253 = vld [vmem:[%s12] sm:$0x1]
        %v1255 = vlaneseq
        %v1256 = vshrl.u32 %v1255, 7
        %v1257 = vsub.s32 0, %v1256
        %v1258 = vrot.slane %v1253, %v1257
        %v1264 = vunpack.c.l.b16 %v1249
        %v1265 = vunpack.c.l.b16 %v1250
        %v1266 = vunpack.c.l.b16 %v1251
        %v1267 = vunpack.c.l.b16 %v1252
        %v1268 = vpack.c.b16 %v1265, %v1264
        %v1269 = vpack.c.b16 %v1267, %v1266
        %vm1270 = vcmask 523264
        %v1272 = vsel %vm1270, %v1248, 0
        %v1275 = vsel %vm1270, %v1268, 0
        %v1278 = vsel %vm1270, %v1269, 0
        %1280 = vmatprep.subr.bf16.mxu0 0
        %1281 = vmatpush1.bf16.xpose.msra.mxu0 %v1275
        %1282 = vmatprep.subr.bf16.mxu0 0
        %1283 = vmatpush1.bf16.xpose.msra.mxu0 %v1278
        %1284 = vmatprep.subr.bf16.mxu0 0
        %1285 = vmatpush1.bf16.xpose.msra.mxu0 0
        %1286 = vmatprep.subr.bf16.mxu0 0
        %1287 = vmatpush1.bf16.xpose.msra.mxu0 0
        %1288 = vmatprep.subr.bf16.mxu0 0
        %1289 = vmatpush1.bf16.xpose.msra.mxu0 0
        %1290 = vmatprep.subr.bf16.mxu0 0
        %1291 = vmatpush1.bf16.xpose.msra.mxu0 0
        %1292 = vmatprep.subr.bf16.mxu0 0
        %1293 = vmatpush1.bf16.xpose.msra.mxu0 0
        %1294 = vmatprep.subr.bf16.mxu0 0
        %1295 = vmatpush1.bf16.xpose.msra.mxu0 0
        %1296 = vmatprep.subr.bf16.mxu0 0
        %1297 = vmatpush1.bf16.xpose.msra.mxu0 0
        %1298 = vmatprep.subr.bf16.mxu0 0
        %1299 = vmatpush1.bf16.xpose.msra.mxu0 0
        %1300 = vmatprep.subr.bf16.mxu0 0
        %1301 = vmatpush1.bf16.xpose.msra.mxu0 0
        %1302 = vmatprep.subr.bf16.mxu0 0
        %1303 = vmatpush1.bf16.xpose.msra.mxu0 0
        %1304 = vmatprep.subr.bf16.mxu0 0
        %1305 = vmatpush1.bf16.xpose.msra.mxu0 0
        %1306 = vmatprep.subr.bf16.mxu0 0
        %1307 = vmatpush1.bf16.xpose.msra.mxu0 0
        %1308 = vmatprep.subr.bf16.mxu0 0
        %1309 = vmatpush1.bf16.xpose.msra.mxu0 0
        %1310 = vmatprep.subr.bf16.mxu0 0
        %1311 = vmatpush1.bf16.xpose.msra.mxu0 0
        %1312 = vmatprep.mubr.bf16.mxu0 0
        %1313 = vmatmul.mubr.bf16.gmra.mrb[0].mxu0 %v1272
        %v1314 = vpop.f32.mrb[0].mxu0
        %v1315 = vadd.f32 %v1258, %v1314
        %v1316 = vpop.f32.mrb[0].mxu0
        %v1317 = vpop.f32.mrb[0].mxu0
        %v1318 = vpop.f32.mrb[0].mxu0
        %1319 = vdwg.mxu0
        %v1320 = vadd.f32 %v1126, %v1315
        %v1321 = vld [vmem:[%s7] sm:$0x1]
        %v1322 = vld [vmem:[%s8] sm:$0x1]
        %v1323 = vsel %vm488, %v1320, 0.0
        %1324 = vadd.xlane.f32.xlu0 %v1323
        %v1325 = vpop.xlane.xlu0 %1324
        %v1326 = vmul.f32 %v1325, %v1102
        %v1327 = vsub.f32 %v1320, %v1326
        %v1328 = vmul.f32 %v1327, %v1327
        %v1329 = vsel %vm488, %v1328, 0.0
        %1330 = vadd.xlane.f32.xlu0 %v1329
        %v1331 = vpop.xlane.xlu0 %1330
        %v1332 = vmul.f32 %v1331, %v1102
        %v1333 = vadd.f32 %v1332, 1e-12
        %v1334 = vrsqrt.pop %v1333
        %v1335 = vmul.f32 %v1327, %v1334
        %v1337 = vlaneseq
        %v1338 = vshrl.u32 %v1337, 7
        %v1339 = vsub.s32 0, %v1338
        %v1340 = vrot.slane %v1321, %v1339
        %v1342 = vmul.f32 %v1335, %v1340
        %v1344 = vlaneseq
        %v1345 = vshrl.u32 %v1344, 7
        %v1346 = vsub.s32 0, %v1345
        %v1347 = vrot.slane %v1322, %v1346
        %v1349 = vadd.f32 %v1342, %v1347
        %1350 = vst.msk [vmem:[%s431] sm:$0xff] %vm488, %v1349
        %s1351 = sand.u32 %s313, 1
        %s1352 = scalar_lea.sflag [#allocation4], %s1351
        %s1353 = sand.u32 %s313, 1
        %s1354 = smul.addr %s1353, 8
        %s1355 = scalar_lea.vmem [#allocation3], %s1354
        // Predicated region
        $region73: #{tpu_custom_call.1} parent=71 // pred_check
          %p1356 = pneg %p323
        $region74: #{tpu_custom_call.1} parent=71 // pred_check_branch
          %1358 = sbr.rel (%p1356) target = $region76
        $region75: #{tpu_custom_call.1} parent=71 // pred_region
          %s1360 = ssub.s32 128, 128
          %1361 = vsyncadd %s1352, %s1360
          %s1362 = smul.addr %s27, 128
          %s1363 = scalar_lea.hbm %s13, %s1362
          %s1365 = sshll.u32 %s1355, 4
          %s1366 = int_to_ptr.vmem [resolvable:$true] %s1365
          %1368 = dma.vmem_to_hbm [thread:$0]  %s1366, 128, %s1363, %s1352
        $region76: #{tpu_custom_call.1} parent=71 // pred_fallthru
          _
      $region72: #{tpu_custom_call.1} parent=5 // pred_fallthru
        _
      %p1369 = scmp.le.s32.totalorder 2, %s22
      // Predicated region
      $region77: #{tpu_custom_call.1} parent=5 // pred_check
        %p1370 = pneg %p1369
      $region78: #{tpu_custom_call.1} parent=5 // pred_check_branch
        %1372 = sbr.rel (%p1370) target = $region80
      $region79: #{tpu_custom_call.1} parent=5 // pred_region
        %s1373 = ssub.s32 %s22, 2
        // Predicated region
        $region81: #{tpu_custom_call.1} parent=79 // pred_check
          %p1374 = pneg %p329
        $region82: #{tpu_custom_call.1} parent=79 // pred_check_branch
          %1376 = sbr.rel (%p1374) target = $region84
        $region83: #{tpu_custom_call.1} parent=79 // pred_region
          %s1377 = sand.u32 %s314, 1
          %s1378 = scalar_lea.sflag [#allocation4], %s1377
          %s1379 = sand.u32 %s314, 1
          %s1380 = smul.addr %s1379, 8
          %s1381 = scalar_lea.vmem [#allocation3], %s1380
          %1382 = dma.done %s1378, 128
        $region84: #{tpu_custom_call.1} parent=79 // pred_fallthru
          _
      $region80: #{tpu_custom_call.1} parent=5 // pred_fallthru
        _
    $region6: #{tpu_custom_call.1} parent=1 // loop_footer
      %s26 = sadd.s32 1, %s22
    $region7: #{tpu_custom_call.1} parent=1 // loop_footer_branch
      %21 = sbr.rel target = $region3
    $region8: #{tpu_custom_call.1} parent=1 // loop_exit
      _
    %1383 = vsyncpa [#allocation4], 1
    %s1384 = scalar_lea.sflag [#allocation4], 1
    %1385 = vsyncpa %s1384, 1

</llo_original>
